<compile_context>
chip_gen: v6e
topology: v6e:2x2x1
jax: 0.10.0
libtpu: 0.0.40
codegen_flags: <defaults>
</compile_context>

<pallas_src>
import functools
import math

import jax
import jax.numpy as jnp
from jax.experimental import pallas as pl
from jax.experimental.pallas import tpu as pltpu


_NEG_INF = -1e30                     # finite sentinel: no (-inf)-(-inf) NaNs


@functools.lru_cache(maxsize=1)
def _vmem_limit_bytes():
    # Generation-aware VMEM budget: ~70% of physical (64 MiB on v7x,
    # 128 MiB on v5e/v6e). Conservative fallback if the query fails.
    try:
        cap = getattr(pltpu.get_tpu_info(), "vmem_capacity_bytes", None)
        if cap:
            return int(cap * 0.70)
    except Exception:
        pass
    return 48 * 1024 * 1024


def _cparams(semantics):
    return pltpu.CompilerParams(
        dimension_semantics=semantics,
        vmem_limit_bytes=_vmem_limit_bytes(),
    )


def _row_block(m):
    # Whole slab when small, otherwise 512-row (8-sublane aligned) tiles;
    # tails handled by pl.cdiv + Pallas edge padding (row-wise ops never mix
    # rows, so padded rows are discarded on writeback).
    return m if m <= 512 else 512


# ---------------------------------------------------------------------------
# Pallas kernels
# ---------------------------------------------------------------------------
def _ln_matmul_kernel(x_ref, g_ref, b_ref, w_ref, wb_ref, o_ref):
    """Fused LayerNorm(x) @ W + b on a row tile (QKV / Q projections)."""
    x = x_ref[...]                                        # (rows, Din)
    mu = jnp.mean(x, axis=-1, keepdims=True)
    xc = x - mu
    var = jnp.mean(xc * xc, axis=-1, keepdims=True)
    xn = xc * jax.lax.rsqrt(var + 1e-5) * g_ref[...] + b_ref[...]
    y = jnp.dot(xn, w_ref[...], preferred_element_type=jnp.float32) + wb_ref[...]
    o_ref[...] = y.astype(o_ref.dtype)


def _matmul_kernel(x_ref, w_ref, wb_ref, o_ref):
    """Plain x @ W + b on a row tile (memory K/V projection)."""
    y = jnp.dot(x_ref[...], w_ref[...], preferred_element_type=jnp.float32)
    o_ref[...] = (y + wb_ref[...]).astype(o_ref.dtype)


def _ffn_kernel(x_ref, g_ref, b_ref, w1_ref, b1_ref, w2_ref, b2_ref,
                o_ref, acc_ref):
    """Fully fused FFN sublayer: LN -> w1 -> ReLU -> w2 -> + residual.

    Grid axis 1 streams d_ff column-blocks of w1 / row-blocks of w2 through an
    f32 VMEM accumulator so the (rows, d_ff) intermediate never hits HBM.
    """
    j = pl.program_id(1)
    x = x_ref[...]                                        # (rows, D) = residual
    mu = jnp.mean(x, axis=-1, keepdims=True)
    xc = x - mu
    var = jnp.mean(xc * xc, axis=-1, keepdims=True)
    xn = xc * jax.lax.rsqrt(var + 1e-5) * g_ref[...] + b_ref[...]
    h = jnp.maximum(
        jnp.dot(xn, w1_ref[...], preferred_element_type=jnp.float32) + b1_ref[...],
        0.0)
    contrib = jnp.dot(h, w2_ref[...], preferred_element_type=jnp.float32)

    @pl.when(j == 0)
    def _():
        acc_ref[...] = jnp.zeros_like(acc_ref)

    acc_ref[...] += contrib

    @pl.when(j == pl.num_programs(1) - 1)
    def _():
        o_ref[...] = (acc_ref[...] + b2_ref[...] + x).astype(o_ref.dtype)


def _attn_heads_out_proj(q, k, v, bias, wo_ref, H):
    """All heads of softmax(q k^T + bias) v, fused with the output projection.

    q is pre-scaled by 1/sqrt(dk).  Each head's (Sq,dk) result is multiplied
    by its dk-row slice of wo and accumulated lane-dense into (Sq, D) — no
    per-head concat / repack.
    """
    Sq, D = q.shape
    dk = D // H
    acc = jnp.zeros((Sq, D), jnp.float32)
    for h in range(H):                                    # static -> unrolled
        lo = h * dk
        qh = q[:, lo:lo + dk]
        kh = k[:, lo:lo + dk]
        vh = v[:, lo:lo + dk]
        s = jax.lax.dot_general(qh, kh, (((1,), (1,)), ((), ())),
                                preferred_element_type=jnp.float32) + bias
        s = s - jnp.max(s, axis=-1, keepdims=True)
        p = jnp.exp(s)
        inv = pl.reciprocal(jnp.sum(p, axis=-1, keepdims=True), approx=True)
        oh = jnp.dot(p, vh, preferred_element_type=jnp.float32) * inv
        acc = acc + jnp.dot(oh, wo_ref[lo:lo + dk, :],
                            preferred_element_type=jnp.float32)
    return acc


def _self_attn_kernel(qkv_ref, m_ref, wo_ref, bo_ref, res_ref, o_ref,
                      *, H, scale, bq):
    """Self-attention + output projection + residual for one (batch, q-block)."""
    D = o_ref.shape[-1]
    full = qkv_ref[0]                                     # (S, 3D) packed QKV
    S = full.shape[0]
    k = full[:, D:2 * D]
    v = full[:, 2 * D:]
    qcols = full[:, :D]
    if bq == S:
        q = qcols * scale
    else:
        start = pl.multiple_of(pl.program_id(1) * bq, bq)
        q = jax.lax.dynamic_slice_in_dim(qcols, start, bq, axis=0) * scale
    mf = m_ref[0].astype(jnp.float32)                     # (bq, S) int8 -> f32
    bias = jnp.where(mf == 0, _NEG_INF, 0.0)
    out = _attn_heads_out_proj(q, k, v, bias, wo_ref, H)
    o_ref[0] = (out + bo_ref[...] + res_ref[0]).astype(o_ref.dtype)


def _cross_attn_kernel(q_ref, kv_ref, m_ref, wo_ref, bo_ref, res_ref, o_ref,
                       *, H, scale):
    """Cross-attention + output projection + residual for one (batch, q-block)."""
    D = q_ref.shape[-1]
    q = q_ref[0] * scale                                  # (bq, D)
    kv = kv_ref[0]                                        # (Sk, 2D) packed KV
    k, v = kv[:, :D], kv[:, D:]
    mf = m_ref[0].astype(jnp.float32)                     # (1, Sk) int8 -> f32
    bias = jnp.where(mf == 0, _NEG_INF, 0.0)
    out = _attn_heads_out_proj(q, k, v, bias, wo_ref, H)
    o_ref[0] = (out + bo_ref[...] + res_ref[0]).astype(o_ref.dtype)


# ---------------------------------------------------------------------------
# Pallas wrappers
# ---------------------------------------------------------------------------
def ln_linear(x2, g, b, w, wb):
    M, Din = x2.shape
    Dout = w.shape[1]
    bm = _row_block(M)
    return pl.pallas_call(
        _ln_matmul_kernel,
        out_shape=jax.ShapeDtypeStruct((M, Dout), x2.dtype),
        grid=(pl.cdiv(M, bm),),
        in_specs=[
            pl.BlockSpec((bm, Din), lambda i: (i, 0)),
            pl.BlockSpec((1, Din), lambda i: (0, 0)),
            pl.BlockSpec((1, Din), lambda i: (0, 0)),
            pl.BlockSpec((Din, Dout), lambda i: (0, 0)),
            pl.BlockSpec((1, Dout), lambda i: (0, 0)),
        ],
        out_specs=pl.BlockSpec((bm, Dout), lambda i: (i, 0)),
        compiler_params=_cparams(("parallel",)),
    )(x2, g.reshape(1, Din), b.reshape(1, Din), w, wb.reshape(1, Dout))


def linear(x2, w, wb):
    M, Din = x2.shape
    Dout = w.shape[1]
    bm = _row_block(M)
    return pl.pallas_call(
        _matmul_kernel,
        out_shape=jax.ShapeDtypeStruct((M, Dout), x2.dtype),
        grid=(pl.cdiv(M, bm),),
        in_specs=[
            pl.BlockSpec((bm, Din), lambda i: (i, 0)),
            pl.BlockSpec((Din, Dout), lambda i: (0, 0)),
            pl.BlockSpec((1, Dout), lambda i: (0, 0)),
        ],
        out_specs=pl.BlockSpec((bm, Dout), lambda i: (i, 0)),
        compiler_params=_cparams(("parallel",)),
    )(x2, w, wb.reshape(1, Dout))


def ffn(x2, g, b, w1, b1, w2, b2):
    M, Din = x2.shape
    d_ff = w1.shape[1]
    Dout = w2.shape[1]
    bm = _row_block(M)
    # d_ff-block size: 512 (MXU-friendly) when it divides cleanly, else whole.
    bff = 512 if (d_ff > 1024 and d_ff % 512 == 0) else d_ff
    nff = d_ff // bff
    return pl.pallas_call(
        _ffn_kernel,
        out_shape=jax.ShapeDtypeStruct((M, Dout), x2.dtype),
        grid=(pl.cdiv(M, bm), nff),
        in_specs=[
            pl.BlockSpec((bm, Din), lambda i, j: (i, 0)),
            pl.BlockSpec((1, Din), lambda i, j: (0, 0)),
            pl.BlockSpec((1, Din), lambda i, j: (0, 0)),
            pl.BlockSpec((Din, bff), lambda i, j: (0, j)),
            pl.BlockSpec((1, bff), lambda i, j: (0, j)),
            pl.BlockSpec((bff, Dout), lambda i, j: (j, 0)),
            pl.BlockSpec((1, Dout), lambda i, j: (0, 0)),
        ],
        out_specs=pl.BlockSpec((bm, Dout), lambda i, j: (i, 0)),
        scratch_shapes=[pltpu.VMEM((bm, Dout), jnp.float32)],
        compiler_params=_cparams(("parallel", "arbitrary")),
    )(x2, g.reshape(1, Din), b.reshape(1, Din),
      w1, b1.reshape(1, d_ff), w2, b2.reshape(1, Dout))


def _q_block(S):
    # q-block axis only when it divides exactly (keeps in-kernel slicing safe).
    return 256 if (S > 256 and S % 256 == 0) else S


def self_attention(qkv, mask_i8, wo, bo, res, H):
    # qkv: (B, S, 3D) packed; mask_i8: (B, S, S) int8; res: (B, S, D)
    B, S, D3 = qkv.shape
    D = D3 // 3
    scale = 1.0 / math.sqrt(D // H)
    bq = _q_block(S)
    nq = S // bq
    return pl.pallas_call(
        functools.partial(_self_attn_kernel, H=H, scale=scale, bq=bq),
        out_shape=jax.ShapeDtypeStruct((B, S, D), res.dtype),
        grid=(B, nq),
        in_specs=[
            pl.BlockSpec((1, S, D3), lambda b, qi: (b, 0, 0)),
            pl.BlockSpec((1, bq, S), lambda b, qi: (b, qi, 0)),
            pl.BlockSpec((D, D), lambda b, qi: (0, 0)),
            pl.BlockSpec((1, D), lambda b, qi: (0, 0)),
            pl.BlockSpec((1, bq, D), lambda b, qi: (b, qi, 0)),
        ],
        out_specs=pl.BlockSpec((1, bq, D), lambda b, qi: (b, qi, 0)),
        compiler_params=_cparams(("parallel", "parallel")),
    )(qkv, mask_i8, wo, bo.reshape(1, D), res)


def cross_attention(q, kv, mask_i8, wo, bo, res, H):
    # q: (B, Sq, D); kv: (B, Sk, 2D) packed; mask_i8: (B, 1, Sk) int8
    B, Sq, D = q.shape
    Sk = kv.shape[1]
    scale = 1.0 / math.sqrt(D // H)
    bq = _q_block(Sq)
    nq = Sq // bq
    return pl.pallas_call(
        functools.partial(_cross_attn_kernel, H=H, scale=scale),
        out_shape=jax.ShapeDtypeStruct((B, Sq, D), res.dtype),
        grid=(B, nq),
        in_specs=[
            pl.BlockSpec((1, bq, D), lambda b, qi: (b, qi, 0)),
            pl.BlockSpec((1, Sk, 2 * D), lambda b, qi: (b, 0, 0)),
            pl.BlockSpec((1, 1, Sk), lambda b, qi: (b, 0, 0)),
            pl.BlockSpec((D, D), lambda b, qi: (0, 0)),
            pl.BlockSpec((1, D), lambda b, qi: (0, 0)),
            pl.BlockSpec((1, bq, D), lambda b, qi: (b, qi, 0)),
        ],
        out_specs=pl.BlockSpec((1, bq, D), lambda b, qi: (b, qi, 0)),
        compiler_params=_cparams(("parallel", "parallel")),
    )(q, kv, mask_i8, wo, bo.reshape(1, D), res)


# ---------------------------------------------------------------------------
# Decoder forward (glue in plain JAX, all heavy math in the kernels above)
# ---------------------------------------------------------------------------
def decoder_layer(x, memory, src_mask_i8, trg_mask_i8, p, H):
    B, S, D = x.shape
    Sm = memory.shape[1]
    M = B * S
    mem2 = memory.reshape(B * Sm, D)

    # Sublayer 0: pre-LN self-attention (out-proj + residual fused in-kernel)
    qkv = ln_linear(x.reshape(M, D), p["ln0_g"], p["ln0_b"],
                    p["self_att"]["w_qkv"], p["self_att"]["b_qkv"])
    x = self_attention(qkv.reshape(B, S, 3 * D), trg_mask_i8,
                       p["self_att"]["wo"], p["self_att"]["bo"], x, H)

    # Sublayer 1: pre-LN encoder-decoder attention (out-proj + residual fused)
    q = ln_linear(x.reshape(M, D), p["ln1_g"], p["ln1_b"],
                  p["enc_att"]["wq"], p["enc_att"]["bq"])
    kv = linear(mem2, p["enc_att"]["w_kv"], p["enc_att"]["b_kv"])
    x = cross_attention(q.reshape(B, S, D), kv.reshape(B, Sm, 2 * D),
                        src_mask_i8, p["enc_att"]["wo"], p["enc_att"]["bo"],
                        x, H)

    # Sublayer 2: fully fused pre-LN FFN (LN -> w1 -> ReLU -> w2 -> +residual)
    x2 = ffn(x.reshape(M, D), p["ln2_g"], p["ln2_b"],
             p["ff_w1"], p["ff_b1"], p["ff_w2"], p["ff_b2"])
    return x2.reshape(B, S, D)


def decoder_forward(x, memory, src_mask, trg_mask, params, H):
    # Masks travel compact as int8; -1e30 bias is built inside the kernels.
    src_i8 = src_mask.astype(jnp.int8)        # (B, 1, S_src)
    trg_i8 = trg_mask.astype(jnp.int8)        # (B, S_trg, S_trg)
    for p in params["layers"]:
        x = decoder_layer(x, memory, src_i8, trg_i8, p, H)
    return x


def fuse_layer_params(p):
    """Concatenate Q|K|V (self-att) and K|V (enc-att) weights for fused matmuls."""
    sa, ea = p["self_att"], p["enc_att"]
    fp = dict(p)
    fp["self_att"] = dict(
        w_qkv=jnp.concatenate([sa["wq"], sa["wk"], sa["wv"]], axis=1),
        b_qkv=jnp.concatenate([sa["bq"], sa["bk"], sa["bv"]]),
        wo=sa["wo"], bo=sa["bo"])
    fp["enc_att"] = dict(
        wq=ea["wq"], bq=ea["bq"],
        w_kv=jnp.concatenate([ea["wk"], ea["wv"]], axis=1),
        b_kv=jnp.concatenate([ea["bk"], ea["bv"]]),
        wo=ea["wo"], bo=ea["bo"])
    return fp


# ---------------------------------------------------------------------------
# Pure-JAX reference (mirrors the PyTorch forward, eval mode, unfused params)
# ---------------------------------------------------------------------------
def _ref_ln(x, g, b):
    mu = jnp.mean(x, -1, keepdims=True)
    var = jnp.mean((x - mu) ** 2, -1, keepdims=True)
    return (x - mu) / jnp.sqrt(var + 1e-5) * g + b


def _ref_mha(xq, xk, xv, m_bqk, p, H):
    B, Sq, D = xq.shape
    dk = D // H
    q = (xq @ p["wq"] + p["bq"]).reshape(B, Sq, H, dk).transpose(0, 2, 1, 3)
    k = (xk @ p["wk"] + p["bk"]).reshape(B, -1, H, dk).transpose(0, 2, 1, 3)
    v = (xv @ p["wv"] + p["bv"]).reshape(B, -1, H, dk).transpose(0, 2, 1, 3)
    s = jnp.einsum("bhqd,bhkd->bhqk", q, k) / math.sqrt(dk)
    s = jnp.where(m_bqk[:, None] == 0, -jnp.inf, s)
    a = jax.nn.softmax(s, axis=-1)
    o = jnp.einsum("bhqk,bhkd->bhqd", a, v).transpose(0, 2, 1, 3).reshape(B, Sq, D)
    return o @ p["wo"] + p["bo"]


def reference_decoder(x, memory, src_mask, trg_mask, params, H):
    B, S_trg, _ = x.shape
    S_src = memory.shape[1]
    src_bqk = jnp.broadcast_to(src_mask.astype(jnp.float32), (B, S_trg, S_src))
    trg_bqk = trg_mask.astype(jnp.float32)
    for p in params["layers"]:
        y = _ref_ln(x, p["ln0_g"], p["ln0_b"])
        x = x + _ref_mha(y, y, y, trg_bqk, p["self_att"], H)
        y = _ref_ln(x, p["ln1_g"], p["ln1_b"])
        x = x + _ref_mha(y, memory, memory, src_bqk, p["enc_att"], H)
        y = _ref_ln(x, p["ln2_g"], p["ln2_b"])
        y = jnp.maximum(y @ p["ff_w1"] + p["ff_b1"], 0.0) @ p["ff_w2"] + p["ff_b2"]
        x = x + y
    return x


# ---------------------------------------------------------------------------
# Deterministic parameter initialization (shapes from the PyTorch __init__)
# ---------------------------------------------------------------------------
def _init_linear(key, din, dout):
    kw, kb = jax.random.split(key)
    bound = 1.0 / math.sqrt(din)
    w = jax.random.uniform(kw, (din, dout), jnp.float32, -bound, bound)
    b = jax.random.uniform(kb, (dout,), jnp.float32, -bound, bound)
    return w, b


def _init_mha(key, d_model):
    ks = jax.random.split(key, 4)
    wq, bq = _init_linear(ks[0], d_model, d_model)
    wk, bk = _init_linear(ks[1], d_model, d_model)
    wv, bv = _init_linear(ks[2], d_model, d_model)
    wo, bo = _init_linear(ks[3], d_model, d_model)
    return dict(wq=wq, bq=bq, wk=wk, bk=bk, wv=wv, bv=bv, wo=wo, bo=bo)


def init_decoder_params(key, d_model, H, d_ff, N):
    layers = []
    for lk in jax.random.split(key, N):
        k_self, k_enc, k_f1, k_f2 = jax.random.split(lk, 4)
        ff_w1, ff_b1 = _init_linear(k_f1, d_model, d_ff)
        ff_w2, ff_b2 = _init_linear(k_f2, d_ff, d_model)
        layers.append(dict(
            ln0_g=jnp.ones((d_model,), jnp.float32), ln0_b=jnp.zeros((d_model,), jnp.float32),
            ln1_g=jnp.ones((d_model,), jnp.float32), ln1_b=jnp.zeros((d_model,), jnp.float32),
            ln2_g=jnp.ones((d_model,), jnp.float32), ln2_b=jnp.zeros((d_model,), jnp.float32),
            self_att=_init_mha(k_self, d_model),
            enc_att=_init_mha(k_enc, d_model),
            ff_w1=ff_w1, ff_b1=ff_b1, ff_w2=ff_w2, ff_b2=ff_b2,
        ))
    return dict(layers=layers)


# ---------------------------------------------------------------------------
# Mask construction (mirrors subsequent_mask / mask from the PyTorch code)
# ---------------------------------------------------------------------------
def make_masks(src_tokens, trg_tokens, pad_idx):
    src_mask = (src_tokens != pad_idx)[:, None, :]                    # (B,1,Ss)
    S = trg_tokens.shape[-1]
    sub = jnp.tril(jnp.ones((1, S, S), jnp.bool_))                    # (1,S,S)
    trg_mask = (trg_tokens != pad_idx)[:, None, :] & sub              # (B,S,S)
    return src_mask, trg_mask


# ---------------------------------------------------------------------------
if __name__ == "__main__":
    B, S_trg, S_src = 2, 8, 8
    d_model, H, d_ff, N = 32, 4, 64, 2
    pad_idx = 0

    key = jax.random.PRNGKey(0)
    k_params, k_x, k_mem = jax.random.split(key, 3)

    params = init_decoder_params(k_params, d_model, H, d_ff, N)
    fused_params = dict(layers=[fuse_layer_params(p) for p in params["layers"]])

    x = jax.random.normal(k_x, (B, S_trg, d_model), jnp.float32)
    memory = jax.random.normal(k_mem, (B, S_src, d_model), jnp.float32)

    src_tokens = jnp.array([[5, 3, 7, 2, 9, 0, 0, 0],
                            [1, 4, 6, 8, 9, 2, 7, 0]], dtype=jnp.int32)
    trg_tokens = jnp.array([[2, 5, 7, 3, 0, 0, 0, 0],
                            [3, 6, 1, 4, 2, 8, 0, 0]], dtype=jnp.int32)
    src_mask, trg_mask = make_masks(src_tokens, trg_tokens, pad_idx)

    fwd = jax.jit(functools.partial(decoder_forward, H=H))
    out = fwd(x, memory, src_mask, trg_mask, fused_params)
    out = jax.block_until_ready(out)

    ref = reference_decoder(x, memory, src_mask, trg_mask, params, H)
    assert out.shape == (B, S_trg, d_model)
    assert bool(jnp.all(jnp.isfinite(out)))
    max_err = float(jnp.max(jnp.abs(out - ref)))
    assert max_err < 1e-2, f"mismatch vs reference: {max_err}"

    print("KERNEL_OK")
</pallas_src>

<mosaic_0001>
module attributes {stable_mosaic.version = 11 : i64} {
  func.func @_self_attn_kernel(%arg0: i32, %arg1: i32, %arg2: memref<1x8x96xf32, #tpu.memory_space<vmem>>, %arg3: memref<1x8x8xi8, #tpu.memory_space<vmem>>, %arg4: memref<32x32xf32, #tpu.memory_space<vmem>>, %arg5: memref<1x32xf32, #tpu.memory_space<vmem>>, %arg6: memref<1x8x32xf32, #tpu.memory_space<vmem>>, %arg7: memref<1x8x32xf32, #tpu.memory_space<vmem>>) attributes {dimension_semantics = [#tpu.dimension_semantics<parallel>, #tpu.dimension_semantics<parallel>], iteration_bounds = array<i64: 2, 1>, scalar_prefetch = 0 : i64, scratch_operands = 0 : i64, tpu.core_type = #tpu.core_type<tc>, window_params = [{transform_indices = @transform_0, window_bounds = array<i64: 1, 8, 96>}, {transform_indices = @transform_1, window_bounds = array<i64: 1, 8, 8>}, {pipeline_mode = #tpu.pipeline_mode<synchronous>, transform_indices = @transform_2, window_bounds = array<i64: 32, 32>}, {pipeline_mode = #tpu.pipeline_mode<synchronous>, transform_indices = @transform_3, window_bounds = array<i64: 1, 32>}, {transform_indices = @transform_4, window_bounds = array<i64: 1, 8, 32>}, {transform_indices = @transform_5, window_bounds = array<i64: 1, 8, 32>}]} {
    %c0 = arith.constant 0 : index
    %c0_0 = arith.constant 0 : index
    %c0_1 = arith.constant 0 : index
    %0 = vector.load %arg2[%c0, %c0_0, %c0_1] : memref<1x8x96xf32, #tpu.memory_space<vmem>>, vector<1x8x96xf32>
    %1 = vector.shape_cast %0 : vector<1x8x96xf32> to vector<8x96xf32>
    %2 = vector.extract_strided_slice %1 {offsets = [0, 32], sizes = [8, 32], strides = [1, 1]} : vector<8x96xf32> to vector<8x32xf32>
    %3 = vector.extract_strided_slice %1 {offsets = [0, 64], sizes = [8, 32], strides = [1, 1]} : vector<8x96xf32> to vector<8x32xf32>
    %4 = vector.extract_strided_slice %1 {offsets = [0, 0], sizes = [8, 32], strides = [1, 1]} : vector<8x96xf32> to vector<8x32xf32>
    %cst = arith.constant 0.353553385 : f32
    %5 = vector.broadcast %cst : f32 to vector<8x32xf32>
    %6 = arith.mulf %4, %5 : vector<8x32xf32>
    %c0_2 = arith.constant 0 : index
    %c0_3 = arith.constant 0 : index
    %c0_4 = arith.constant 0 : index
    %7 = vector.load %arg3[%c0_2, %c0_3, %c0_4] : memref<1x8x8xi8, #tpu.memory_space<vmem>>, vector<1x8x8xi8>
    %8 = vector.shape_cast %7 : vector<1x8x8xi8> to vector<8x8xi8>
    %9 = arith.sitofp %8 : vector<8x8xi8> to vector<8x8xf32>
    %cst_5 = arith.constant 0.000000e+00 : f32
    %10 = vector.broadcast %cst_5 : f32 to vector<8x8xf32>
    %11 = arith.cmpf oeq, %9, %10 : vector<8x8xf32>
    %cst_6 = arith.constant -1.000000e+30 : f32
    %cst_7 = arith.constant 0.000000e+00 : f32
    %12 = vector.broadcast %cst_6 : f32 to vector<8x8xf32>
    %13 = vector.broadcast %cst_7 : f32 to vector<8x8xf32>
    %14 = arith.select %11, %12, %13 : vector<8x8xi1>, vector<8x8xf32>
    %cst_8 = arith.constant 0.000000e+00 : f32
    %15 = vector.broadcast %cst_8 : f32 to vector<8x32xf32>
    %16 = vector.extract_strided_slice %6 {offsets = [0, 0], sizes = [8, 8], strides = [1, 1]} : vector<8x32xf32> to vector<8x8xf32>
    %17 = vector.extract_strided_slice %2 {offsets = [0, 0], sizes = [8, 8], strides = [1, 1]} : vector<8x32xf32> to vector<8x8xf32>
    %18 = vector.extract_strided_slice %3 {offsets = [0, 0], sizes = [8, 8], strides = [1, 1]} : vector<8x32xf32> to vector<8x8xf32>
    %cst_9 = arith.constant dense<0.000000e+00> : vector<8x8xf32>
    %19 = tpu.matmul %16, %17, %cst_9 {dimension_numbers = #tpu.dot_dimension_numbers<[1], [1], [0], [0], [0, 0, 1, 0], [], []>} : vector<8x8xf32>, vector<8x8xf32>, vector<8x8xf32> -> vector<8x8xf32>
    %20 = arith.addf %19, %14 : vector<8x8xf32>
    %cst_10 = arith.constant dense<0xFF800000> : vector<8xf32>
    %21 = vector.multi_reduction <maximumf>, %20, %cst_10 [1] : vector<8x8xf32> to vector<8xf32>
    %22 = vector.shape_cast %21 : vector<8xf32> to vector<8x1xf32>
    %23 = vector.broadcast %22 : vector<8x1xf32> to vector<8x8xf32>
    %24 = arith.subf %20, %23 : vector<8x8xf32>
    %25 = math.exp %24 : vector<8x8xf32>
    %cst_11 = arith.constant dense<0.000000e+00> : vector<8xf32>
    %26 = vector.multi_reduction <add>, %25, %cst_11 [1] : vector<8x8xf32> to vector<8xf32>
    %27 = vector.shape_cast %26 : vector<8xf32> to vector<8x1xf32>
    %28 = tpu.reciprocal %27 {approx = true} : vector<8x1xf32> -> vector<8x1xf32>
    %cst_12 = arith.constant dense<0.000000e+00> : vector<8x8xf32>
    %29 = tpu.matmul %25, %18, %cst_12 {dimension_numbers = #tpu.dot_dimension_numbers<[1], [0], [0], [1], [0, 0, 1, 1], [], []>} : vector<8x8xf32>, vector<8x8xf32>, vector<8x8xf32> -> vector<8x8xf32>
    %30 = vector.broadcast %28 : vector<8x1xf32> to vector<8x8xf32>
    %31 = arith.mulf %29, %30 : vector<8x8xf32>
    %c0_13 = arith.constant 0 : index
    %c0_14 = arith.constant 0 : index
    %32 = vector.load %arg4[%c0_13, %c0_14] : memref<32x32xf32, #tpu.memory_space<vmem>>, vector<8x32xf32>
    %cst_15 = arith.constant dense<0.000000e+00> : vector<8x32xf32>
    %33 = tpu.matmul %31, %32, %cst_15 {dimension_numbers = #tpu.dot_dimension_numbers<[1], [0], [0], [1], [0, 0, 1, 1], [], []>} : vector<8x8xf32>, vector<8x32xf32>, vector<8x32xf32> -> vector<8x32xf32>
    %34 = arith.addf %15, %33 : vector<8x32xf32>
    %35 = vector.extract_strided_slice %6 {offsets = [0, 8], sizes = [8, 8], strides = [1, 1]} : vector<8x32xf32> to vector<8x8xf32>
    %36 = vector.extract_strided_slice %2 {offsets = [0, 8], sizes = [8, 8], strides = [1, 1]} : vector<8x32xf32> to vector<8x8xf32>
    %37 = vector.extract_strided_slice %3 {offsets = [0, 8], sizes = [8, 8], strides = [1, 1]} : vector<8x32xf32> to vector<8x8xf32>
    %cst_16 = arith.constant dense<0.000000e+00> : vector<8x8xf32>
    %38 = tpu.matmul %35, %36, %cst_16 {dimension_numbers = #tpu.dot_dimension_numbers<[1], [1], [0], [0], [0, 0, 1, 0], [], []>} : vector<8x8xf32>, vector<8x8xf32>, vector<8x8xf32> -> vector<8x8xf32>
    %39 = arith.addf %38, %14 : vector<8x8xf32>
    %cst_17 = arith.constant dense<0xFF800000> : vector<8xf32>
    %40 = vector.multi_reduction <maximumf>, %39, %cst_17 [1] : vector<8x8xf32> to vector<8xf32>
    %41 = vector.shape_cast %40 : vector<8xf32> to vector<8x1xf32>
    %42 = vector.broadcast %41 : vector<8x1xf32> to vector<8x8xf32>
    %43 = arith.subf %39, %42 : vector<8x8xf32>
    %44 = math.exp %43 : vector<8x8xf32>
    %cst_18 = arith.constant dense<0.000000e+00> : vector<8xf32>
    %45 = vector.multi_reduction <add>, %44, %cst_18 [1] : vector<8x8xf32> to vector<8xf32>
    %46 = vector.shape_cast %45 : vector<8xf32> to vector<8x1xf32>
    %47 = tpu.reciprocal %46 {approx = true} : vector<8x1xf32> -> vector<8x1xf32>
    %cst_19 = arith.constant dense<0.000000e+00> : vector<8x8xf32>
    %48 = tpu.matmul %44, %37, %cst_19 {dimension_numbers = #tpu.dot_dimension_numbers<[1], [0], [0], [1], [0, 0, 1, 1], [], []>} : vector<8x8xf32>, vector<8x8xf32>, vector<8x8xf32> -> vector<8x8xf32>
    %49 = vector.broadcast %47 : vector<8x1xf32> to vector<8x8xf32>
    %50 = arith.mulf %48, %49 : vector<8x8xf32>
    %c8 = arith.constant 8 : index
    %c0_20 = arith.constant 0 : index
    %51 = vector.load %arg4[%c8, %c0_20] : memref<32x32xf32, #tpu.memory_space<vmem>>, vector<8x32xf32>
    %cst_21 = arith.constant dense<0.000000e+00> : vector<8x32xf32>
    %52 = tpu.matmul %50, %51, %cst_21 {dimension_numbers = #tpu.dot_dimension_numbers<[1], [0], [0], [1], [0, 0, 1, 1], [], []>} : vector<8x8xf32>, vector<8x32xf32>, vector<8x32xf32> -> vector<8x32xf32>
    %53 = arith.addf %34, %52 : vector<8x32xf32>
    %54 = vector.extract_strided_slice %6 {offsets = [0, 16], sizes = [8, 8], strides = [1, 1]} : vector<8x32xf32> to vector<8x8xf32>
    %55 = vector.extract_strided_slice %2 {offsets = [0, 16], sizes = [8, 8], strides = [1, 1]} : vector<8x32xf32> to vector<8x8xf32>
    %56 = vector.extract_strided_slice %3 {offsets = [0, 16], sizes = [8, 8], strides = [1, 1]} : vector<8x32xf32> to vector<8x8xf32>
    %cst_22 = arith.constant dense<0.000000e+00> : vector<8x8xf32>
    %57 = tpu.matmul %54, %55, %cst_22 {dimension_numbers = #tpu.dot_dimension_numbers<[1], [1], [0], [0], [0, 0, 1, 0], [], []>} : vector<8x8xf32>, vector<8x8xf32>, vector<8x8xf32> -> vector<8x8xf32>
    %58 = arith.addf %57, %14 : vector<8x8xf32>
    %cst_23 = arith.constant dense<0xFF800000> : vector<8xf32>
    %59 = vector.multi_reduction <maximumf>, %58, %cst_23 [1] : vector<8x8xf32> to vector<8xf32>
    %60 = vector.shape_cast %59 : vector<8xf32> to vector<8x1xf32>
    %61 = vector.broadcast %60 : vector<8x1xf32> to vector<8x8xf32>
    %62 = arith.subf %58, %61 : vector<8x8xf32>
    %63 = math.exp %62 : vector<8x8xf32>
    %cst_24 = arith.constant dense<0.000000e+00> : vector<8xf32>
    %64 = vector.multi_reduction <add>, %63, %cst_24 [1] : vector<8x8xf32> to vector<8xf32>
    %65 = vector.shape_cast %64 : vector<8xf32> to vector<8x1xf32>
    %66 = tpu.reciprocal %65 {approx = true} : vector<8x1xf32> -> vector<8x1xf32>
    %cst_25 = arith.constant dense<0.000000e+00> : vector<8x8xf32>
    %67 = tpu.matmul %63, %56, %cst_25 {dimension_numbers = #tpu.dot_dimension_numbers<[1], [0], [0], [1], [0, 0, 1, 1], [], []>} : vector<8x8xf32>, vector<8x8xf32>, vector<8x8xf32> -> vector<8x8xf32>
    %68 = vector.broadcast %66 : vector<8x1xf32> to vector<8x8xf32>
    %69 = arith.mulf %67, %68 : vector<8x8xf32>
    %c16 = arith.constant 16 : index
    %c0_26 = arith.constant 0 : index
    %70 = vector.load %arg4[%c16, %c0_26] : memref<32x32xf32, #tpu.memory_space<vmem>>, vector<8x32xf32>
    %cst_27 = arith.constant dense<0.000000e+00> : vector<8x32xf32>
    %71 = tpu.matmul %69, %70, %cst_27 {dimension_numbers = #tpu.dot_dimension_numbers<[1], [0], [0], [1], [0, 0, 1, 1], [], []>} : vector<8x8xf32>, vector<8x32xf32>, vector<8x32xf32> -> vector<8x32xf32>
    %72 = arith.addf %53, %71 : vector<8x32xf32>
    %73 = vector.extract_strided_slice %6 {offsets = [0, 24], sizes = [8, 8], strides = [1, 1]} : vector<8x32xf32> to vector<8x8xf32>
    %74 = vector.extract_strided_slice %2 {offsets = [0, 24], sizes = [8, 8], strides = [1, 1]} : vector<8x32xf32> to vector<8x8xf32>
    %75 = vector.extract_strided_slice %3 {offsets = [0, 24], sizes = [8, 8], strides = [1, 1]} : vector<8x32xf32> to vector<8x8xf32>
    %cst_28 = arith.constant dense<0.000000e+00> : vector<8x8xf32>
    %76 = tpu.matmul %73, %74, %cst_28 {dimension_numbers = #tpu.dot_dimension_numbers<[1], [1], [0], [0], [0, 0, 1, 0], [], []>} : vector<8x8xf32>, vector<8x8xf32>, vector<8x8xf32> -> vector<8x8xf32>
    %77 = arith.addf %76, %14 : vector<8x8xf32>
    %cst_29 = arith.constant dense<0xFF800000> : vector<8xf32>
    %78 = vector.multi_reduction <maximumf>, %77, %cst_29 [1] : vector<8x8xf32> to vector<8xf32>
    %79 = vector.shape_cast %78 : vector<8xf32> to vector<8x1xf32>
    %80 = vector.broadcast %79 : vector<8x1xf32> to vector<8x8xf32>
    %81 = arith.subf %77, %80 : vector<8x8xf32>
    %82 = math.exp %81 : vector<8x8xf32>
    %cst_30 = arith.constant dense<0.000000e+00> : vector<8xf32>
    %83 = vector.multi_reduction <add>, %82, %cst_30 [1] : vector<8x8xf32> to vector<8xf32>
    %84 = vector.shape_cast %83 : vector<8xf32> to vector<8x1xf32>
    %85 = tpu.reciprocal %84 {approx = true} : vector<8x1xf32> -> vector<8x1xf32>
    %cst_31 = arith.constant dense<0.000000e+00> : vector<8x8xf32>
    %86 = tpu.matmul %82, %75, %cst_31 {dimension_numbers = #tpu.dot_dimension_numbers<[1], [0], [0], [1], [0, 0, 1, 1], [], []>} : vector<8x8xf32>, vector<8x8xf32>, vector<8x8xf32> -> vector<8x8xf32>
    %87 = vector.broadcast %85 : vector<8x1xf32> to vector<8x8xf32>
    %88 = arith.mulf %86, %87 : vector<8x8xf32>
    %c24 = arith.constant 24 : index
    %c0_32 = arith.constant 0 : index
    %89 = vector.load %arg4[%c24, %c0_32] : memref<32x32xf32, #tpu.memory_space<vmem>>, vector<8x32xf32>
    %cst_33 = arith.constant dense<0.000000e+00> : vector<8x32xf32>
    %90 = tpu.matmul %88, %89, %cst_33 {dimension_numbers = #tpu.dot_dimension_numbers<[1], [0], [0], [1], [0, 0, 1, 1], [], []>} : vector<8x8xf32>, vector<8x32xf32>, vector<8x32xf32> -> vector<8x32xf32>
    %91 = arith.addf %72, %90 : vector<8x32xf32>
    %c0_34 = arith.constant 0 : index
    %c0_35 = arith.constant 0 : index
    %92 = vector.load %arg5[%c0_34, %c0_35] : memref<1x32xf32, #tpu.memory_space<vmem>>, vector<1x32xf32>
    %93 = vector.broadcast %92 : vector<1x32xf32> to vector<8x32xf32>
    %94 = arith.addf %91, %93 : vector<8x32xf32>
    %c0_36 = arith.constant 0 : index
    %c0_37 = arith.constant 0 : index
    %c0_38 = arith.constant 0 : index
    %95 = vector.load %arg6[%c0_36, %c0_37, %c0_38] : memref<1x8x32xf32, #tpu.memory_space<vmem>>, vector<1x8x32xf32>
    %96 = vector.shape_cast %95 : vector<1x8x32xf32> to vector<8x32xf32>
    %97 = arith.addf %94, %96 : vector<8x32xf32>
    %c0_39 = arith.constant 0 : index
    %c0_40 = arith.constant 0 : index
    %c0_41 = arith.constant 0 : index
    %98 = vector.load %arg7[%c0_39, %c0_40, %c0_41] : memref<1x8x32xf32, #tpu.memory_space<vmem>>, vector<1x8x32xf32>
    %99 = vector.shape_cast %98 : vector<1x8x32xf32> to vector<8x32xf32>
    %100 = vector.shape_cast %97 : vector<8x32xf32> to vector<1x8x32xf32>
    tpu.vector_store %arg7[%c0_39, %c0_40, %c0_41], %100 {strides = array<i32>} : memref<1x8x32xf32, #tpu.memory_space<vmem>>, vector<1x8x32xf32>,
    return
  }
  func.func @transform_0(%arg0: i32, %arg1: i32) -> (i32, i32, i32) {
    %c0_i32 = arith.constant 0 : i32
    %c0_i32_0 = arith.constant 0 : i32
    %c0_i32_1 = arith.constant 0 : i32
    return %arg0, %c0_i32, %c0_i32_0 : i32, i32, i32
  }
  func.func @transform_1(%arg0: i32, %arg1: i32) -> (i32, i32, i32) {
    %c0_i32 = arith.constant 0 : i32
    %c0_i32_0 = arith.constant 0 : i32
    return %arg0, %arg1, %c0_i32 : i32, i32, i32
  }
  func.func @transform_2(%arg0: i32, %arg1: i32) -> (i32, i32) {
    %c0_i32 = arith.constant 0 : i32
    %c0_i32_0 = arith.constant 0 : i32
    %c0_i32_1 = arith.constant 0 : i32
    return %c0_i32, %c0_i32_0 : i32, i32
  }
  func.func @transform_3(%arg0: i32, %arg1: i32) -> (i32, i32) {
    %c0_i32 = arith.constant 0 : i32
    %c0_i32_0 = arith.constant 0 : i32
    %c0_i32_1 = arith.constant 0 : i32
    return %c0_i32, %c0_i32_0 : i32, i32
  }
  func.func @transform_4(%arg0: i32, %arg1: i32) -> (i32, i32, i32) {
    %c0_i32 = arith.constant 0 : i32
    %c0_i32_0 = arith.constant 0 : i32
    return %arg0, %arg1, %c0_i32 : i32, i32, i32
  }
  func.func @transform_5(%arg0: i32, %arg1: i32) -> (i32, i32, i32) {
    %c0_i32 = arith.constant 0 : i32
    %c0_i32_0 = arith.constant 0 : i32
    return %arg0, %arg1, %c0_i32 : i32, i32, i32
  }
}

module attributes {stable_mosaic.version = 11 : i64} {
  func.func @_ln_matmul_kernel(%arg0: i32, %arg1: memref<16x32xf32, #tpu.memory_space<vmem>>, %arg2: memref<1x32xf32, #tpu.memory_space<vmem>>, %arg3: memref<1x32xf32, #tpu.memory_space<vmem>>, %arg4: memref<32x32xf32, #tpu.memory_space<vmem>>, %arg5: memref<1x32xf32, #tpu.memory_space<vmem>>, %arg6: memref<16x32xf32, #tpu.memory_space<vmem>>) attributes {dimension_semantics = [#tpu.dimension_semantics<parallel>], iteration_bounds = array<i64: 1>, scalar_prefetch = 0 : i64, scratch_operands = 0 : i64, tpu.core_type = #tpu.core_type<tc>, window_params = [{transform_indices = @transform_0, window_bounds = array<i64: 16, 32>}, {pipeline_mode = #tpu.pipeline_mode<synchronous>, transform_indices = @transform_1, window_bounds = array<i64: 1, 32>}, {pipeline_mode = #tpu.pipeline_mode<synchronous>, transform_indices = @transform_2, window_bounds = array<i64: 1, 32>}, {pipeline_mode = #tpu.pipeline_mode<synchronous>, transform_indices = @transform_3, window_bounds = array<i64: 32, 32>}, {pipeline_mode = #tpu.pipeline_mode<synchronous>, transform_indices = @transform_4, window_bounds = array<i64: 1, 32>}, {transform_indices = @transform_5, window_bounds = array<i64: 16, 32>}]} {
    %c0 = arith.constant 0 : index
    %c0_0 = arith.constant 0 : index
    %0 = vector.load %arg1[%c0, %c0_0] : memref<16x32xf32, #tpu.memory_space<vmem>>, vector<16x32xf32>
    %cst = arith.constant dense<0.000000e+00> : vector<16xf32>
    %1 = vector.multi_reduction <add>, %0, %cst [1] : vector<16x32xf32> to vector<16xf32>
    %2 = vector.shape_cast %1 : vector<16xf32> to vector<16x1xf32>
    %cst_1 = arith.constant 3.200000e+01 : f32
    %3 = vector.broadcast %cst_1 : f32 to vector<16x1xf32>
    %4 = arith.divf %2, %3 : vector<16x1xf32>
    %5 = vector.broadcast %4 : vector<16x1xf32> to vector<16x32xf32>
    %6 = arith.subf %0, %5 : vector<16x32xf32>
    %7 = arith.mulf %6, %6 : vector<16x32xf32>
    %cst_2 = arith.constant dense<0.000000e+00> : vector<16xf32>
    %8 = vector.multi_reduction <add>, %7, %cst_2 [1] : vector<16x32xf32> to vector<16xf32>
    %9 = vector.shape_cast %8 : vector<16xf32> to vector<16x1xf32>
    %cst_3 = arith.constant 3.200000e+01 : f32
    %10 = vector.broadcast %cst_3 : f32 to vector<16x1xf32>
    %11 = arith.divf %9, %10 : vector<16x1xf32>
    %cst_4 = arith.constant 9.99999974E-6 : f32
    %12 = vector.broadcast %cst_4 : f32 to vector<16x1xf32>
    %13 = arith.addf %11, %12 : vector<16x1xf32>
    %14 = math.rsqrt %13 : vector<16x1xf32>
    %15 = vector.broadcast %14 : vector<16x1xf32> to vector<16x32xf32>
    %16 = arith.mulf %6, %15 : vector<16x32xf32>
    %c0_5 = arith.constant 0 : index
    %c0_6 = arith.constant 0 : index
    %17 = vector.load %arg2[%c0_5, %c0_6] : memref<1x32xf32, #tpu.memory_space<vmem>>, vector<1x32xf32>
    %18 = vector.broadcast %17 : vector<1x32xf32> to vector<16x32xf32>
    %19 = arith.mulf %16, %18 : vector<16x32xf32>
    %c0_7 = arith.constant 0 : index
    %c0_8 = arith.constant 0 : index
    %20 = vector.load %arg3[%c0_7, %c0_8] : memref<1x32xf32, #tpu.memory_space<vmem>>, vector<1x32xf32>
    %21 = vector.broadcast %20 : vector<1x32xf32> to vector<16x32xf32>
    %22 = arith.addf %19, %21 : vector<16x32xf32>
    %c0_9 = arith.constant 0 : index
    %c0_10 = arith.constant 0 : index
    %23 = vector.load %arg4[%c0_9, %c0_10] : memref<32x32xf32, #tpu.memory_space<vmem>>, vector<32x32xf32>
    %cst_11 = arith.constant dense<0.000000e+00> : vector<16x32xf32>
    %24 = tpu.matmul %22, %23, %cst_11 {dimension_numbers = #tpu.dot_dimension_numbers<[1], [0], [0], [1], [0, 0, 1, 1], [], []>} : vector<16x32xf32>, vector<32x32xf32>, vector<16x32xf32> -> vector<16x32xf32>
    %c0_12 = arith.constant 0 : index
    %c0_13 = arith.constant 0 : index
    %25 = vector.load %arg5[%c0_12, %c0_13] : memref<1x32xf32, #tpu.memory_space<vmem>>, vector<1x32xf32>
    %26 = vector.broadcast %25 : vector<1x32xf32> to vector<16x32xf32>
    %27 = arith.addf %24, %26 : vector<16x32xf32>
    %c0_14 = arith.constant 0 : index
    %c0_15 = arith.constant 0 : index
    %28 = vector.load %arg6[%c0_14, %c0_15] : memref<16x32xf32, #tpu.memory_space<vmem>>, vector<16x32xf32>
    tpu.vector_store %arg6[%c0_14, %c0_15], %27 {strides = array<i32>} : memref<16x32xf32, #tpu.memory_space<vmem>>, vector<16x32xf32>,
    return
  }
  func.func @transform_0(%arg0: i32) -> (i32, i32) {
    %c0_i32 = arith.constant 0 : i32
    %c0_i32_0 = arith.constant 0 : i32
    return %arg0, %c0_i32 : i32, i32
  }
  func.func @transform_1(%arg0: i32) -> (i32, i32) {
    %c0_i32 = arith.constant 0 : i32
    %c0_i32_0 = arith.constant 0 : i32
    %c0_i32_1 = arith.constant 0 : i32
    return %c0_i32, %c0_i32_0 : i32, i32
  }
  func.func @transform_2(%arg0: i32) -> (i32, i32) {
    %c0_i32 = arith.constant 0 : i32
    %c0_i32_0 = arith.constant 0 : i32
    %c0_i32_1 = arith.constant 0 : i32
    return %c0_i32, %c0_i32_0 : i32, i32
  }
  func.func @transform_3(%arg0: i32) -> (i32, i32) {
    %c0_i32 = arith.constant 0 : i32
    %c0_i32_0 = arith.constant 0 : i32
    %c0_i32_1 = arith.constant 0 : i32
    return %c0_i32, %c0_i32_0 : i32, i32
  }
  func.func @transform_4(%arg0: i32) -> (i32, i32) {
    %c0_i32 = arith.constant 0 : i32
    %c0_i32_0 = arith.constant 0 : i32
    %c0_i32_1 = arith.constant 0 : i32
    return %c0_i32, %c0_i32_0 : i32, i32
  }
  func.func @transform_5(%arg0: i32) -> (i32, i32) {
    %c0_i32 = arith.constant 0 : i32
    %c0_i32_0 = arith.constant 0 : i32
    return %arg0, %c0_i32 : i32, i32
  }
}

module attributes {stable_mosaic.version = 11 : i64} {
  func.func @_ln_matmul_kernel(%arg0: i32, %arg1: memref<16x32xf32, #tpu.memory_space<vmem>>, %arg2: memref<1x32xf32, #tpu.memory_space<vmem>>, %arg3: memref<1x32xf32, #tpu.memory_space<vmem>>, %arg4: memref<32x96xf32, #tpu.memory_space<vmem>>, %arg5: memref<1x96xf32, #tpu.memory_space<vmem>>, %arg6: memref<16x96xf32, #tpu.memory_space<vmem>>) attributes {dimension_semantics = [#tpu.dimension_semantics<parallel>], iteration_bounds = array<i64: 1>, scalar_prefetch = 0 : i64, scratch_operands = 0 : i64, tpu.core_type = #tpu.core_type<tc>, window_params = [{transform_indices = @transform_0, window_bounds = array<i64: 16, 32>}, {pipeline_mode = #tpu.pipeline_mode<synchronous>, transform_indices = @transform_1, window_bounds = array<i64: 1, 32>}, {pipeline_mode = #tpu.pipeline_mode<synchronous>, transform_indices = @transform_2, window_bounds = array<i64: 1, 32>}, {pipeline_mode = #tpu.pipeline_mode<synchronous>, transform_indices = @transform_3, window_bounds = array<i64: 32, 96>}, {pipeline_mode = #tpu.pipeline_mode<synchronous>, transform_indices = @transform_4, window_bounds = array<i64: 1, 96>}, {transform_indices = @transform_5, window_bounds = array<i64: 16, 96>}]} {
    %c0 = arith.constant 0 : index
    %c0_0 = arith.constant 0 : index
    %0 = vector.load %arg1[%c0, %c0_0] : memref<16x32xf32, #tpu.memory_space<vmem>>, vector<16x32xf32>
    %cst = arith.constant dense<0.000000e+00> : vector<16xf32>
    %1 = vector.multi_reduction <add>, %0, %cst [1] : vector<16x32xf32> to vector<16xf32>
    %2 = vector.shape_cast %1 : vector<16xf32> to vector<16x1xf32>
    %cst_1 = arith.constant 3.200000e+01 : f32
    %3 = vector.broadcast %cst_1 : f32 to vector<16x1xf32>
    %4 = arith.divf %2, %3 : vector<16x1xf32>
    %5 = vector.broadcast %4 : vector<16x1xf32> to vector<16x32xf32>
    %6 = arith.subf %0, %5 : vector<16x32xf32>
    %7 = arith.mulf %6, %6 : vector<16x32xf32>
    %cst_2 = arith.constant dense<0.000000e+00> : vector<16xf32>
    %8 = vector.multi_reduction <add>, %7, %cst_2 [1] : vector<16x32xf32> to vector<16xf32>
    %9 = vector.shape_cast %8 : vector<16xf32> to vector<16x1xf32>
    %cst_3 = arith.constant 3.200000e+01 : f32
    %10 = vector.broadcast %cst_3 : f32 to vector<16x1xf32>
    %11 = arith.divf %9, %10 : vector<16x1xf32>
    %cst_4 = arith.constant 9.99999974E-6 : f32
    %12 = vector.broadcast %cst_4 : f32 to vector<16x1xf32>
    %13 = arith.addf %11, %12 : vector<16x1xf32>
    %14 = math.rsqrt %13 : vector<16x1xf32>
    %15 = vector.broadcast %14 : vector<16x1xf32> to vector<16x32xf32>
    %16 = arith.mulf %6, %15 : vector<16x32xf32>
    %c0_5 = arith.constant 0 : index
    %c0_6 = arith.constant 0 : index
    %17 = vector.load %arg2[%c0_5, %c0_6] : memref<1x32xf32, #tpu.memory_space<vmem>>, vector<1x32xf32>
    %18 = vector.broadcast %17 : vector<1x32xf32> to vector<16x32xf32>
    %19 = arith.mulf %16, %18 : vector<16x32xf32>
    %c0_7 = arith.constant 0 : index
    %c0_8 = arith.constant 0 : index
    %20 = vector.load %arg3[%c0_7, %c0_8] : memref<1x32xf32, #tpu.memory_space<vmem>>, vector<1x32xf32>
    %21 = vector.broadcast %20 : vector<1x32xf32> to vector<16x32xf32>
    %22 = arith.addf %19, %21 : vector<16x32xf32>
    %c0_9 = arith.constant 0 : index
    %c0_10 = arith.constant 0 : index
    %23 = vector.load %arg4[%c0_9, %c0_10] : memref<32x96xf32, #tpu.memory_space<vmem>>, vector<32x96xf32>
    %cst_11 = arith.constant dense<0.000000e+00> : vector<16x96xf32>
    %24 = tpu.matmul %22, %23, %cst_11 {dimension_numbers = #tpu.dot_dimension_numbers<[1], [0], [0], [1], [0, 0, 1, 1], [], []>} : vector<16x32xf32>, vector<32x96xf32>, vector<16x96xf32> -> vector<16x96xf32>
    %c0_12 = arith.constant 0 : index
    %c0_13 = arith.constant 0 : index
    %25 = vector.load %arg5[%c0_12, %c0_13] : memref<1x96xf32, #tpu.memory_space<vmem>>, vector<1x96xf32>
    %26 = vector.broadcast %25 : vector<1x96xf32> to vector<16x96xf32>
    %27 = arith.addf %24, %26 : vector<16x96xf32>
    %c0_14 = arith.constant 0 : index
    %c0_15 = arith.constant 0 : index
    %28 = vector.load %arg6[%c0_14, %c0_15] : memref<16x96xf32, #tpu.memory_space<vmem>>, vector<16x96xf32>
    tpu.vector_store %arg6[%c0_14, %c0_15], %27 {strides = array<i32>} : memref<16x96xf32, #tpu.memory_space<vmem>>, vector<16x96xf32>,
    return
  }
  func.func @transform_0(%arg0: i32) -> (i32, i32) {
    %c0_i32 = arith.constant 0 : i32
    %c0_i32_0 = arith.constant 0 : i32
    return %arg0, %c0_i32 : i32, i32
  }
  func.func @transform_1(%arg0: i32) -> (i32, i32) {
    %c0_i32 = arith.constant 0 : i32
    %c0_i32_0 = arith.constant 0 : i32
    %c0_i32_1 = arith.constant 0 : i32
    return %c0_i32, %c0_i32_0 : i32, i32
  }
  func.func @transform_2(%arg0: i32) -> (i32, i32) {
    %c0_i32 = arith.constant 0 : i32
    %c0_i32_0 = arith.constant 0 : i32
    %c0_i32_1 = arith.constant 0 : i32
    return %c0_i32, %c0_i32_0 : i32, i32
  }
  func.func @transform_3(%arg0: i32) -> (i32, i32) {
    %c0_i32 = arith.constant 0 : i32
    %c0_i32_0 = arith.constant 0 : i32
    %c0_i32_1 = arith.constant 0 : i32
    return %c0_i32, %c0_i32_0 : i32, i32
  }
  func.func @transform_4(%arg0: i32) -> (i32, i32) {
    %c0_i32 = arith.constant 0 : i32
    %c0_i32_0 = arith.constant 0 : i32
    %c0_i32_1 = arith.constant 0 : i32
    return %c0_i32, %c0_i32_0 : i32, i32
  }
  func.func @transform_5(%arg0: i32) -> (i32, i32) {
    %c0_i32 = arith.constant 0 : i32
    %c0_i32_0 = arith.constant 0 : i32
    return %arg0, %c0_i32 : i32, i32
  }
}

module attributes {stable_mosaic.version = 11 : i64} {
  func.func @_matmul_kernel(%arg0: i32, %arg1: memref<16x32xf32, #tpu.memory_space<vmem>>, %arg2: memref<32x64xf32, #tpu.memory_space<vmem>>, %arg3: memref<1x64xf32, #tpu.memory_space<vmem>>, %arg4: memref<16x64xf32, #tpu.memory_space<vmem>>) attributes {dimension_semantics = [#tpu.dimension_semantics<parallel>], iteration_bounds = array<i64: 1>, scalar_prefetch = 0 : i64, scratch_operands = 0 : i64, tpu.core_type = #tpu.core_type<tc>, window_params = [{transform_indices = @transform_0, window_bounds = array<i64: 16, 32>}, {pipeline_mode = #tpu.pipeline_mode<synchronous>, transform_indices = @transform_1, window_bounds = array<i64: 32, 64>}, {pipeline_mode = #tpu.pipeline_mode<synchronous>, transform_indices = @transform_2, window_bounds = array<i64: 1, 64>}, {transform_indices = @transform_3, window_bounds = array<i64: 16, 64>}]} {
    %c0 = arith.constant 0 : index
    %c0_0 = arith.constant 0 : index
    %0 = vector.load %arg1[%c0, %c0_0] : memref<16x32xf32, #tpu.memory_space<vmem>>, vector<16x32xf32>
    %c0_1 = arith.constant 0 : index
    %c0_2 = arith.constant 0 : index
    %1 = vector.load %arg2[%c0_1, %c0_2] : memref<32x64xf32, #tpu.memory_space<vmem>>, vector<32x64xf32>
    %cst = arith.constant dense<0.000000e+00> : vector<16x64xf32>
    %2 = tpu.matmul %0, %1, %cst {dimension_numbers = #tpu.dot_dimension_numbers<[1], [0], [0], [1], [0, 0, 1, 1], [], []>} : vector<16x32xf32>, vector<32x64xf32>, vector<16x64xf32> -> vector<16x64xf32>
    %c0_3 = arith.constant 0 : index
    %c0_4 = arith.constant 0 : index
    %3 = vector.load %arg3[%c0_3, %c0_4] : memref<1x64xf32, #tpu.memory_space<vmem>>, vector<1x64xf32>
    %4 = vector.broadcast %3 : vector<1x64xf32> to vector<16x64xf32>
    %5 = arith.addf %2, %4 : vector<16x64xf32>
    %c0_5 = arith.constant 0 : index
    %c0_6 = arith.constant 0 : index
    %6 = vector.load %arg4[%c0_5, %c0_6] : memref<16x64xf32, #tpu.memory_space<vmem>>, vector<16x64xf32>
    tpu.vector_store %arg4[%c0_5, %c0_6], %5 {strides = array<i32>} : memref<16x64xf32, #tpu.memory_space<vmem>>, vector<16x64xf32>,
    return
  }
  func.func @transform_0(%arg0: i32) -> (i32, i32) {
    %c0_i32 = arith.constant 0 : i32
    %c0_i32_0 = arith.constant 0 : i32
    return %arg0, %c0_i32 : i32, i32
  }
  func.func @transform_1(%arg0: i32) -> (i32, i32) {
    %c0_i32 = arith.constant 0 : i32
    %c0_i32_0 = arith.constant 0 : i32
    %c0_i32_1 = arith.constant 0 : i32
    return %c0_i32, %c0_i32_0 : i32, i32
  }
  func.func @transform_2(%arg0: i32) -> (i32, i32) {
    %c0_i32 = arith.constant 0 : i32
    %c0_i32_0 = arith.constant 0 : i32
    %c0_i32_1 = arith.constant 0 : i32
    return %c0_i32, %c0_i32_0 : i32, i32
  }
  func.func @transform_3(%arg0: i32) -> (i32, i32) {
    %c0_i32 = arith.constant 0 : i32
    %c0_i32_0 = arith.constant 0 : i32
    return %arg0, %c0_i32 : i32, i32
  }
}

module attributes {stable_mosaic.version = 11 : i64} {
  func.func @_ffn_kernel(%arg0: i32, %arg1: i32, %arg2: memref<16x32xf32, #tpu.memory_space<vmem>>, %arg3: memref<1x32xf32, #tpu.memory_space<vmem>>, %arg4: memref<1x32xf32, #tpu.memory_space<vmem>>, %arg5: memref<32x64xf32, #tpu.memory_space<vmem>>, %arg6: memref<1x64xf32, #tpu.memory_space<vmem>>, %arg7: memref<64x32xf32, #tpu.memory_space<vmem>>, %arg8: memref<1x32xf32, #tpu.memory_space<vmem>>, %arg9: memref<16x32xf32, #tpu.memory_space<vmem>>, %arg10: memref<16x32xf32, #tpu.memory_space<vmem>>) attributes {dimension_semantics = [#tpu.dimension_semantics<parallel>, #tpu.dimension_semantics<arbitrary>], iteration_bounds = array<i64: 1, 1>, scalar_prefetch = 0 : i64, scratch_operands = 1 : i64, tpu.core_type = #tpu.core_type<tc>, window_params = [{transform_indices = @transform_0, window_bounds = array<i64: 16, 32>}, {pipeline_mode = #tpu.pipeline_mode<synchronous>, transform_indices = @transform_1, window_bounds = array<i64: 1, 32>}, {pipeline_mode = #tpu.pipeline_mode<synchronous>, transform_indices = @transform_2, window_bounds = array<i64: 1, 32>}, {transform_indices = @transform_3, window_bounds = array<i64: 32, 64>}, {transform_indices = @transform_4, window_bounds = array<i64: 1, 64>}, {transform_indices = @transform_5, window_bounds = array<i64: 64, 32>}, {pipeline_mode = #tpu.pipeline_mode<synchronous>, transform_indices = @transform_6, window_bounds = array<i64: 1, 32>}, {transform_indices = @transform_7, window_bounds = array<i64: 16, 32>}]} {
    %c0 = arith.constant 0 : index
    %c0_0 = arith.constant 0 : index
    %0 = vector.load %arg2[%c0, %c0_0] : memref<16x32xf32, #tpu.memory_space<vmem>>, vector<16x32xf32>
    %cst = arith.constant dense<0.000000e+00> : vector<16xf32>
    %1 = vector.multi_reduction <add>, %0, %cst [1] : vector<16x32xf32> to vector<16xf32>
    %2 = vector.shape_cast %1 : vector<16xf32> to vector<16x1xf32>
    %cst_1 = arith.constant 3.200000e+01 : f32
    %3 = vector.broadcast %cst_1 : f32 to vector<16x1xf32>
    %4 = arith.divf %2, %3 : vector<16x1xf32>
    %5 = vector.broadcast %4 : vector<16x1xf32> to vector<16x32xf32>
    %6 = arith.subf %0, %5 : vector<16x32xf32>
    %7 = arith.mulf %6, %6 : vector<16x32xf32>
    %cst_2 = arith.constant dense<0.000000e+00> : vector<16xf32>
    %8 = vector.multi_reduction <add>, %7, %cst_2 [1] : vector<16x32xf32> to vector<16xf32>
    %9 = vector.shape_cast %8 : vector<16xf32> to vector<16x1xf32>
    %cst_3 = arith.constant 3.200000e+01 : f32
    %10 = vector.broadcast %cst_3 : f32 to vector<16x1xf32>
    %11 = arith.divf %9, %10 : vector<16x1xf32>
    %cst_4 = arith.constant 9.99999974E-6 : f32
    %12 = vector.broadcast %cst_4 : f32 to vector<16x1xf32>
    %13 = arith.addf %11, %12 : vector<16x1xf32>
    %14 = math.rsqrt %13 : vector<16x1xf32>
    %15 = vector.broadcast %14 : vector<16x1xf32> to vector<16x32xf32>
    %16 = arith.mulf %6, %15 : vector<16x32xf32>
    %c0_5 = arith.constant 0 : index
    %c0_6 = arith.constant 0 : index
    %17 = vector.load %arg3[%c0_5, %c0_6] : memref<1x32xf32, #tpu.memory_space<vmem>>, vector<1x32xf32>
    %18 = vector.broadcast %17 : vector<1x32xf32> to vector<16x32xf32>
    %19 = arith.mulf %16, %18 : vector<16x32xf32>
    %c0_7 = arith.constant 0 : index
    %c0_8 = arith.constant 0 : index
    %20 = vector.load %arg4[%c0_7, %c0_8] : memref<1x32xf32, #tpu.memory_space<vmem>>, vector<1x32xf32>
    %21 = vector.broadcast %20 : vector<1x32xf32> to vector<16x32xf32>
    %22 = arith.addf %19, %21 : vector<16x32xf32>
    %c0_9 = arith.constant 0 : index
    %c0_10 = arith.constant 0 : index
    %23 = vector.load %arg5[%c0_9, %c0_10] : memref<32x64xf32, #tpu.memory_space<vmem>>, vector<32x64xf32>
    %cst_11 = arith.constant dense<0.000000e+00> : vector<16x64xf32>
    %24 = tpu.matmul %22, %23, %cst_11 {dimension_numbers = #tpu.dot_dimension_numbers<[1], [0], [0], [1], [0, 0, 1, 1], [], []>} : vector<16x32xf32>, vector<32x64xf32>, vector<16x64xf32> -> vector<16x64xf32>
    %c0_12 = arith.constant 0 : index
    %c0_13 = arith.constant 0 : index
    %25 = vector.load %arg6[%c0_12, %c0_13] : memref<1x64xf32, #tpu.memory_space<vmem>>, vector<1x64xf32>
    %26 = vector.broadcast %25 : vector<1x64xf32> to vector<16x64xf32>
    %27 = arith.addf %24, %26 : vector<16x64xf32>
    %cst_14 = arith.constant 0.000000e+00 : f32
    %28 = vector.broadcast %cst_14 : f32 to vector<16x64xf32>
    %29 = arith.maximumf %27, %28 : vector<16x64xf32>
    %c0_15 = arith.constant 0 : index
    %c0_16 = arith.constant 0 : index
    %30 = vector.load %arg7[%c0_15, %c0_16] : memref<64x32xf32, #tpu.memory_space<vmem>>, vector<64x32xf32>
    %cst_17 = arith.constant dense<0.000000e+00> : vector<16x32xf32>
    %31 = tpu.matmul %29, %30, %cst_17 {dimension_numbers = #tpu.dot_dimension_numbers<[1], [0], [0], [1], [0, 0, 1, 1], [], []>} : vector<16x64xf32>, vector<64x32xf32>, vector<16x32xf32> -> vector<16x32xf32>
    %c0_i32 = arith.constant 0 : i32
    %32 = arith.cmpi eq, %arg1, %c0_i32 : i32
    %33 = arith.extui %32 : i1 to i32
    %c0_i32_18 = arith.constant 0 : i32
    %34 = arith.cmpi ne, %33, %c0_i32_18 : i32
    scf.if %34 {
      %cst_25 = arith.constant 0.000000e+00 : f32
      %41 = vector.broadcast %cst_25 : f32 to vector<16x32xf32>
      %c0_26 = arith.constant 0 : index
      %c0_27 = arith.constant 0 : index
      %42 = vector.load %arg10[%c0_26, %c0_27] : memref<16x32xf32, #tpu.memory_space<vmem>>, vector<16x32xf32>
      tpu.vector_store %arg10[%c0_26, %c0_27], %41 {strides = array<i32>} : memref<16x32xf32, #tpu.memory_space<vmem>>, vector<16x32xf32>,
    } else {
    }
    %c0_19 = arith.constant 0 : index
    %c0_20 = arith.constant 0 : index
    %35 = vector.load %arg10[%c0_19, %c0_20] : memref<16x32xf32, #tpu.memory_space<vmem>>, vector<16x32xf32>
    %36 = arith.addf %35, %31 : vector<16x32xf32>
    %c0_21 = arith.constant 0 : index
    %c0_22 = arith.constant 0 : index
    %37 = vector.load %arg10[%c0_21, %c0_22] : memref<16x32xf32, #tpu.memory_space<vmem>>, vector<16x32xf32>
    tpu.vector_store %arg10[%c0_21, %c0_22], %36 {strides = array<i32>} : memref<16x32xf32, #tpu.memory_space<vmem>>, vector<16x32xf32>,
    %c0_i32_23 = arith.constant 0 : i32
    %38 = arith.cmpi eq, %arg1, %c0_i32_23 : i32
    %39 = arith.extui %38 : i1 to i32
    %c0_i32_24 = arith.constant 0 : i32
    %40 = arith.cmpi ne, %39, %c0_i32_24 : i32
    scf.if %40 {
      %c0_25 = arith.constant 0 : index
      %c0_26 = arith.constant 0 : index
      %41 = vector.load %arg10[%c0_25, %c0_26] : memref<16x32xf32, #tpu.memory_space<vmem>>, vector<16x32xf32>
      %c0_27 = arith.constant 0 : index
      %c0_28 = arith.constant 0 : index
      %42 = vector.load %arg8[%c0_27, %c0_28] : memref<1x32xf32, #tpu.memory_space<vmem>>, vector<1x32xf32>
      %43 = vector.broadcast %42 : vector<1x32xf32> to vector<16x32xf32>
      %44 = arith.addf %41, %43 : vector<16x32xf32>
      %45 = arith.addf %44, %0 : vector<16x32xf32>
      %c0_29 = arith.constant 0 : index
      %c0_30 = arith.constant 0 : index
      %46 = vector.load %arg9[%c0_29, %c0_30] : memref<16x32xf32, #tpu.memory_space<vmem>>, vector<16x32xf32>
      tpu.vector_store %arg9[%c0_29, %c0_30], %45 {strides = array<i32>} : memref<16x32xf32, #tpu.memory_space<vmem>>, vector<16x32xf32>,
    } else {
    }
    return
  }
  func.func @transform_0(%arg0: i32, %arg1: i32) -> (i32, i32) {
    %c0_i32 = arith.constant 0 : i32
    %c0_i32_0 = arith.constant 0 : i32
    return %arg0, %c0_i32 : i32, i32
  }
  func.func @transform_1(%arg0: i32, %arg1: i32) -> (i32, i32) {
    %c0_i32 = arith.constant 0 : i32
    %c0_i32_0 = arith.constant 0 : i32
    %c0_i32_1 = arith.constant 0 : i32
    return %c0_i32, %c0_i32_0 : i32, i32
  }
  func.func @transform_2(%arg0: i32, %arg1: i32) -> (i32, i32) {
    %c0_i32 = arith.constant 0 : i32
    %c0_i32_0 = arith.constant 0 : i32
    %c0_i32_1 = arith.constant 0 : i32
    return %c0_i32, %c0_i32_0 : i32, i32
  }
  func.func @transform_3(%arg0: i32, %arg1: i32) -> (i32, i32) {
    %c0_i32 = arith.constant 0 : i32
    %c0_i32_0 = arith.constant 0 : i32
    return %c0_i32, %arg1 : i32, i32
  }
  func.func @transform_4(%arg0: i32, %arg1: i32) -> (i32, i32) {
    %c0_i32 = arith.constant 0 : i32
    %c0_i32_0 = arith.constant 0 : i32
    return %c0_i32, %arg1 : i32, i32
  }
  func.func @transform_5(%arg0: i32, %arg1: i32) -> (i32, i32) {
    %c0_i32 = arith.constant 0 : i32
    %c0_i32_0 = arith.constant 0 : i32
    return %arg1, %c0_i32 : i32, i32
  }
  func.func @transform_6(%arg0: i32, %arg1: i32) -> (i32, i32) {
    %c0_i32 = arith.constant 0 : i32
    %c0_i32_0 = arith.constant 0 : i32
    %c0_i32_1 = arith.constant 0 : i32
    return %c0_i32, %c0_i32_0 : i32, i32
  }
  func.func @transform_7(%arg0: i32, %arg1: i32) -> (i32, i32) {
    %c0_i32 = arith.constant 0 : i32
    %c0_i32_0 = arith.constant 0 : i32
    return %arg0, %c0_i32 : i32, i32
  }
}

module attributes {stable_mosaic.version = 11 : i64} {
  func.func @_cross_attn_kernel(%arg0: i32, %arg1: i32, %arg2: memref<1x8x32xf32, #tpu.memory_space<vmem>>, %arg3: memref<1x8x64xf32, #tpu.memory_space<vmem>>, %arg4: memref<1x1x8xi8, #tpu.memory_space<vmem>>, %arg5: memref<32x32xf32, #tpu.memory_space<vmem>>, %arg6: memref<1x32xf32, #tpu.memory_space<vmem>>, %arg7: memref<1x8x32xf32, #tpu.memory_space<vmem>>, %arg8: memref<1x8x32xf32, #tpu.memory_space<vmem>>) attributes {dimension_semantics = [#tpu.dimension_semantics<parallel>, #tpu.dimension_semantics<parallel>], iteration_bounds = array<i64: 2, 1>, scalar_prefetch = 0 : i64, scratch_operands = 0 : i64, tpu.core_type = #tpu.core_type<tc>, window_params = [{transform_indices = @transform_0, window_bounds = array<i64: 1, 8, 32>}, {transform_indices = @transform_1, window_bounds = array<i64: 1, 8, 64>}, {transform_indices = @transform_2, window_bounds = array<i64: 1, 1, 8>}, {pipeline_mode = #tpu.pipeline_mode<synchronous>, transform_indices = @transform_3, window_bounds = array<i64: 32, 32>}, {pipeline_mode = #tpu.pipeline_mode<synchronous>, transform_indices = @transform_4, window_bounds = array<i64: 1, 32>}, {transform_indices = @transform_5, window_bounds = array<i64: 1, 8, 32>}, {transform_indices = @transform_6, window_bounds = array<i64: 1, 8, 32>}]} {
    %c0 = arith.constant 0 : index
    %c0_0 = arith.constant 0 : index
    %c0_1 = arith.constant 0 : index
    %0 = vector.load %arg2[%c0, %c0_0, %c0_1] : memref<1x8x32xf32, #tpu.memory_space<vmem>>, vector<1x8x32xf32>
    %1 = vector.shape_cast %0 : vector<1x8x32xf32> to vector<8x32xf32>
    %cst = arith.constant 0.353553385 : f32
    %2 = vector.broadcast %cst : f32 to vector<8x32xf32>
    %3 = arith.mulf %1, %2 : vector<8x32xf32>
    %c0_2 = arith.constant 0 : index
    %c0_3 = arith.constant 0 : index
    %c0_4 = arith.constant 0 : index
    %4 = vector.load %arg3[%c0_2, %c0_3, %c0_4] : memref<1x8x64xf32, #tpu.memory_space<vmem>>, vector<1x8x64xf32>
    %5 = vector.shape_cast %4 : vector<1x8x64xf32> to vector<8x64xf32>
    %6 = vector.extract_strided_slice %5 {offsets = [0, 0], sizes = [8, 32], strides = [1, 1]} : vector<8x64xf32> to vector<8x32xf32>
    %7 = vector.extract_strided_slice %5 {offsets = [0, 32], sizes = [8, 32], strides = [1, 1]} : vector<8x64xf32> to vector<8x32xf32>
    %c0_5 = arith.constant 0 : index
    %c0_6 = arith.constant 0 : index
    %c0_7 = arith.constant 0 : index
    %8 = vector.load %arg4[%c0_5, %c0_6, %c0_7] : memref<1x1x8xi8, #tpu.memory_space<vmem>>, vector<1x1x8xi8>
    %9 = vector.shape_cast %8 : vector<1x1x8xi8> to vector<1x8xi8>
    %10 = arith.sitofp %9 : vector<1x8xi8> to vector<1x8xf32>
    %cst_8 = arith.constant 0.000000e+00 : f32
    %11 = vector.broadcast %cst_8 : f32 to vector<1x8xf32>
    %12 = arith.cmpf oeq, %10, %11 : vector<1x8xf32>
    %cst_9 = arith.constant -1.000000e+30 : f32
    %cst_10 = arith.constant 0.000000e+00 : f32
    %13 = vector.broadcast %cst_9 : f32 to vector<1x8xf32>
    %14 = vector.broadcast %cst_10 : f32 to vector<1x8xf32>
    %15 = arith.select %12, %13, %14 : vector<1x8xi1>, vector<1x8xf32>
    %cst_11 = arith.constant 0.000000e+00 : f32
    %16 = vector.broadcast %cst_11 : f32 to vector<8x32xf32>
    %17 = vector.extract_strided_slice %3 {offsets = [0, 0], sizes = [8, 8], strides = [1, 1]} : vector<8x32xf32> to vector<8x8xf32>
    %18 = vector.extract_strided_slice %6 {offsets = [0, 0], sizes = [8, 8], strides = [1, 1]} : vector<8x32xf32> to vector<8x8xf32>
    %19 = vector.extract_strided_slice %7 {offsets = [0, 0], sizes = [8, 8], strides = [1, 1]} : vector<8x32xf32> to vector<8x8xf32>
    %cst_12 = arith.constant dense<0.000000e+00> : vector<8x8xf32>
    %20 = tpu.matmul %17, %18, %cst_12 {dimension_numbers = #tpu.dot_dimension_numbers<[1], [1], [0], [0], [0, 0, 1, 0], [], []>} : vector<8x8xf32>, vector<8x8xf32>, vector<8x8xf32> -> vector<8x8xf32>
    %21 = vector.broadcast %15 : vector<1x8xf32> to vector<8x8xf32>
    %22 = arith.addf %20, %21 : vector<8x8xf32>
    %cst_13 = arith.constant dense<0xFF800000> : vector<8xf32>
    %23 = vector.multi_reduction <maximumf>, %22, %cst_13 [1] : vector<8x8xf32> to vector<8xf32>
    %24 = vector.shape_cast %23 : vector<8xf32> to vector<8x1xf32>
    %25 = vector.broadcast %24 : vector<8x1xf32> to vector<8x8xf32>
    %26 = arith.subf %22, %25 : vector<8x8xf32>
    %27 = math.exp %26 : vector<8x8xf32>
    %cst_14 = arith.constant dense<0.000000e+00> : vector<8xf32>
    %28 = vector.multi_reduction <add>, %27, %cst_14 [1] : vector<8x8xf32> to vector<8xf32>
    %29 = vector.shape_cast %28 : vector<8xf32> to vector<8x1xf32>
    %30 = tpu.reciprocal %29 {approx = true} : vector<8x1xf32> -> vector<8x1xf32>
    %cst_15 = arith.constant dense<0.000000e+00> : vector<8x8xf32>
    %31 = tpu.matmul %27, %19, %cst_15 {dimension_numbers = #tpu.dot_dimension_numbers<[1], [0], [0], [1], [0, 0, 1, 1], [], []>} : vector<8x8xf32>, vector<8x8xf32>, vector<8x8xf32> -> vector<8x8xf32>
    %32 = vector.broadcast %30 : vector<8x1xf32> to vector<8x8xf32>
    %33 = arith.mulf %31, %32 : vector<8x8xf32>
    %c0_16 = arith.constant 0 : index
    %c0_17 = arith.constant 0 : index
    %34 = vector.load %arg5[%c0_16, %c0_17] : memref<32x32xf32, #tpu.memory_space<vmem>>, vector<8x32xf32>
    %cst_18 = arith.constant dense<0.000000e+00> : vector<8x32xf32>
    %35 = tpu.matmul %33, %34, %cst_18 {dimension_numbers = #tpu.dot_dimension_numbers<[1], [0], [0], [1], [0, 0, 1, 1], [], []>} : vector<8x8xf32>, vector<8x32xf32>, vector<8x32xf32> -> vector<8x32xf32>
    %36 = arith.addf %16, %35 : vector<8x32xf32>
    %37 = vector.extract_strided_slice %3 {offsets = [0, 8], sizes = [8, 8], strides = [1, 1]} : vector<8x32xf32> to vector<8x8xf32>
    %38 = vector.extract_strided_slice %6 {offsets = [0, 8], sizes = [8, 8], strides = [1, 1]} : vector<8x32xf32> to vector<8x8xf32>
    %39 = vector.extract_strided_slice %7 {offsets = [0, 8], sizes = [8, 8], strides = [1, 1]} : vector<8x32xf32> to vector<8x8xf32>
    %cst_19 = arith.constant dense<0.000000e+00> : vector<8x8xf32>
    %40 = tpu.matmul %37, %38, %cst_19 {dimension_numbers = #tpu.dot_dimension_numbers<[1], [1], [0], [0], [0, 0, 1, 0], [], []>} : vector<8x8xf32>, vector<8x8xf32>, vector<8x8xf32> -> vector<8x8xf32>
    %41 = vector.broadcast %15 : vector<1x8xf32> to vector<8x8xf32>
    %42 = arith.addf %40, %41 : vector<8x8xf32>
    %cst_20 = arith.constant dense<0xFF800000> : vector<8xf32>
    %43 = vector.multi_reduction <maximumf>, %42, %cst_20 [1] : vector<8x8xf32> to vector<8xf32>
    %44 = vector.shape_cast %43 : vector<8xf32> to vector<8x1xf32>
    %45 = vector.broadcast %44 : vector<8x1xf32> to vector<8x8xf32>
    %46 = arith.subf %42, %45 : vector<8x8xf32>
    %47 = math.exp %46 : vector<8x8xf32>
    %cst_21 = arith.constant dense<0.000000e+00> : vector<8xf32>
    %48 = vector.multi_reduction <add>, %47, %cst_21 [1] : vector<8x8xf32> to vector<8xf32>
    %49 = vector.shape_cast %48 : vector<8xf32> to vector<8x1xf32>
    %50 = tpu.reciprocal %49 {approx = true} : vector<8x1xf32> -> vector<8x1xf32>
    %cst_22 = arith.constant dense<0.000000e+00> : vector<8x8xf32>
    %51 = tpu.matmul %47, %39, %cst_22 {dimension_numbers = #tpu.dot_dimension_numbers<[1], [0], [0], [1], [0, 0, 1, 1], [], []>} : vector<8x8xf32>, vector<8x8xf32>, vector<8x8xf32> -> vector<8x8xf32>
    %52 = vector.broadcast %50 : vector<8x1xf32> to vector<8x8xf32>
    %53 = arith.mulf %51, %52 : vector<8x8xf32>
    %c8 = arith.constant 8 : index
    %c0_23 = arith.constant 0 : index
    %54 = vector.load %arg5[%c8, %c0_23] : memref<32x32xf32, #tpu.memory_space<vmem>>, vector<8x32xf32>
    %cst_24 = arith.constant dense<0.000000e+00> : vector<8x32xf32>
    %55 = tpu.matmul %53, %54, %cst_24 {dimension_numbers = #tpu.dot_dimension_numbers<[1], [0], [0], [1], [0, 0, 1, 1], [], []>} : vector<8x8xf32>, vector<8x32xf32>, vector<8x32xf32> -> vector<8x32xf32>
    %56 = arith.addf %36, %55 : vector<8x32xf32>
    %57 = vector.extract_strided_slice %3 {offsets = [0, 16], sizes = [8, 8], strides = [1, 1]} : vector<8x32xf32> to vector<8x8xf32>
    %58 = vector.extract_strided_slice %6 {offsets = [0, 16], sizes = [8, 8], strides = [1, 1]} : vector<8x32xf32> to vector<8x8xf32>
    %59 = vector.extract_strided_slice %7 {offsets = [0, 16], sizes = [8, 8], strides = [1, 1]} : vector<8x32xf32> to vector<8x8xf32>
    %cst_25 = arith.constant dense<0.000000e+00> : vector<8x8xf32>
    %60 = tpu.matmul %57, %58, %cst_25 {dimension_numbers = #tpu.dot_dimension_numbers<[1], [1], [0], [0], [0, 0, 1, 0], [], []>} : vector<8x8xf32>, vector<8x8xf32>, vector<8x8xf32> -> vector<8x8xf32>
    %61 = vector.broadcast %15 : vector<1x8xf32> to vector<8x8xf32>
    %62 = arith.addf %60, %61 : vector<8x8xf32>
    %cst_26 = arith.constant dense<0xFF800000> : vector<8xf32>
    %63 = vector.multi_reduction <maximumf>, %62, %cst_26 [1] : vector<8x8xf32> to vector<8xf32>
    %64 = vector.shape_cast %63 : vector<8xf32> to vector<8x1xf32>
    %65 = vector.broadcast %64 : vector<8x1xf32> to vector<8x8xf32>
    %66 = arith.subf %62, %65 : vector<8x8xf32>
    %67 = math.exp %66 : vector<8x8xf32>
    %cst_27 = arith.constant dense<0.000000e+00> : vector<8xf32>
    %68 = vector.multi_reduction <add>, %67, %cst_27 [1] : vector<8x8xf32> to vector<8xf32>
    %69 = vector.shape_cast %68 : vector<8xf32> to vector<8x1xf32>
    %70 = tpu.reciprocal %69 {approx = true} : vector<8x1xf32> -> vector<8x1xf32>
    %cst_28 = arith.constant dense<0.000000e+00> : vector<8x8xf32>
    %71 = tpu.matmul %67, %59, %cst_28 {dimension_numbers = #tpu.dot_dimension_numbers<[1], [0], [0], [1], [0, 0, 1, 1], [], []>} : vector<8x8xf32>, vector<8x8xf32>, vector<8x8xf32> -> vector<8x8xf32>
    %72 = vector.broadcast %70 : vector<8x1xf32> to vector<8x8xf32>
    %73 = arith.mulf %71, %72 : vector<8x8xf32>
    %c16 = arith.constant 16 : index
    %c0_29 = arith.constant 0 : index
    %74 = vector.load %arg5[%c16, %c0_29] : memref<32x32xf32, #tpu.memory_space<vmem>>, vector<8x32xf32>
    %cst_30 = arith.constant dense<0.000000e+00> : vector<8x32xf32>
    %75 = tpu.matmul %73, %74, %cst_30 {dimension_numbers = #tpu.dot_dimension_numbers<[1], [0], [0], [1], [0, 0, 1, 1], [], []>} : vector<8x8xf32>, vector<8x32xf32>, vector<8x32xf32> -> vector<8x32xf32>
    %76 = arith.addf %56, %75 : vector<8x32xf32>
    %77 = vector.extract_strided_slice %3 {offsets = [0, 24], sizes = [8, 8], strides = [1, 1]} : vector<8x32xf32> to vector<8x8xf32>
    %78 = vector.extract_strided_slice %6 {offsets = [0, 24], sizes = [8, 8], strides = [1, 1]} : vector<8x32xf32> to vector<8x8xf32>
    %79 = vector.extract_strided_slice %7 {offsets = [0, 24], sizes = [8, 8], strides = [1, 1]} : vector<8x32xf32> to vector<8x8xf32>
    %cst_31 = arith.constant dense<0.000000e+00> : vector<8x8xf32>
    %80 = tpu.matmul %77, %78, %cst_31 {dimension_numbers = #tpu.dot_dimension_numbers<[1], [1], [0], [0], [0, 0, 1, 0], [], []>} : vector<8x8xf32>, vector<8x8xf32>, vector<8x8xf32> -> vector<8x8xf32>
    %81 = vector.broadcast %15 : vector<1x8xf32> to vector<8x8xf32>
    %82 = arith.addf %80, %81 : vector<8x8xf32>
    %cst_32 = arith.constant dense<0xFF800000> : vector<8xf32>
    %83 = vector.multi_reduction <maximumf>, %82, %cst_32 [1] : vector<8x8xf32> to vector<8xf32>
    %84 = vector.shape_cast %83 : vector<8xf32> to vector<8x1xf32>
    %85 = vector.broadcast %84 : vector<8x1xf32> to vector<8x8xf32>
    %86 = arith.subf %82, %85 : vector<8x8xf32>
    %87 = math.exp %86 : vector<8x8xf32>
    %cst_33 = arith.constant dense<0.000000e+00> : vector<8xf32>
    %88 = vector.multi_reduction <add>, %87, %cst_33 [1] : vector<8x8xf32> to vector<8xf32>
    %89 = vector.shape_cast %88 : vector<8xf32> to vector<8x1xf32>
    %90 = tpu.reciprocal %89 {approx = true} : vector<8x1xf32> -> vector<8x1xf32>
    %cst_34 = arith.constant dense<0.000000e+00> : vector<8x8xf32>
    %91 = tpu.matmul %87, %79, %cst_34 {dimension_numbers = #tpu.dot_dimension_numbers<[1], [0], [0], [1], [0, 0, 1, 1], [], []>} : vector<8x8xf32>, vector<8x8xf32>, vector<8x8xf32> -> vector<8x8xf32>
    %92 = vector.broadcast %90 : vector<8x1xf32> to vector<8x8xf32>
    %93 = arith.mulf %91, %92 : vector<8x8xf32>
    %c24 = arith.constant 24 : index
    %c0_35 = arith.constant 0 : index
    %94 = vector.load %arg5[%c24, %c0_35] : memref<32x32xf32, #tpu.memory_space<vmem>>, vector<8x32xf32>
    %cst_36 = arith.constant dense<0.000000e+00> : vector<8x32xf32>
    %95 = tpu.matmul %93, %94, %cst_36 {dimension_numbers = #tpu.dot_dimension_numbers<[1], [0], [0], [1], [0, 0, 1, 1], [], []>} : vector<8x8xf32>, vector<8x32xf32>, vector<8x32xf32> -> vector<8x32xf32>
    %96 = arith.addf %76, %95 : vector<8x32xf32>
    %c0_37 = arith.constant 0 : index
    %c0_38 = arith.constant 0 : index
    %97 = vector.load %arg6[%c0_37, %c0_38] : memref<1x32xf32, #tpu.memory_space<vmem>>, vector<1x32xf32>
    %98 = vector.broadcast %97 : vector<1x32xf32> to vector<8x32xf32>
    %99 = arith.addf %96, %98 : vector<8x32xf32>
    %c0_39 = arith.constant 0 : index
    %c0_40 = arith.constant 0 : index
    %c0_41 = arith.constant 0 : index
    %100 = vector.load %arg7[%c0_39, %c0_40, %c0_41] : memref<1x8x32xf32, #tpu.memory_space<vmem>>, vector<1x8x32xf32>
    %101 = vector.shape_cast %100 : vector<1x8x32xf32> to vector<8x32xf32>
    %102 = arith.addf %99, %101 : vector<8x32xf32>
    %c0_42 = arith.constant 0 : index
    %c0_43 = arith.constant 0 : index
    %c0_44 = arith.constant 0 : index
    %103 = vector.load %arg8[%c0_42, %c0_43, %c0_44] : memref<1x8x32xf32, #tpu.memory_space<vmem>>, vector<1x8x32xf32>
    %104 = vector.shape_cast %103 : vector<1x8x32xf32> to vector<8x32xf32>
    %105 = vector.shape_cast %102 : vector<8x32xf32> to vector<1x8x32xf32>
    tpu.vector_store %arg8[%c0_42, %c0_43, %c0_44], %105 {strides = array<i32>} : memref<1x8x32xf32, #tpu.memory_space<vmem>>, vector<1x8x32xf32>,
    return
  }
  func.func @transform_0(%arg0: i32, %arg1: i32) -> (i32, i32, i32) {
    %c0_i32 = arith.constant 0 : i32
    %c0_i32_0 = arith.constant 0 : i32
    return %arg0, %arg1, %c0_i32 : i32, i32, i32
  }
  func.func @transform_1(%arg0: i32, %arg1: i32) -> (i32, i32, i32) {
    %c0_i32 = arith.constant 0 : i32
    %c0_i32_0 = arith.constant 0 : i32
    %c0_i32_1 = arith.constant 0 : i32
    return %arg0, %c0_i32, %c0_i32_0 : i32, i32, i32
  }
  func.func @transform_2(%arg0: i32, %arg1: i32) -> (i32, i32, i32) {
    %c0_i32 = arith.constant 0 : i32
    %c0_i32_0 = arith.constant 0 : i32
    %c0_i32_1 = arith.constant 0 : i32
    return %arg0, %c0_i32, %c0_i32_0 : i32, i32, i32
  }
  func.func @transform_3(%arg0: i32, %arg1: i32) -> (i32, i32) {
    %c0_i32 = arith.constant 0 : i32
    %c0_i32_0 = arith.constant 0 : i32
    %c0_i32_1 = arith.constant 0 : i32
    return %c0_i32, %c0_i32_0 : i32, i32
  }
  func.func @transform_4(%arg0: i32, %arg1: i32) -> (i32, i32) {
    %c0_i32 = arith.constant 0 : i32
    %c0_i32_0 = arith.constant 0 : i32
    %c0_i32_1 = arith.constant 0 : i32
    return %c0_i32, %c0_i32_0 : i32, i32
  }
  func.func @transform_5(%arg0: i32, %arg1: i32) -> (i32, i32, i32) {
    %c0_i32 = arith.constant 0 : i32
    %c0_i32_0 = arith.constant 0 : i32
    return %arg0, %arg1, %c0_i32 : i32, i32, i32
  }
  func.func @transform_6(%arg0: i32, %arg1: i32) -> (i32, i32, i32) {
    %c0_i32 = arith.constant 0 : i32
    %c0_i32_0 = arith.constant 0 : i32
    return %arg0, %arg1, %c0_i32 : i32, i32, i32
  }
}

module attributes {stable_mosaic.version = 11 : i64} {
  func.func @_ffn_kernel(%arg0: i32, %arg1: i32, %arg2: memref<16x32xf32, #tpu.memory_space<vmem>>, %arg3: memref<1x32xf32, #tpu.memory_space<vmem>>, %arg4: memref<1x32xf32, #tpu.memory_space<vmem>>, %arg5: memref<32x64xf32, #tpu.memory_space<vmem>>, %arg6: memref<1x64xf32, #tpu.memory_space<vmem>>, %arg7: memref<64x32xf32, #tpu.memory_space<vmem>>, %arg8: memref<1x32xf32, #tpu.memory_space<vmem>>, %arg9: memref<16x32xf32, #tpu.memory_space<vmem>>, %arg10: memref<16x32xf32, #tpu.memory_space<vmem>>) attributes {dimension_semantics = [#tpu.dimension_semantics<parallel>, #tpu.dimension_semantics<arbitrary>], iteration_bounds = array<i64: 1, 1>, scalar_prefetch = 0 : i64, scratch_operands = 1 : i64, tpu.core_type = #tpu.core_type<tc>, window_params = [{transform_indices = @transform_0, window_bounds = array<i64: 16, 32>}, {pipeline_mode = #tpu.pipeline_mode<synchronous>, transform_indices = @transform_1, window_bounds = array<i64: 1, 32>}, {pipeline_mode = #tpu.pipeline_mode<synchronous>, transform_indices = @transform_2, window_bounds = array<i64: 1, 32>}, {transform_indices = @transform_3, window_bounds = array<i64: 32, 64>}, {transform_indices = @transform_4, window_bounds = array<i64: 1, 64>}, {transform_indices = @transform_5, window_bounds = array<i64: 64, 32>}, {pipeline_mode = #tpu.pipeline_mode<synchronous>, transform_indices = @transform_6, window_bounds = array<i64: 1, 32>}, {transform_indices = @transform_7, window_bounds = array<i64: 16, 32>}]} {
    %c0 = arith.constant 0 : index
    %c0_0 = arith.constant 0 : index
    %0 = vector.load %arg2[%c0, %c0_0] : memref<16x32xf32, #tpu.memory_space<vmem>>, vector<16x32xf32>
    %cst = arith.constant dense<0.000000e+00> : vector<16xf32>
    %1 = vector.multi_reduction <add>, %0, %cst [1] : vector<16x32xf32> to vector<16xf32>
    %2 = vector.shape_cast %1 : vector<16xf32> to vector<16x1xf32>
    %cst_1 = arith.constant 3.200000e+01 : f32
    %3 = vector.broadcast %cst_1 : f32 to vector<16x1xf32>
    %4 = arith.divf %2, %3 : vector<16x1xf32>
    %5 = vector.broadcast %4 : vector<16x1xf32> to vector<16x32xf32>
    %6 = arith.subf %0, %5 : vector<16x32xf32>
    %7 = arith.mulf %6, %6 : vector<16x32xf32>
    %cst_2 = arith.constant dense<0.000000e+00> : vector<16xf32>
    %8 = vector.multi_reduction <add>, %7, %cst_2 [1] : vector<16x32xf32> to vector<16xf32>
    %9 = vector.shape_cast %8 : vector<16xf32> to vector<16x1xf32>
    %cst_3 = arith.constant 3.200000e+01 : f32
    %10 = vector.broadcast %cst_3 : f32 to vector<16x1xf32>
    %11 = arith.divf %9, %10 : vector<16x1xf32>
    %cst_4 = arith.constant 9.99999974E-6 : f32
    %12 = vector.broadcast %cst_4 : f32 to vector<16x1xf32>
    %13 = arith.addf %11, %12 : vector<16x1xf32>
    %14 = math.rsqrt %13 : vector<16x1xf32>
    %15 = vector.broadcast %14 : vector<16x1xf32> to vector<16x32xf32>
    %16 = arith.mulf %6, %15 : vector<16x32xf32>
    %c0_5 = arith.constant 0 : index
    %c0_6 = arith.constant 0 : index
    %17 = vector.load %arg3[%c0_5, %c0_6] : memref<1x32xf32, #tpu.memory_space<vmem>>, vector<1x32xf32>
    %18 = vector.broadcast %17 : vector<1x32xf32> to vector<16x32xf32>
    %19 = arith.mulf %16, %18 : vector<16x32xf32>
    %c0_7 = arith.constant 0 : index
    %c0_8 = arith.constant 0 : index
    %20 = vector.load %arg4[%c0_7, %c0_8] : memref<1x32xf32, #tpu.memory_space<vmem>>, vector<1x32xf32>
    %21 = vector.broadcast %20 : vector<1x32xf32> to vector<16x32xf32>
    %22 = arith.addf %19, %21 : vector<16x32xf32>
    %c0_9 = arith.constant 0 : index
    %c0_10 = arith.constant 0 : index
    %23 = vector.load %arg5[%c0_9, %c0_10] : memref<32x64xf32, #tpu.memory_space<vmem>>, vector<32x64xf32>
    %cst_11 = arith.constant dense<0.000000e+00> : vector<16x64xf32>
    %24 = tpu.matmul %22, %23, %cst_11 {dimension_numbers = #tpu.dot_dimension_numbers<[1], [0], [0], [1], [0, 0, 1, 1], [], []>} : vector<16x32xf32>, vector<32x64xf32>, vector<16x64xf32> -> vector<16x64xf32>
    %c0_12 = arith.constant 0 : index
    %c0_13 = arith.constant 0 : index
    %25 = vector.load %arg6[%c0_12, %c0_13] : memref<1x64xf32, #tpu.memory_space<vmem>>, vector<1x64xf32>
    %26 = vector.broadcast %25 : vector<1x64xf32> to vector<16x64xf32>
    %27 = arith.addf %24, %26 : vector<16x64xf32>
    %cst_14 = arith.constant 0.000000e+00 : f32
    %28 = vector.broadcast %cst_14 : f32 to vector<16x64xf32>
    %29 = arith.maximumf %27, %28 : vector<16x64xf32>
    %c0_15 = arith.constant 0 : index
    %c0_16 = arith.constant 0 : index
    %30 = vector.load %arg7[%c0_15, %c0_16] : memref<64x32xf32, #tpu.memory_space<vmem>>, vector<64x32xf32>
    %cst_17 = arith.constant dense<0.000000e+00> : vector<16x32xf32>
    %31 = tpu.matmul %29, %30, %cst_17 {dimension_numbers = #tpu.dot_dimension_numbers<[1], [0], [0], [1], [0, 0, 1, 1], [], []>} : vector<16x64xf32>, vector<64x32xf32>, vector<16x32xf32> -> vector<16x32xf32>
    %c0_i32 = arith.constant 0 : i32
    %32 = arith.cmpi eq, %arg1, %c0_i32 : i32
    %33 = arith.extui %32 : i1 to i32
    %c0_i32_18 = arith.constant 0 : i32
    %34 = arith.cmpi ne, %33, %c0_i32_18 : i32
    scf.if %34 {
      %cst_25 = arith.constant 0.000000e+00 : f32
      %41 = vector.broadcast %cst_25 : f32 to vector<16x32xf32>
      %c0_26 = arith.constant 0 : index
      %c0_27 = arith.constant 0 : index
      %42 = vector.load %arg10[%c0_26, %c0_27] : memref<16x32xf32, #tpu.memory_space<vmem>>, vector<16x32xf32>
      tpu.vector_store %arg10[%c0_26, %c0_27], %41 {strides = array<i32>} : memref<16x32xf32, #tpu.memory_space<vmem>>, vector<16x32xf32>,
    } else {
    }
    %c0_19 = arith.constant 0 : index
    %c0_20 = arith.constant 0 : index
    %35 = vector.load %arg10[%c0_19, %c0_20] : memref<16x32xf32, #tpu.memory_space<vmem>>, vector<16x32xf32>
    %36 = arith.addf %35, %31 : vector<16x32xf32>
    %c0_21 = arith.constant 0 : index
    %c0_22 = arith.constant 0 : index
    %37 = vector.load %arg10[%c0_21, %c0_22] : memref<16x32xf32, #tpu.memory_space<vmem>>, vector<16x32xf32>
    tpu.vector_store %arg10[%c0_21, %c0_22], %36 {strides = array<i32>} : memref<16x32xf32, #tpu.memory_space<vmem>>, vector<16x32xf32>,
    %c0_i32_23 = arith.constant 0 : i32
    %38 = arith.cmpi eq, %arg1, %c0_i32_23 : i32
    %39 = arith.extui %38 : i1 to i32
    %c0_i32_24 = arith.constant 0 : i32
    %40 = arith.cmpi ne, %39, %c0_i32_24 : i32
    scf.if %40 {
      %c0_25 = arith.constant 0 : index
      %c0_26 = arith.constant 0 : index
      %41 = vector.load %arg10[%c0_25, %c0_26] : memref<16x32xf32, #tpu.memory_space<vmem>>, vector<16x32xf32>
      %c0_27 = arith.constant 0 : index
      %c0_28 = arith.constant 0 : index
      %42 = vector.load %arg8[%c0_27, %c0_28] : memref<1x32xf32, #tpu.memory_space<vmem>>, vector<1x32xf32>
      %43 = vector.broadcast %42 : vector<1x32xf32> to vector<16x32xf32>
      %44 = arith.addf %41, %43 : vector<16x32xf32>
      %45 = arith.addf %44, %0 : vector<16x32xf32>
      %c0_29 = arith.constant 0 : index
      %c0_30 = arith.constant 0 : index
      %46 = vector.load %arg9[%c0_29, %c0_30] : memref<16x32xf32, #tpu.memory_space<vmem>>, vector<16x32xf32>
      tpu.vector_store %arg9[%c0_29, %c0_30], %45 {strides = array<i32>} : memref<16x32xf32, #tpu.memory_space<vmem>>, vector<16x32xf32>,
    } else {
    }
    return
  }
  func.func @transform_0(%arg0: i32, %arg1: i32) -> (i32, i32) {
    %c0_i32 = arith.constant 0 : i32
    %c0_i32_0 = arith.constant 0 : i32
    return %arg0, %c0_i32 : i32, i32
  }
  func.func @transform_1(%arg0: i32, %arg1: i32) -> (i32, i32) {
    %c0_i32 = arith.constant 0 : i32
    %c0_i32_0 = arith.constant 0 : i32
    %c0_i32_1 = arith.constant 0 : i32
    return %c0_i32, %c0_i32_0 : i32, i32
  }
  func.func @transform_2(%arg0: i32, %arg1: i32) -> (i32, i32) {
    %c0_i32 = arith.constant 0 : i32
    %c0_i32_0 = arith.constant 0 : i32
    %c0_i32_1 = arith.constant 0 : i32
    return %c0_i32, %c0_i32_0 : i32, i32
  }
  func.func @transform_3(%arg0: i32, %arg1: i32) -> (i32, i32) {
    %c0_i32 = arith.constant 0 : i32
    %c0_i32_0 = arith.constant 0 : i32
    return %c0_i32, %arg1 : i32, i32
  }
  func.func @transform_4(%arg0: i32, %arg1: i32) -> (i32, i32) {
    %c0_i32 = arith.constant 0 : i32
    %c0_i32_0 = arith.constant 0 : i32
    return %c0_i32, %arg1 : i32, i32
  }
  func.func @transform_5(%arg0: i32, %arg1: i32) -> (i32, i32) {
    %c0_i32 = arith.constant 0 : i32
    %c0_i32_0 = arith.constant 0 : i32
    return %arg1, %c0_i32 : i32, i32
  }
  func.func @transform_6(%arg0: i32, %arg1: i32) -> (i32, i32) {
    %c0_i32 = arith.constant 0 : i32
    %c0_i32_0 = arith.constant 0 : i32
    %c0_i32_1 = arith.constant 0 : i32
    return %c0_i32, %c0_i32_0 : i32, i32
  }
  func.func @transform_7(%arg0: i32, %arg1: i32) -> (i32, i32) {
    %c0_i32 = arith.constant 0 : i32
    %c0_i32_0 = arith.constant 0 : i32
    return %arg0, %c0_i32 : i32, i32
  }
}

</mosaic_0001>

<llo_original>
// kernel: decoder_forward.15
$region0: #{decoder_forward.15}
  #allocation0 [shape = 'u32[]', space=smem, size = 0x4, offset = 0x4, fixed_abs, tag = 'smem constant byte address 0x4 - core index']
  #allocation1 [shape = 'u32[144,128]{1,0:T(1,128)}', space=vmem, size = 0x12000, scoped, tag = 'internal scratch']
  %s0 = inlined_call_operand.vmem [shape: f32[16,32], index: 0, kind: input, shape index: {}]
  %s1 = inlined_call_operand.vmem [shape: f32[32,64], index: 1, kind: input, shape index: {}]
  %s2 = inlined_call_operand.vmem [shape: f32[1,64], index: 2, kind: input, shape index: {}]
  %s3 = inlined_call_operand.vmem [shape: f32[16,64], index: 3, kind: output, shape index: {}]
  %s4 = sld [smem:[#allocation0]]
  $region22: #{decoder_forward.15} parent=0
    _
  %s6 = ssub.s32 1, %s4
  %s7 = scalar_select 0, %s6, %s4
  // Predicated region
  $region2: #{decoder_forward.15} parent=0 // pred_check
    _
  $region3: #{decoder_forward.15} parent=0 // pred_check_branch
    %9 = sbr.rel (0) target = $region5
  $region4: #{decoder_forward.15} parent=0 // pred_region
    _
  $region5: #{decoder_forward.15} parent=0 // pred_fallthru
    _
  // Predicated region
  $region6: #{decoder_forward.15} parent=0 // pred_check
    _
  $region7: #{decoder_forward.15} parent=0 // pred_check_branch
    %11 = sbr.rel (0) target = $region9
  $region8: #{decoder_forward.15} parent=0 // pred_region
    _
  $region9: #{decoder_forward.15} parent=0 // pred_fallthru
    _
  // Predicated region
  $region10: #{decoder_forward.15} parent=0 // pred_check
    _
  $region11: #{decoder_forward.15} parent=0 // pred_check_branch
    %13 = sbr.rel (0) target = $region13
  $region12: #{decoder_forward.15} parent=0 // pred_region
    _
  $region13: #{decoder_forward.15} parent=0 // pred_fallthru
    _
  %v14 = vld [vmem:[%s0] sm:$0xff]
  %v15 = vld [vmem:[%s0 + $0x8] sm:$0xff]
  %v16 = vld [vmem:[%s1] sm:$0xff]
  %v17 = vld [vmem:[%s1 + $0x8] sm:$0xff]
  %v18 = vld [vmem:[%s1 + $0x10] sm:$0xff]
  %v19 = vld [vmem:[%s1 + $0x18] sm:$0xff]
  %v20 = vld [vmem:[%s2] sm:$0x1]
  %v22 = vlaneseq
  %v23 = vshrl.u32 %v22, 7
  %v24 = vsub.s32 0, %v23
  %v25 = vrot.slane %v20, %v24
  %vm27 = vcmask 261120
  %v29 = vsel %vm27, %v14, 0
  %v32 = vsel %vm27, %v15, 0
  %34 = vmatprep.subr.mxu0 0.0
  %35 = vmatpush1.msra.mxu0 0.0
  %36 = vmatprep.subr.mxu0 0.0
  %37 = vmatpush1.msra.mxu0 0.0
  %38 = vmatprep.subr.mxu0 0.0
  %39 = vmatpush1.msra.mxu0 0.0
  %40 = vmatprep.subr.mxu0 0.0
  %41 = vmatpush1.msra.mxu0 0.0
  %42 = vmatprep.subr.mxu0 0.0
  %43 = vmatpush1.msra.mxu0 0.0
  %44 = vmatprep.subr.mxu0 0.0
  %45 = vmatpush1.msra.mxu0 0.0
  %46 = vmatprep.subr.mxu0 0.0
  %47 = vmatpush1.msra.mxu0 0.0
  %48 = vmatprep.subr.mxu0 0.0
  %49 = vmatpush1.msra.mxu0 0.0
  %50 = vmatprep.subr.mxu0 0.0
  %51 = vmatpush1.msra.mxu0 0.0
  %52 = vmatprep.subr.mxu0 0.0
  %53 = vmatpush1.msra.mxu0 0.0
  %54 = vmatprep.subr.mxu0 0.0
  %55 = vmatpush1.msra.mxu0 0.0
  %56 = vmatprep.subr.mxu0 0.0
  %57 = vmatpush1.msra.mxu0 0.0
  %58 = vmatprep.subr.mxu0 0.0
  %59 = vmatpush1.msra.mxu0 %v19
  %60 = vmatprep.subr.mxu0 0.0
  %61 = vmatpush1.msra.mxu0 %v18
  %62 = vmatprep.subr.mxu0 0.0
  %63 = vmatpush1.msra.mxu0 %v17
  %64 = vmatprep.subr.mxu0 0.0
  %65 = vmatpush1.msra.mxu0 %v16
  %66 = vmatprep.subr.mxu0 0.0
  %67 = vmatpush2.msra.mxu0 0.0
  %68 = vmatprep.subr.mxu0 0.0
  %69 = vmatpush2.msra.mxu0 0.0
  %70 = vmatprep.subr.mxu0 0.0
  %71 = vmatpush2.msra.mxu0 0.0
  %72 = vmatprep.subr.mxu0 0.0
  %73 = vmatpush2.msra.mxu0 0.0
  %74 = vmatprep.subr.mxu0 0.0
  %75 = vmatpush2.msra.mxu0 0.0
  %76 = vmatprep.subr.mxu0 0.0
  %77 = vmatpush2.msra.mxu0 0.0
  %78 = vmatprep.subr.mxu0 0.0
  %79 = vmatpush2.msra.mxu0 0.0
  %80 = vmatprep.subr.mxu0 0.0
  %81 = vmatpush2.msra.mxu0 0.0
  %82 = vmatprep.subr.mxu0 0.0
  %83 = vmatpush2.msra.mxu0 0.0
  %84 = vmatprep.subr.mxu0 0.0
  %85 = vmatpush2.msra.mxu0 0.0
  %86 = vmatprep.subr.mxu0 0.0
  %87 = vmatpush2.msra.mxu0 0.0
  %88 = vmatprep.subr.mxu0 0.0
  %89 = vmatpush2.msra.mxu0 0.0
  %90 = vmatprep.subr.mxu0 0.0
  %91 = vmatpush2.msra.mxu0 0.0
  %92 = vmatprep.subr.mxu0 0.0
  %93 = vmatpush2.msra.mxu0 0.0
  %94 = vmatprep.subr.mxu0 0.0
  %95 = vmatpush2.msra.mxu0 0.0
  %96 = vmatprep.subr.mxu0 0.0
  %97 = vmatpush2.msra.mxu0 0.0
  %98 = vmatprep.mubr.f32.mxu0 0.0
  %99 = vmatmul.mubr.f32.gmra.mxu0 %v29
  %v100 = vpop.f32.mrf.mxu0
  %v101 = vadd.f32 %v25, %v100
  %v102 = vpop.f32.mrf.mxu0
  %103 = vmatprep.mubr.f32.mxu0 0.0
  %104 = vmatmul.mubr.f32.gmra.mxu0 %v32
  %v105 = vpop.f32.mrf.mxu0
  %v106 = vadd.f32 %v25, %v105
  %v107 = vpop.f32.mrf.mxu0
  %108 = vdwg.mxu0
  %vm109 = vcmask 523264
  %110 = vst.msk [vmem:[%s3] sm:$0xff] %vm109, %v101
  %111 = vst.msk [vmem:[%s3 + $0x8] sm:$0xff] %vm109, %v106
  // Predicated region
  $region14: #{decoder_forward.15} parent=0 // pred_check
    _
  $region15: #{decoder_forward.15} parent=0 // pred_check_branch
    %113 = sbr.rel (0) target = $region17
  $region16: #{decoder_forward.15} parent=0 // pred_region
    _
  $region17: #{decoder_forward.15} parent=0 // pred_fallthru
    _
  // Predicated region
  $region18: #{decoder_forward.15} parent=0 // pred_check
    _
  $region19: #{decoder_forward.15} parent=0 // pred_check_branch
    %115 = sbr.rel (0) target = $region21
  $region20: #{decoder_forward.15} parent=0 // pred_region
    _
  $region21: #{decoder_forward.15} parent=0 // pred_fallthru
    _

// kernel: decoder_forward.14
$region0: #{decoder_forward.14}
  #allocation0 [shape = 'u32[]', space=smem, size = 0x4, offset = 0x4, fixed_abs, tag = 'smem constant byte address 0x4 - core index']
  #allocation1 [shape = 'u32[144,128]{1,0:T(1,128)}', space=vmem, size = 0x12000, scoped, tag = 'internal scratch']
  %s0 = inlined_call_operand.vmem [shape: f32[16,32], index: 0, kind: input, shape index: {}]
  %s1 = inlined_call_operand.vmem [shape: f32[1,32], index: 1, kind: input, shape index: {}]
  %s2 = inlined_call_operand.vmem [shape: f32[1,32], index: 2, kind: input, shape index: {}]
  %s3 = inlined_call_operand.vmem [shape: f32[32,32], index: 3, kind: input, shape index: {}]
  %s4 = inlined_call_operand.vmem [shape: f32[1,32], index: 4, kind: input, shape index: {}]
  %s5 = inlined_call_operand.vmem [shape: f32[16,32], index: 5, kind: output, shape index: {}]
  %s6 = sld [smem:[#allocation0]]
  $region30: #{decoder_forward.14} parent=0
    _
  %s8 = ssub.s32 1, %s6
  %s9 = scalar_select 0, %s8, %s6
  // Predicated region
  $region2: #{decoder_forward.14} parent=0 // pred_check
    _
  $region3: #{decoder_forward.14} parent=0 // pred_check_branch
    %11 = sbr.rel (0) target = $region5
  $region4: #{decoder_forward.14} parent=0 // pred_region
    _
  $region5: #{decoder_forward.14} parent=0 // pred_fallthru
    _
  // Predicated region
  $region6: #{decoder_forward.14} parent=0 // pred_check
    _
  $region7: #{decoder_forward.14} parent=0 // pred_check_branch
    %13 = sbr.rel (0) target = $region9
  $region8: #{decoder_forward.14} parent=0 // pred_region
    _
  $region9: #{decoder_forward.14} parent=0 // pred_fallthru
    _
  // Predicated region
  $region10: #{decoder_forward.14} parent=0 // pred_check
    _
  $region11: #{decoder_forward.14} parent=0 // pred_check_branch
    %15 = sbr.rel (0) target = $region13
  $region12: #{decoder_forward.14} parent=0 // pred_region
    _
  $region13: #{decoder_forward.14} parent=0 // pred_fallthru
    _
  // Predicated region
  $region14: #{decoder_forward.14} parent=0 // pred_check
    _
  $region15: #{decoder_forward.14} parent=0 // pred_check_branch
    %17 = sbr.rel (0) target = $region17
  $region16: #{decoder_forward.14} parent=0 // pred_region
    _
  $region17: #{decoder_forward.14} parent=0 // pred_fallthru
    _
  // Predicated region
  $region18: #{decoder_forward.14} parent=0 // pred_check
    _
  $region19: #{decoder_forward.14} parent=0 // pred_check_branch
    %19 = sbr.rel (0) target = $region21
  $region20: #{decoder_forward.14} parent=0 // pred_region
    _
  $region21: #{decoder_forward.14} parent=0 // pred_fallthru
    _
  %v20 = vld [vmem:[%s0] sm:$0xff]
  %v21 = vld [vmem:[%s0 + $0x8] sm:$0xff]
  %vm22 = vcmask 261120
  %v23 = vsel %vm22, %v20, 0.0
  %24 = vadd.xlane.f32.xlu0 %v23
  %v25 = vpop.xlane.xlu0 %24
  %v26 = vsel %vm22, %v21, 0.0
  %27 = vadd.xlane.f32.xlu0 %v26
  %v28 = vpop.xlane.xlu0 %27
  %v29 = vrcp.pop 32.0
  %v30 = vmul.f32 %v25, %v29
  %v31 = vmul.f32 %v28, %v29
  %v32 = vsub.f32 %v20, %v30
  %v33 = vsub.f32 %v21, %v31
  %v34 = vmul.f32 %v32, %v32
  %v35 = vmul.f32 %v33, %v33
  %v36 = vsel %vm22, %v34, 0.0
  %37 = vadd.xlane.f32.xlu0 %v36
  %v38 = vpop.xlane.xlu0 %37
  %v39 = vsel %vm22, %v35, 0.0
  %40 = vadd.xlane.f32.xlu0 %v39
  %v41 = vpop.xlane.xlu0 %40
  %v42 = vmul.f32 %v38, %v29
  %v43 = vmul.f32 %v41, %v29
  %v44 = vadd.f32 %v42, 1e-05
  %v45 = vadd.f32 %v43, 1e-05
  %v46 = vrsqrt.pop %v44
  %v47 = vrsqrt.pop %v45
  %v48 = vmul.f32 %v32, %v46
  %v49 = vmul.f32 %v33, %v47
  %v50 = vld [vmem:[%s1] sm:$0x1]
  %v52 = vlaneseq
  %v53 = vshrl.u32 %v52, 7
  %v54 = vsub.s32 0, %v53
  %v55 = vrot.slane %v50, %v54
  %v57 = vmul.f32 %v48, %v55
  %v58 = vmul.f32 %v49, %v55
  %v59 = vld [vmem:[%s2] sm:$0x1]
  %v61 = vlaneseq
  %v62 = vshrl.u32 %v61, 7
  %v63 = vsub.s32 0, %v62
  %v64 = vrot.slane %v59, %v63
  %v66 = vadd.f32 %v57, %v64
  %v67 = vadd.f32 %v58, %v64
  %v68 = vld [vmem:[%s3] sm:$0xff]
  %v69 = vld [vmem:[%s3 + $0x8] sm:$0xff]
  %v70 = vld [vmem:[%s3 + $0x10] sm:$0xff]
  %v71 = vld [vmem:[%s3 + $0x18] sm:$0xff]
  %v72 = vld [vmem:[%s4] sm:$0x1]
  %v74 = vlaneseq
  %v75 = vshrl.u32 %v74, 7
  %v76 = vsub.s32 0, %v75
  %v77 = vrot.slane %v72, %v76
  %v80 = vsel %vm22, %v66, 0
  %v83 = vsel %vm22, %v67, 0
  %85 = vmatprep.subr.mxu0 0.0
  %86 = vmatpush1.msra.mxu0 0.0
  %87 = vmatprep.subr.mxu0 0.0
  %88 = vmatpush1.msra.mxu0 0.0
  %89 = vmatprep.subr.mxu0 0.0
  %90 = vmatpush1.msra.mxu0 0.0
  %91 = vmatprep.subr.mxu0 0.0
  %92 = vmatpush1.msra.mxu0 0.0
  %93 = vmatprep.subr.mxu0 0.0
  %94 = vmatpush1.msra.mxu0 0.0
  %95 = vmatprep.subr.mxu0 0.0
  %96 = vmatpush1.msra.mxu0 0.0
  %97 = vmatprep.subr.mxu0 0.0
  %98 = vmatpush1.msra.mxu0 0.0
  %99 = vmatprep.subr.mxu0 0.0
  %100 = vmatpush1.msra.mxu0 0.0
  %101 = vmatprep.subr.mxu0 0.0
  %102 = vmatpush1.msra.mxu0 0.0
  %103 = vmatprep.subr.mxu0 0.0
  %104 = vmatpush1.msra.mxu0 0.0
  %105 = vmatprep.subr.mxu0 0.0
  %106 = vmatpush1.msra.mxu0 0.0
  %107 = vmatprep.subr.mxu0 0.0
  %108 = vmatpush1.msra.mxu0 0.0
  %109 = vmatprep.subr.mxu0 0.0
  %110 = vmatpush1.msra.mxu0 %v71
  %111 = vmatprep.subr.mxu0 0.0
  %112 = vmatpush1.msra.mxu0 %v70
  %113 = vmatprep.subr.mxu0 0.0
  %114 = vmatpush1.msra.mxu0 %v69
  %115 = vmatprep.subr.mxu0 0.0
  %116 = vmatpush1.msra.mxu0 %v68
  %117 = vmatprep.subr.mxu0 0.0
  %118 = vmatpush2.msra.mxu0 0.0
  %119 = vmatprep.subr.mxu0 0.0
  %120 = vmatpush2.msra.mxu0 0.0
  %121 = vmatprep.subr.mxu0 0.0
  %122 = vmatpush2.msra.mxu0 0.0
  %123 = vmatprep.subr.mxu0 0.0
  %124 = vmatpush2.msra.mxu0 0.0
  %125 = vmatprep.subr.mxu0 0.0
  %126 = vmatpush2.msra.mxu0 0.0
  %127 = vmatprep.subr.mxu0 0.0
  %128 = vmatpush2.msra.mxu0 0.0
  %129 = vmatprep.subr.mxu0 0.0
  %130 = vmatpush2.msra.mxu0 0.0
  %131 = vmatprep.subr.mxu0 0.0
  %132 = vmatpush2.msra.mxu0 0.0
  %133 = vmatprep.subr.mxu0 0.0
  %134 = vmatpush2.msra.mxu0 0.0
  %135 = vmatprep.subr.mxu0 0.0
  %136 = vmatpush2.msra.mxu0 0.0
  %137 = vmatprep.subr.mxu0 0.0
  %138 = vmatpush2.msra.mxu0 0.0
  %139 = vmatprep.subr.mxu0 0.0
  %140 = vmatpush2.msra.mxu0 0.0
  %141 = vmatprep.subr.mxu0 0.0
  %142 = vmatpush2.msra.mxu0 0.0
  %143 = vmatprep.subr.mxu0 0.0
  %144 = vmatpush2.msra.mxu0 0.0
  %145 = vmatprep.subr.mxu0 0.0
  %146 = vmatpush2.msra.mxu0 0.0
  %147 = vmatprep.subr.mxu0 0.0
  %148 = vmatpush2.msra.mxu0 0.0
  %149 = vmatprep.mubr.f32.mxu0 0.0
  %150 = vmatmul.mubr.f32.gmra.mxu0 %v80
  %v151 = vpop.f32.mrf.mxu0
  %v152 = vadd.f32 %v77, %v151
  %v153 = vpop.f32.mrf.mxu0
  %154 = vmatprep.mubr.f32.mxu0 0.0
  %155 = vmatmul.mubr.f32.gmra.mxu0 %v83
  %v156 = vpop.f32.mrf.mxu0
  %v157 = vadd.f32 %v77, %v156
  %v158 = vpop.f32.mrf.mxu0
  %159 = vdwg.mxu0
  %160 = vst.msk [vmem:[%s5] sm:$0xff] %vm22, %v152
  %161 = vst.msk [vmem:[%s5 + $0x8] sm:$0xff] %vm22, %v157
  // Predicated region
  $region22: #{decoder_forward.14} parent=0 // pred_check
    _
  $region23: #{decoder_forward.14} parent=0 // pred_check_branch
    %163 = sbr.rel (0) target = $region25
  $region24: #{decoder_forward.14} parent=0 // pred_region
    _
  $region25: #{decoder_forward.14} parent=0 // pred_fallthru
    _
  // Predicated region
  $region26: #{decoder_forward.14} parent=0 // pred_check
    _
  $region27: #{decoder_forward.14} parent=0 // pred_check_branch
    %165 = sbr.rel (0) target = $region29
  $region28: #{decoder_forward.14} parent=0 // pred_region
    _
  $region29: #{decoder_forward.14} parent=0 // pred_fallthru
    _

// kernel: decoder_forward.12
$region0: #{decoder_forward.12}
  #allocation0 [shape = 'u32[]', space=smem, size = 0x4, offset = 0x4, fixed_abs, tag = 'smem constant byte address 0x4 - core index']
  #allocation1 [shape = 'u32[144,128]{1,0:T(1,128)}', space=vmem, size = 0x12000, scoped, tag = 'internal scratch']
  %s0 = inlined_call_operand.vmem [shape: f32[16,32], index: 0, kind: input, shape index: {}]
  %s1 = inlined_call_operand.vmem [shape: f32[1,32], index: 1, kind: input, shape index: {}]
  %s2 = inlined_call_operand.vmem [shape: f32[1,32], index: 2, kind: input, shape index: {}]
  %s3 = inlined_call_operand.vmem [shape: f32[32,96], index: 3, kind: input, shape index: {}]
  %s4 = inlined_call_operand.vmem [shape: f32[1,96], index: 4, kind: input, shape index: {}]
  %s5 = inlined_call_operand.vmem [shape: f32[16,96], index: 5, kind: output, shape index: {}]
  %s6 = sld [smem:[#allocation0]]
  $region30: #{decoder_forward.12} parent=0
    _
  %s8 = ssub.s32 1, %s6
  %s9 = scalar_select 0, %s8, %s6
  // Predicated region
  $region2: #{decoder_forward.12} parent=0 // pred_check
    _
  $region3: #{decoder_forward.12} parent=0 // pred_check_branch
    %11 = sbr.rel (0) target = $region5
  $region4: #{decoder_forward.12} parent=0 // pred_region
    _
  $region5: #{decoder_forward.12} parent=0 // pred_fallthru
    _
  // Predicated region
  $region6: #{decoder_forward.12} parent=0 // pred_check
    _
  $region7: #{decoder_forward.12} parent=0 // pred_check_branch
    %13 = sbr.rel (0) target = $region9
  $region8: #{decoder_forward.12} parent=0 // pred_region
    _
  $region9: #{decoder_forward.12} parent=0 // pred_fallthru
    _
  // Predicated region
  $region10: #{decoder_forward.12} parent=0 // pred_check
    _
  $region11: #{decoder_forward.12} parent=0 // pred_check_branch
    %15 = sbr.rel (0) target = $region13
  $region12: #{decoder_forward.12} parent=0 // pred_region
    _
  $region13: #{decoder_forward.12} parent=0 // pred_fallthru
    _
  // Predicated region
  $region14: #{decoder_forward.12} parent=0 // pred_check
    _
  $region15: #{decoder_forward.12} parent=0 // pred_check_branch
    %17 = sbr.rel (0) target = $region17
  $region16: #{decoder_forward.12} parent=0 // pred_region
    _
  $region17: #{decoder_forward.12} parent=0 // pred_fallthru
    _
  // Predicated region
  $region18: #{decoder_forward.12} parent=0 // pred_check
    _
  $region19: #{decoder_forward.12} parent=0 // pred_check_branch
    %19 = sbr.rel (0) target = $region21
  $region20: #{decoder_forward.12} parent=0 // pred_region
    _
  $region21: #{decoder_forward.12} parent=0 // pred_fallthru
    _
  %v20 = vld [vmem:[%s0] sm:$0xff]
  %v21 = vld [vmem:[%s0 + $0x8] sm:$0xff]
  %vm22 = vcmask 261120
  %v23 = vsel %vm22, %v20, 0.0
  %24 = vadd.xlane.f32.xlu0 %v23
  %v25 = vpop.xlane.xlu0 %24
  %v26 = vsel %vm22, %v21, 0.0
  %27 = vadd.xlane.f32.xlu0 %v26
  %v28 = vpop.xlane.xlu0 %27
  %v29 = vrcp.pop 32.0
  %v30 = vmul.f32 %v25, %v29
  %v31 = vmul.f32 %v28, %v29
  %v32 = vsub.f32 %v20, %v30
  %v33 = vsub.f32 %v21, %v31
  %v34 = vmul.f32 %v32, %v32
  %v35 = vmul.f32 %v33, %v33
  %v36 = vsel %vm22, %v34, 0.0
  %37 = vadd.xlane.f32.xlu0 %v36
  %v38 = vpop.xlane.xlu0 %37
  %v39 = vsel %vm22, %v35, 0.0
  %40 = vadd.xlane.f32.xlu0 %v39
  %v41 = vpop.xlane.xlu0 %40
  %v42 = vmul.f32 %v38, %v29
  %v43 = vmul.f32 %v41, %v29
  %v44 = vadd.f32 %v42, 1e-05
  %v45 = vadd.f32 %v43, 1e-05
  %v46 = vrsqrt.pop %v44
  %v47 = vrsqrt.pop %v45
  %v48 = vmul.f32 %v32, %v46
  %v49 = vmul.f32 %v33, %v47
  %v50 = vld [vmem:[%s1] sm:$0x1]
  %v52 = vlaneseq
  %v53 = vshrl.u32 %v52, 7
  %v54 = vsub.s32 0, %v53
  %v55 = vrot.slane %v50, %v54
  %v57 = vmul.f32 %v48, %v55
  %v58 = vmul.f32 %v49, %v55
  %v59 = vld [vmem:[%s2] sm:$0x1]
  %v61 = vlaneseq
  %v62 = vshrl.u32 %v61, 7
  %v63 = vsub.s32 0, %v62
  %v64 = vrot.slane %v59, %v63
  %v66 = vadd.f32 %v57, %v64
  %v67 = vadd.f32 %v58, %v64
  %v68 = vld [vmem:[%s3] sm:$0xff]
  %v69 = vld [vmem:[%s3 + $0x8] sm:$0xff]
  %v70 = vld [vmem:[%s3 + $0x10] sm:$0xff]
  %v71 = vld [vmem:[%s3 + $0x18] sm:$0xff]
  %v72 = vld [vmem:[%s4] sm:$0x1]
  %v74 = vlaneseq
  %v75 = vshrl.u32 %v74, 7
  %v76 = vsub.s32 0, %v75
  %v77 = vrot.slane %v72, %v76
  %v80 = vsel %vm22, %v66, 0
  %v83 = vsel %vm22, %v67, 0
  %85 = vmatprep.subr.mxu0 0.0
  %86 = vmatpush1.msra.mxu0 0.0
  %87 = vmatprep.subr.mxu0 0.0
  %88 = vmatpush1.msra.mxu0 0.0
  %89 = vmatprep.subr.mxu0 0.0
  %90 = vmatpush1.msra.mxu0 0.0
  %91 = vmatprep.subr.mxu0 0.0
  %92 = vmatpush1.msra.mxu0 0.0
  %93 = vmatprep.subr.mxu0 0.0
  %94 = vmatpush1.msra.mxu0 0.0
  %95 = vmatprep.subr.mxu0 0.0
  %96 = vmatpush1.msra.mxu0 0.0
  %97 = vmatprep.subr.mxu0 0.0
  %98 = vmatpush1.msra.mxu0 0.0
  %99 = vmatprep.subr.mxu0 0.0
  %100 = vmatpush1.msra.mxu0 0.0
  %101 = vmatprep.subr.mxu0 0.0
  %102 = vmatpush1.msra.mxu0 0.0
  %103 = vmatprep.subr.mxu0 0.0
  %104 = vmatpush1.msra.mxu0 0.0
  %105 = vmatprep.subr.mxu0 0.0
  %106 = vmatpush1.msra.mxu0 0.0
  %107 = vmatprep.subr.mxu0 0.0
  %108 = vmatpush1.msra.mxu0 0.0
  %109 = vmatprep.subr.mxu0 0.0
  %110 = vmatpush1.msra.mxu0 %v71
  %111 = vmatprep.subr.mxu0 0.0
  %112 = vmatpush1.msra.mxu0 %v70
  %113 = vmatprep.subr.mxu0 0.0
  %114 = vmatpush1.msra.mxu0 %v69
  %115 = vmatprep.subr.mxu0 0.0
  %116 = vmatpush1.msra.mxu0 %v68
  %117 = vmatprep.subr.mxu0 0.0
  %118 = vmatpush2.msra.mxu0 0.0
  %119 = vmatprep.subr.mxu0 0.0
  %120 = vmatpush2.msra.mxu0 0.0
  %121 = vmatprep.subr.mxu0 0.0
  %122 = vmatpush2.msra.mxu0 0.0
  %123 = vmatprep.subr.mxu0 0.0
  %124 = vmatpush2.msra.mxu0 0.0
  %125 = vmatprep.subr.mxu0 0.0
  %126 = vmatpush2.msra.mxu0 0.0
  %127 = vmatprep.subr.mxu0 0.0
  %128 = vmatpush2.msra.mxu0 0.0
  %129 = vmatprep.subr.mxu0 0.0
  %130 = vmatpush2.msra.mxu0 0.0
  %131 = vmatprep.subr.mxu0 0.0
  %132 = vmatpush2.msra.mxu0 0.0
  %133 = vmatprep.subr.mxu0 0.0
  %134 = vmatpush2.msra.mxu0 0.0
  %135 = vmatprep.subr.mxu0 0.0
  %136 = vmatpush2.msra.mxu0 0.0
  %137 = vmatprep.subr.mxu0 0.0
  %138 = vmatpush2.msra.mxu0 0.0
  %139 = vmatprep.subr.mxu0 0.0
  %140 = vmatpush2.msra.mxu0 0.0
  %141 = vmatprep.subr.mxu0 0.0
  %142 = vmatpush2.msra.mxu0 0.0
  %143 = vmatprep.subr.mxu0 0.0
  %144 = vmatpush2.msra.mxu0 0.0
  %145 = vmatprep.subr.mxu0 0.0
  %146 = vmatpush2.msra.mxu0 0.0
  %147 = vmatprep.subr.mxu0 0.0
  %148 = vmatpush2.msra.mxu0 0.0
  %149 = vmatprep.mubr.f32.mxu0 0.0
  %150 = vmatmul.mubr.f32.gmra.mxu0 %v80
  %v151 = vpop.f32.mrf.mxu0
  %v152 = vadd.f32 %v77, %v151
  %v153 = vpop.f32.mrf.mxu0
  %154 = vmatprep.mubr.f32.mxu0 0.0
  %155 = vmatmul.mubr.f32.gmra.mxu0 %v83
  %v156 = vpop.f32.mrf.mxu0
  %v157 = vadd.f32 %v77, %v156
  %v158 = vpop.f32.mrf.mxu0
  %159 = vdwg.mxu0
  %vm160 = vcmask 785408
  %161 = vst.msk [vmem:[%s5] sm:$0xff] %vm160, %v152
  %162 = vst.msk [vmem:[%s5 + $0x8] sm:$0xff] %vm160, %v157
  // Predicated region
  $region22: #{decoder_forward.12} parent=0 // pred_check
    _
  $region23: #{decoder_forward.12} parent=0 // pred_check_branch
    %164 = sbr.rel (0) target = $region25
  $region24: #{decoder_forward.12} parent=0 // pred_region
    _
  $region25: #{decoder_forward.12} parent=0 // pred_fallthru
    _
  // Predicated region
  $region26: #{decoder_forward.12} parent=0 // pred_check
    _
  $region27: #{decoder_forward.12} parent=0 // pred_check_branch
    %166 = sbr.rel (0) target = $region29
  $region28: #{decoder_forward.12} parent=0 // pred_region
    _
  $region29: #{decoder_forward.12} parent=0 // pred_fallthru
    _

// kernel: decoder_forward.13
$region0: #{decoder_forward.13}
  #allocation0 [shape = 'u32[]', space=smem, size = 0x4, offset = 0x4, fixed_abs, tag = 'smem constant byte address 0x4 - core index']
  #allocation1 [shape = 'u32[144,128]{1,0:T(1,128)}', space=vmem, size = 0x12000, scoped, tag = 'internal scratch']
  %s0 = inlined_call_operand.vmem [shape: f32[2,8,96], index: 0, kind: input, shape index: {}]
  %s1 = inlined_call_operand.vmem [shape: s8[2,8,8], index: 1, kind: input, shape index: {}]
  %s2 = inlined_call_operand.vmem [shape: f32[32,32], index: 2, kind: input, shape index: {}]
  %s3 = inlined_call_operand.vmem [shape: f32[1,32], index: 3, kind: input, shape index: {}]
  %s4 = inlined_call_operand.vmem [shape: f32[2,8,32], index: 4, kind: input, shape index: {}]
  %s5 = inlined_call_operand.vmem [shape: f32[2,8,32], index: 5, kind: output, shape index: {}]
  %s6 = sld [smem:[#allocation0]]
  $region53: #{decoder_forward.13} parent=0
    _
  %s8 = ssub.s32 1, %s6
  %s9 = scalar_select 0, %s8, %s6
  loop: start=0, step=1, limit=4
  $region2: #{decoder_forward.13} parent=0 // loop_pre_header
    _
  $region3: #{decoder_forward.13} parent=0 // loop_header
    %s11 = sphi 0, %s15
    %p12 = scmp.ge.s32.totalorder %s11, 4
    %s18 = sphi 0, %s30
    %s19 = sphi 0, %s26
    %s20 = sphi 0, %s18
    %s21 = sphi 0, %s19
    %s22 = sphi 0, %s20
    %s23 = sphi 0, %s21
    %s33 = sphi 0, %s35
    %s36 = sphi 0, %s33
    %s37 = sphi 0, %s36
    %s53 = sphi 0, %s37
    %s61 = sphi 0, %s63
    %s64 = sphi 0, %s61
    %s65 = sphi 0, %s64
    %s81 = sphi 0, %s65
    %s85 = sphi 0, %s85
    %s87 = sphi 0, %s85
    %s88 = sphi 0, %s87
    %s102 = sphi 0, %s88
    %s106 = sphi 0, %s106
    %s108 = sphi 0, %s106
    %s109 = sphi 0, %s108
    %s123 = sphi 0, %s109
    %s131 = sphi 0, %s133
    %s134 = sphi 0, %s131
    %s135 = sphi 0, %s134
    %s151 = sphi 0, %s135
    %s159 = sphi 0, %s161
    %s162 = sphi 0, %s159
    %s163 = sphi 0, %s162
    %s179 = sphi 0, %s163
  $region4: #{decoder_forward.13} parent=0 // loop_header_branch
    %14 = sbr.rel (%p12) target = $region8
  $region5: #{decoder_forward.13} parent=0 // loop_body
    %s16 = ssub.s32 %s11, 1
    %s17 = ssub.s32 %s11, 2
    %s24 = sadd.s32 1, %s19
    %p25 = scmp.ge.s32.totalorder %s24, 1
    %s26 = scalar_select %p25, 0, %s24
    %s27 = sadd.s32 1, %s18
    %s28 = scalar_select %p25, %s27, %s18
    %p29 = scmp.ge.s32.totalorder %s28, 2
    %s30 = scalar_select %p29, 0, %s28
    %s31 = ssub.s32 %s18, %s30
    %p32 = scmp.eq.s32.totalorder %s31, 0
    %s34 = sadd.s32 %s33, 1
    %s35 = scalar_select %p32, %s33, %s34
    %p38 = pneg %p32
    %p39 = scmp.eq.s32.totalorder %s11, 1
    %p40 = por %p38, %p39
    %p41 = scmp.ne.s32.totalorder %s33, %s36
    %p42 = scmp.eq.s32.totalorder %s11, 0
    %p43 = por %p41, %p42
    %p44 = scmp.ne.s32.totalorder %s33, %s36
    %p45 = scmp.eq.s32.totalorder %s16, 1
    %p46 = por %p44, %p45
    %p47 = scmp.ne.s32.totalorder %s36, %s37
    %p48 = scmp.eq.s32.totalorder %s16, 0
    %p49 = por %p47, %p48
    %p50 = scmp.ne.s32.totalorder %s36, %s37
    %p51 = scmp.eq.s32.totalorder %s17, 1
    %p52 = por %p50, %p51
    %p54 = scmp.ne.s32.totalorder %s37, %s53
    %p55 = scmp.eq.s32.totalorder %s17, 0
    %p56 = por %p54, %p55
    %s57 = ssub.s32 %s18, %s30
    %s58 = ssub.s32 %s19, %s26
    %s59 = sor.u32 %s57, %s58
    %p60 = scmp.eq.s32.totalorder %s59, 0
    %s62 = sadd.s32 %s61, 1
    %s63 = scalar_select %p60, %s61, %s62
    %p66 = pneg %p60
    %p67 = scmp.eq.s32.totalorder %s11, 1
    %p68 = por %p66, %p67
    %p69 = scmp.ne.s32.totalorder %s61, %s64
    %p70 = scmp.eq.s32.totalorder %s11, 0
    %p71 = por %p69, %p70
    %p72 = scmp.ne.s32.totalorder %s61, %s64
    %p73 = scmp.eq.s32.totalorder %s16, 1
    %p74 = por %p72, %p73
    %p75 = scmp.ne.s32.totalorder %s64, %s65
    %p76 = scmp.eq.s32.totalorder %s16, 0
    %p77 = por %p75, %p76
    %p78 = scmp.ne.s32.totalorder %s64, %s65
    %p79 = scmp.eq.s32.totalorder %s17, 1
    %p80 = por %p78, %p79
    %p82 = scmp.ne.s32.totalorder %s65, %s81
    %p83 = scmp.eq.s32.totalorder %s17, 0
    %p84 = por %p82, %p83
    %s86 = sadd.s32 %s85, 1
    %p89 = scmp.eq.s32.totalorder %s11, 1
    %p90 = scmp.ne.s32.totalorder %s85, %s87
    %p91 = scmp.eq.s32.totalorder %s11, 0
    %p92 = por %p90, %p91
    %p93 = scmp.ne.s32.totalorder %s85, %s87
    %p94 = scmp.eq.s32.totalorder %s16, 1
    %p95 = por %p93, %p94
    %p96 = scmp.ne.s32.totalorder %s87, %s88
    %p97 = scmp.eq.s32.totalorder %s16, 0
    %p98 = por %p96, %p97
    %p99 = scmp.ne.s32.totalorder %s87, %s88
    %p100 = scmp.eq.s32.totalorder %s17, 1
    %p101 = por %p99, %p100
    %p103 = scmp.ne.s32.totalorder %s88, %s102
    %p104 = scmp.eq.s32.totalorder %s17, 0
    %p105 = por %p103, %p104
    %s107 = sadd.s32 %s106, 1
    %p110 = scmp.eq.s32.totalorder %s11, 1
    %p111 = scmp.ne.s32.totalorder %s106, %s108
    %p112 = scmp.eq.s32.totalorder %s11, 0
    %p113 = por %p111, %p112
    %p114 = scmp.ne.s32.totalorder %s106, %s108
    %p115 = scmp.eq.s32.totalorder %s16, 1
    %p116 = por %p114, %p115
    %p117 = scmp.ne.s32.totalorder %s108, %s109
    %p118 = scmp.eq.s32.totalorder %s16, 0
    %p119 = por %p117, %p118
    %p120 = scmp.ne.s32.totalorder %s108, %s109
    %p121 = scmp.eq.s32.totalorder %s17, 1
    %p122 = por %p120, %p121
    %p124 = scmp.ne.s32.totalorder %s109, %s123
    %p125 = scmp.eq.s32.totalorder %s17, 0
    %p126 = por %p124, %p125
    %s127 = ssub.s32 %s18, %s30
    %s128 = ssub.s32 %s19, %s26
    %s129 = sor.u32 %s127, %s128
    %p130 = scmp.eq.s32.totalorder %s129, 0
    %s132 = sadd.s32 %s131, 1
    %s133 = scalar_select %p130, %s131, %s132
    %p136 = pneg %p130
    %p137 = scmp.eq.s32.totalorder %s11, 1
    %p138 = por %p136, %p137
    %p139 = scmp.ne.s32.totalorder %s131, %s134
    %p140 = scmp.eq.s32.totalorder %s11, 0
    %p141 = por %p139, %p140
    %p142 = scmp.ne.s32.totalorder %s131, %s134
    %p143 = scmp.eq.s32.totalorder %s16, 1
    %p144 = por %p142, %p143
    %p145 = scmp.ne.s32.totalorder %s134, %s135
    %p146 = scmp.eq.s32.totalorder %s16, 0
    %p147 = por %p145, %p146
    %p148 = scmp.ne.s32.totalorder %s134, %s135
    %p149 = scmp.eq.s32.totalorder %s17, 1
    %p150 = por %p148, %p149
    %p152 = scmp.ne.s32.totalorder %s135, %s151
    %p153 = scmp.eq.s32.totalorder %s17, 0
    %p154 = por %p152, %p153
    %s155 = ssub.s32 %s18, %s30
    %s156 = ssub.s32 %s19, %s26
    %s157 = sor.u32 %s155, %s156
    %p158 = scmp.eq.s32.totalorder %s157, 0
    %s160 = sadd.s32 %s159, 1
    %s161 = scalar_select %p158, %s159, %s160
    %p164 = pneg %p158
    %p165 = scmp.eq.s32.totalorder %s11, 1
    %p166 = por %p164, %p165
    %p167 = scmp.ne.s32.totalorder %s159, %s162
    %p168 = scmp.eq.s32.totalorder %s11, 0
    %p169 = por %p167, %p168
    %p170 = scmp.ne.s32.totalorder %s159, %s162
    %p171 = scmp.eq.s32.totalorder %s16, 1
    %p172 = por %p170, %p171
    %p173 = scmp.ne.s32.totalorder %s162, %s163
    %p174 = scmp.eq.s32.totalorder %s16, 0
    %p175 = por %p173, %p174
    %p176 = scmp.ne.s32.totalorder %s162, %s163
    %p177 = scmp.eq.s32.totalorder %s17, 1
    %p178 = por %p176, %p177
    %p180 = scmp.ne.s32.totalorder %s163, %s179
    %p181 = scmp.eq.s32.totalorder %s17, 0
    %p182 = por %p180, %p181
    %p183 = scmp.le.s32.totalorder 1, %s11
    %p184 = scmp.lt.s32.totalorder %s11, 3
    %p185 = pnand %p183, %p184
    %p186 = pneg %p185
    // Predicated region
    $region9: #{decoder_forward.13} parent=5 // pred_check
      _
    $region10: #{decoder_forward.13} parent=5 // pred_check_branch
      %188 = sbr.rel (%p185) target = $region12
    $region11: #{decoder_forward.13} parent=5 // pred_region
      %s189 = ssub.s32 %s11, 1
      // Predicated region
      $region13: #{decoder_forward.13} parent=11 // pred_check
        %p190 = pneg %p98
      $region14: #{decoder_forward.13} parent=11 // pred_check_branch
        %192 = sbr.rel (%p190) target = $region16
      $region15: #{decoder_forward.13} parent=11 // pred_region
        _
      $region16: #{decoder_forward.13} parent=11 // pred_fallthru
        _
      // Predicated region
      $region17: #{decoder_forward.13} parent=11 // pred_check
        %p193 = pneg %p119
      $region18: #{decoder_forward.13} parent=11 // pred_check_branch
        %195 = sbr.rel (%p193) target = $region20
      $region19: #{decoder_forward.13} parent=11 // pred_region
        _
      $region20: #{decoder_forward.13} parent=11 // pred_fallthru
        _
    $region12: #{decoder_forward.13} parent=5 // pred_fallthru
      _
    %p196 = scmp.lt.s32.totalorder %s11, 2
    // Predicated region
    $region21: #{decoder_forward.13} parent=5 // pred_check
      %p197 = pneg %p196
    $region22: #{decoder_forward.13} parent=5 // pred_check_branch
      %199 = sbr.rel (%p197) target = $region24
    $region23: #{decoder_forward.13} parent=5 // pred_region
      // Predicated region
      $region25: #{decoder_forward.13} parent=23 // pred_check
        %p200 = pneg %p43
      $region26: #{decoder_forward.13} parent=23 // pred_check_branch
        %202 = sbr.rel (%p200) target = $region28
      $region27: #{decoder_forward.13} parent=23 // pred_region
        %p203 = scmp.lt.s32.totalorder %s18, 1
        %s204 = scalar_select %p203, %s18, 1
        %s205 = smul.addr %s204, 8
        %s206 = scalar_lea.vmem %s0, %s205
      $region28: #{decoder_forward.13} parent=23 // pred_fallthru
        _
      // Predicated region
      $region29: #{decoder_forward.13} parent=23 // pred_check
        %p207 = pneg %p71
      $region30: #{decoder_forward.13} parent=23 // pred_check_branch
        %209 = sbr.rel (%p207) target = $region32
      $region31: #{decoder_forward.13} parent=23 // pred_region
        %p210 = scmp.lt.s32.totalorder %s18, 1
        %s211 = scalar_select %p210, %s18, 1
        %p212 = scmp.lt.s32.totalorder %s19, 0
        %s213 = scalar_select %p212, %s19, 0
        %s214 = sadd.s32 %s213, %s211
        %s215 = smul.addr %s214, 2
        %s216 = scalar_lea.vmem %s1, %s215
      $region32: #{decoder_forward.13} parent=23 // pred_fallthru
        _
      // Predicated region
      $region33: #{decoder_forward.13} parent=23 // pred_check
        %p217 = pneg %p141
      $region34: #{decoder_forward.13} parent=23 // pred_check_branch
        %219 = sbr.rel (%p217) target = $region36
      $region35: #{decoder_forward.13} parent=23 // pred_region
        %p220 = scmp.lt.s32.totalorder %s18, 1
        %s221 = scalar_select %p220, %s18, 1
        %p222 = scmp.lt.s32.totalorder %s19, 0
        %s223 = scalar_select %p222, %s19, 0
        %s224 = sadd.s32 %s223, %s221
        %s225 = smul.addr %s224, 8
        %s226 = scalar_lea.vmem %s4, %s225
      $region36: #{decoder_forward.13} parent=23 // pred_fallthru
        _
    $region24: #{decoder_forward.13} parent=5 // pred_fallthru
      _
    %p227 = scmp.le.s32.totalorder 1, %s11
    %p228 = scmp.lt.s32.totalorder %s11, 3
    %p229 = pnand %p227, %p228
    %p230 = pneg %p229
    // Predicated region
    $region37: #{decoder_forward.13} parent=5 // pred_check
      _
    $region38: #{decoder_forward.13} parent=5 // pred_check_branch
      %232 = sbr.rel (%p229) target = $region40
    $region39: #{decoder_forward.13} parent=5 // pred_region
      %s233 = ssub.s32 %s11, 1
      %p234 = scmp.lt.s32.totalorder %s20, 1
      %s235 = scalar_select %p234, %s20, 1
      %s236 = smul.addr %s235, 8
      %s237 = scalar_lea.vmem %s0, %s236
      %p238 = pneg %p49
      %p239 = pneg %p46
      %p240 = scmp.lt.s32.totalorder %s20, 1
      %s241 = scalar_select %p240, %s20, 1
      %p242 = scmp.lt.s32.totalorder %s21, 0
      %s243 = scalar_select %p242, %s21, 0
      %s244 = sadd.s32 %s243, %s241
      %s245 = smul.addr %s244, 2
      %s246 = scalar_lea.vmem %s1, %s245
      %p247 = pneg %p77
      %p248 = pneg %p74
      %p249 = pneg %p98
      %p250 = pneg %p95
      %p251 = pneg %p119
      %p252 = pneg %p116
      %p253 = scmp.lt.s32.totalorder %s20, 1
      %s254 = scalar_select %p253, %s20, 1
      %p255 = scmp.lt.s32.totalorder %s21, 0
      %s256 = scalar_select %p255, %s21, 0
      %s257 = sadd.s32 %s256, %s254
      %s258 = smul.addr %s257, 8
      %s259 = scalar_lea.vmem %s4, %s258
      %p260 = pneg %p147
      %p261 = pneg %p144
      %p262 = pneg %p175
      %p263 = pneg %p172
      %p264 = scmp.lt.s32.totalorder %s20, 1
      %s265 = scalar_select %p264, %s20, 1
      %p266 = scmp.lt.s32.totalorder %s21, 0
      %s267 = scalar_select %p266, %s21, 0
      %s268 = sadd.s32 %s267, %s265
      %s269 = smul.addr %s268, 8
      %s270 = scalar_lea.vmem %s5, %s269
      %p271 = scmp.lt.s32.totalorder %s20, 1
      %s272 = scalar_select %p271, %s20, 1
      %s273 = smul.addr %s272, 8
      %s274 = scalar_lea.vmem %s0, %s273
      %p275 = scmp.lt.s32.totalorder %s20, 1
      %s276 = scalar_select %p275, %s20, 1
      %p277 = scmp.lt.s32.totalorder %s21, 0
      %s278 = scalar_select %p277, %s21, 0
      %s279 = sadd.s32 %s278, %s276
      %s280 = smul.addr %s279, 2
      %s281 = scalar_lea.vmem %s1, %s280
      %p282 = scmp.lt.s32.totalorder %s20, 1
      %s283 = scalar_select %p282, %s20, 1
      %p284 = scmp.lt.s32.totalorder %s21, 0
      %s285 = scalar_select %p284, %s21, 0
      %s286 = sadd.s32 %s285, %s283
      %s287 = smul.addr %s286, 8
      %s288 = scalar_lea.vmem %s4, %s287
      %p289 = scmp.lt.s32.totalorder %s20, 1
      %s290 = scalar_select %p289, %s20, 1
      %p291 = scmp.lt.s32.totalorder %s21, 0
      %s292 = scalar_select %p291, %s21, 0
      %s293 = sadd.s32 %s292, %s290
      %s294 = smul.addr %s293, 8
      %s295 = scalar_lea.vmem %s5, %s294
      %v296 = vld [vmem:[%s274] sm:$0xff]
      %v297 = vmul.f32 %v296, 0.35355338
      %v298 = vld [vmem:[%s281] sm:$0x3]
      %v299 = vunpack.c.0.s8 %v298
      %v300 = vcvt.s32.f32 %v299
      %vm301 = vcmp.eq.f32.partialorder %v300, 0.0
      %v302 = vsel %vm301, -1e+30, 0.0
      %304 = vrot.lane.b32.xlu0 %v296, 96
      %v305 = vpop.permute.xlu0 %304
      %vm306 = vcmask 64512
      %v308 = vsel %vm306, %v297, 0
      %v310 = vsel %vm306, %v305, 0
      %312 = vmatprep.subr.mxu0 0.0
      %313 = vmatpush1.xpose.msra.mxu0 0.0
      %314 = vmatprep.subr.mxu0 0.0
      %315 = vmatpush1.xpose.msra.mxu0 0.0
      %316 = vmatprep.subr.mxu0 0.0
      %317 = vmatpush1.xpose.msra.mxu0 0.0
      %318 = vmatprep.subr.mxu0 0.0
      %319 = vmatpush1.xpose.msra.mxu0 0.0
      %320 = vmatprep.subr.mxu0 0.0
      %321 = vmatpush1.xpose.msra.mxu0 0.0
      %322 = vmatprep.subr.mxu0 0.0
      %323 = vmatpush1.xpose.msra.mxu0 0.0
      %324 = vmatprep.subr.mxu0 0.0
      %325 = vmatpush1.xpose.msra.mxu0 0.0
      %326 = vmatprep.subr.mxu0 0.0
      %327 = vmatpush1.xpose.msra.mxu0 0.0
      %328 = vmatprep.subr.mxu0 0.0
      %329 = vmatpush1.xpose.msra.mxu0 0.0
      %330 = vmatprep.subr.mxu0 0.0
      %331 = vmatpush1.xpose.msra.mxu0 0.0
      %332 = vmatprep.subr.mxu0 0.0
      %333 = vmatpush1.xpose.msra.mxu0 0.0
      %334 = vmatprep.subr.mxu0 0.0
      %335 = vmatpush1.xpose.msra.mxu0 0.0
      %336 = vmatprep.subr.mxu0 0.0
      %337 = vmatpush1.xpose.msra.mxu0 0.0
      %338 = vmatprep.subr.mxu0 0.0
      %339 = vmatpush1.xpose.msra.mxu0 0.0
      %340 = vmatprep.subr.mxu0 0.0
      %341 = vmatpush1.xpose.msra.mxu0 0.0
      %342 = vmatprep.subr.mxu0 0.0
      %343 = vmatpush1.xpose.msra.mxu0 %v310
      %344 = vmatprep.subr.mxu0 0.0
      %345 = vmatpush2.xpose.msra.mxu0 0.0
      %346 = vmatprep.subr.mxu0 0.0
      %347 = vmatpush2.xpose.msra.mxu0 0.0
      %348 = vmatprep.subr.mxu0 0.0
      %349 = vmatpush2.xpose.msra.mxu0 0.0
      %350 = vmatprep.subr.mxu0 0.0
      %351 = vmatpush2.xpose.msra.mxu0 0.0
      %352 = vmatprep.subr.mxu0 0.0
      %353 = vmatpush2.xpose.msra.mxu0 0.0
      %354 = vmatprep.subr.mxu0 0.0
      %355 = vmatpush2.xpose.msra.mxu0 0.0
      %356 = vmatprep.subr.mxu0 0.0
      %357 = vmatpush2.xpose.msra.mxu0 0.0
      %358 = vmatprep.subr.mxu0 0.0
      %359 = vmatpush2.xpose.msra.mxu0 0.0
      %360 = vmatprep.subr.mxu0 0.0
      %361 = vmatpush2.xpose.msra.mxu0 0.0
      %362 = vmatprep.subr.mxu0 0.0
      %363 = vmatpush2.xpose.msra.mxu0 0.0
      %364 = vmatprep.subr.mxu0 0.0
      %365 = vmatpush2.xpose.msra.mxu0 0.0
      %366 = vmatprep.subr.mxu0 0.0
      %367 = vmatpush2.xpose.msra.mxu0 0.0
      %368 = vmatprep.subr.mxu0 0.0
      %369 = vmatpush2.xpose.msra.mxu0 0.0
      %370 = vmatprep.subr.mxu0 0.0
      %371 = vmatpush2.xpose.msra.mxu0 0.0
      %372 = vmatprep.subr.mxu0 0.0
      %373 = vmatpush2.xpose.msra.mxu0 0.0
      %374 = vmatprep.subr.mxu0 0.0
      %375 = vmatpush2.xpose.msra.mxu0 0.0
      %376 = vmatprep.mubr.f32.mxu0 0.0
      %377 = vmatmul.mubr.f32.gmra.mxu0 %v308
      %v378 = vpop.f32.mrf.mxu0
      %v379 = vadd.f32 %v302, %v378
      %v380 = vpop.f32.mrf.mxu0
      %381 = vdwg.mxu0
      %v382 = vsel %vm306, %v379, -inf
      %383 = vmax.xlane.f32.xlu0 %v382
      %v384 = vpop.xlane.xlu0 %383
      %v385 = vsub.f32 %v379, %v384
      %v386 = vmul.f32 %v385, 1.442695
      %v387 = vpow.pop %v386
      %v388 = vsel %vm306, %v387, 0.0
      %389 = vadd.xlane.f32.xlu0 %v388
      %v390 = vpop.xlane.xlu0 %389
      %v391 = vrcp.pop %v390
      %392 = vrot.lane.b32.xlu0 %v296, 64
      %v393 = vpop.permute.xlu0 %392
      %v396 = vsel %vm306, %v387, 0
      %398 = vmatprep.subr.mxu0 0.0
      %399 = vmatpush1.msra.mxu0 0.0
      %400 = vmatprep.subr.mxu0 0.0
      %401 = vmatpush1.msra.mxu0 0.0
      %402 = vmatprep.subr.mxu0 0.0
      %403 = vmatpush1.msra.mxu0 0.0
      %404 = vmatprep.subr.mxu0 0.0
      %405 = vmatpush1.msra.mxu0 0.0
      %406 = vmatprep.subr.mxu0 0.0
      %407 = vmatpush1.msra.mxu0 0.0
      %408 = vmatprep.subr.mxu0 0.0
      %409 = vmatpush1.msra.mxu0 0.0
      %410 = vmatprep.subr.mxu0 0.0
      %411 = vmatpush1.msra.mxu0 0.0
      %412 = vmatprep.subr.mxu0 0.0
      %413 = vmatpush1.msra.mxu0 0.0
      %414 = vmatprep.subr.mxu0 0.0
      %415 = vmatpush1.msra.mxu0 0.0
      %416 = vmatprep.subr.mxu0 0.0
      %417 = vmatpush1.msra.mxu0 0.0
      %418 = vmatprep.subr.mxu0 0.0
      %419 = vmatpush1.msra.mxu0 0.0
      %420 = vmatprep.subr.mxu0 0.0
      %421 = vmatpush1.msra.mxu0 0.0
      %422 = vmatprep.subr.mxu0 0.0
      %423 = vmatpush1.msra.mxu0 0.0
      %424 = vmatprep.subr.mxu0 0.0
      %425 = vmatpush1.msra.mxu0 0.0
      %426 = vmatprep.subr.mxu0 0.0
      %427 = vmatpush1.msra.mxu0 0.0
      %428 = vmatprep.subr.mxu0 0.0
      %429 = vmatpush1.msra.mxu0 %v393
      %430 = vmatprep.subr.mxu0 0.0
      %431 = vmatpush2.msra.mxu0 0.0
      %432 = vmatprep.subr.mxu0 0.0
      %433 = vmatpush2.msra.mxu0 0.0
      %434 = vmatprep.subr.mxu0 0.0
      %435 = vmatpush2.msra.mxu0 0.0
      %436 = vmatprep.subr.mxu0 0.0
      %437 = vmatpush2.msra.mxu0 0.0
      %438 = vmatprep.subr.mxu0 0.0
      %439 = vmatpush2.msra.mxu0 0.0
      %440 = vmatprep.subr.mxu0 0.0
      %441 = vmatpush2.msra.mxu0 0.0
      %442 = vmatprep.subr.mxu0 0.0
      %443 = vmatpush2.msra.mxu0 0.0
      %444 = vmatprep.subr.mxu0 0.0
      %445 = vmatpush2.msra.mxu0 0.0
      %446 = vmatprep.subr.mxu0 0.0
      %447 = vmatpush2.msra.mxu0 0.0
      %448 = vmatprep.subr.mxu0 0.0
      %449 = vmatpush2.msra.mxu0 0.0
      %450 = vmatprep.subr.mxu0 0.0
      %451 = vmatpush2.msra.mxu0 0.0
      %452 = vmatprep.subr.mxu0 0.0
      %453 = vmatpush2.msra.mxu0 0.0
      %454 = vmatprep.subr.mxu0 0.0
      %455 = vmatpush2.msra.mxu0 0.0
      %456 = vmatprep.subr.mxu0 0.0
      %457 = vmatpush2.msra.mxu0 0.0
      %458 = vmatprep.subr.mxu0 0.0
      %459 = vmatpush2.msra.mxu0 0.0
      %460 = vmatprep.subr.mxu0 0.0
      %461 = vmatpush2.msra.mxu0 0.0
      %462 = vmatprep.mubr.f32.mxu0 0.0
      %463 = vmatmul.mubr.f32.gmra.mxu0 %v396
      %v464 = vpop.f32.mrf.mxu0
      %v465 = vadd.f32 0.0, %v464
      %v466 = vpop.f32.mrf.mxu0
      %467 = vdwg.mxu0
      %v468 = vmul.f32 %v465, %v391
      %v469 = vld [vmem:[%s2] sm:$0xff]
      %470 = vrot.lane.b32.xlu0 %v297, 120
      %v471 = vpop.permute.xlu0 %470
      %472 = vrot.lane.b32.xlu0 %v296, 88
      %v473 = vpop.permute.xlu0 %472
      %v474 = vsel %vm306, %v471, 0
      %v476 = vsel %vm306, %v473, 0
      %478 = vmatprep.subr.mxu0 0.0
      %479 = vmatpush1.xpose.msra.mxu0 0.0
      %480 = vmatprep.subr.mxu0 0.0
      %481 = vmatpush1.xpose.msra.mxu0 0.0
      %482 = vmatprep.subr.mxu0 0.0
      %483 = vmatpush1.xpose.msra.mxu0 0.0
      %484 = vmatprep.subr.mxu0 0.0
      %485 = vmatpush1.xpose.msra.mxu0 0.0
      %486 = vmatprep.subr.mxu0 0.0
      %487 = vmatpush1.xpose.msra.mxu0 0.0
      %488 = vmatprep.subr.mxu0 0.0
      %489 = vmatpush1.xpose.msra.mxu0 0.0
      %490 = vmatprep.subr.mxu0 0.0
      %491 = vmatpush1.xpose.msra.mxu0 0.0
      %492 = vmatprep.subr.mxu0 0.0
      %493 = vmatpush1.xpose.msra.mxu0 0.0
      %494 = vmatprep.subr.mxu0 0.0
      %495 = vmatpush1.xpose.msra.mxu0 0.0
      %496 = vmatprep.subr.mxu0 0.0
      %497 = vmatpush1.xpose.msra.mxu0 0.0
      %498 = vmatprep.subr.mxu0 0.0
      %499 = vmatpush1.xpose.msra.mxu0 0.0
      %500 = vmatprep.subr.mxu0 0.0
      %501 = vmatpush1.xpose.msra.mxu0 0.0
      %502 = vmatprep.subr.mxu0 0.0
      %503 = vmatpush1.xpose.msra.mxu0 0.0
      %504 = vmatprep.subr.mxu0 0.0
      %505 = vmatpush1.xpose.msra.mxu0 0.0
      %506 = vmatprep.subr.mxu0 0.0
      %507 = vmatpush1.xpose.msra.mxu0 0.0
      %508 = vmatprep.subr.mxu0 0.0
      %509 = vmatpush1.xpose.msra.mxu0 %v476
      %510 = vmatprep.subr.mxu0 0.0
      %511 = vmatpush2.xpose.msra.mxu0 0.0
      %512 = vmatprep.subr.mxu0 0.0
      %513 = vmatpush2.xpose.msra.mxu0 0.0
      %514 = vmatprep.subr.mxu0 0.0
      %515 = vmatpush2.xpose.msra.mxu0 0.0
      %516 = vmatprep.subr.mxu0 0.0
      %517 = vmatpush2.xpose.msra.mxu0 0.0
      %518 = vmatprep.subr.mxu0 0.0
      %519 = vmatpush2.xpose.msra.mxu0 0.0
      %520 = vmatprep.subr.mxu0 0.0
      %521 = vmatpush2.xpose.msra.mxu0 0.0
      %522 = vmatprep.subr.mxu0 0.0
      %523 = vmatpush2.xpose.msra.mxu0 0.0
      %524 = vmatprep.subr.mxu0 0.0
      %525 = vmatpush2.xpose.msra.mxu0 0.0
      %526 = vmatprep.subr.mxu0 0.0
      %527 = vmatpush2.xpose.msra.mxu0 0.0
      %528 = vmatprep.subr.mxu0 0.0
      %529 = vmatpush2.xpose.msra.mxu0 0.0
      %530 = vmatprep.subr.mxu0 0.0
      %531 = vmatpush2.xpose.msra.mxu0 0.0
      %532 = vmatprep.subr.mxu0 0.0
      %533 = vmatpush2.xpose.msra.mxu0 0.0
      %534 = vmatprep.subr.mxu0 0.0
      %535 = vmatpush2.xpose.msra.mxu0 0.0
      %536 = vmatprep.subr.mxu0 0.0
      %537 = vmatpush2.xpose.msra.mxu0 0.0
      %538 = vmatprep.subr.mxu0 0.0
      %539 = vmatpush2.xpose.msra.mxu0 0.0
      %540 = vmatprep.subr.mxu0 0.0
      %541 = vmatpush2.xpose.msra.mxu0 0.0
      %542 = vmatprep.mubr.f32.mxu0 0.0
      %543 = vmatmul.mubr.f32.gmra.mxu0 %v474
      %v544 = vpop.f32.mrf.mxu0
      %v545 = vadd.f32 %v302, %v544
      %v546 = vpop.f32.mrf.mxu0
      %547 = vdwg.mxu0
      %v548 = vsel %vm306, %v545, -inf
      %549 = vmax.xlane.f32.xlu0 %v548
      %v550 = vpop.xlane.xlu0 %549
      %v551 = vsub.f32 %v545, %v550
      %v552 = vmul.f32 %v551, 1.442695
      %v553 = vpow.pop %v552
      %v554 = vsel %vm306, %v553, 0.0
      %555 = vadd.xlane.f32.xlu0 %v554
      %v556 = vpop.xlane.xlu0 %555
      %v557 = vrcp.pop %v556
      %558 = vrot.lane.b32.xlu0 %v296, 56
      %v559 = vpop.permute.xlu0 %558
      %v562 = vsel %vm306, %v553, 0
      %564 = vmatprep.subr.mxu0 0.0
      %565 = vmatpush1.msra.mxu0 0.0
      %566 = vmatprep.subr.mxu0 0.0
      %567 = vmatpush1.msra.mxu0 0.0
      %568 = vmatprep.subr.mxu0 0.0
      %569 = vmatpush1.msra.mxu0 0.0
      %570 = vmatprep.subr.mxu0 0.0
      %571 = vmatpush1.msra.mxu0 0.0
      %572 = vmatprep.subr.mxu0 0.0
      %573 = vmatpush1.msra.mxu0 0.0
      %574 = vmatprep.subr.mxu0 0.0
      %575 = vmatpush1.msra.mxu0 0.0
      %576 = vmatprep.subr.mxu0 0.0
      %577 = vmatpush1.msra.mxu0 0.0
      %578 = vmatprep.subr.mxu0 0.0
      %579 = vmatpush1.msra.mxu0 0.0
      %580 = vmatprep.subr.mxu0 0.0
      %581 = vmatpush1.msra.mxu0 0.0
      %582 = vmatprep.subr.mxu0 0.0
      %583 = vmatpush1.msra.mxu0 0.0
      %584 = vmatprep.subr.mxu0 0.0
      %585 = vmatpush1.msra.mxu0 0.0
      %586 = vmatprep.subr.mxu0 0.0
      %587 = vmatpush1.msra.mxu0 0.0
      %588 = vmatprep.subr.mxu0 0.0
      %589 = vmatpush1.msra.mxu0 0.0
      %590 = vmatprep.subr.mxu0 0.0
      %591 = vmatpush1.msra.mxu0 0.0
      %592 = vmatprep.subr.mxu0 0.0
      %593 = vmatpush1.msra.mxu0 0.0
      %594 = vmatprep.subr.mxu0 0.0
      %595 = vmatpush1.msra.mxu0 %v559
      %596 = vmatprep.subr.mxu0 0.0
      %597 = vmatpush2.msra.mxu0 0.0
      %598 = vmatprep.subr.mxu0 0.0
      %599 = vmatpush2.msra.mxu0 0.0
      %600 = vmatprep.subr.mxu0 0.0
      %601 = vmatpush2.msra.mxu0 0.0
      %602 = vmatprep.subr.mxu0 0.0
      %603 = vmatpush2.msra.mxu0 0.0
      %604 = vmatprep.subr.mxu0 0.0
      %605 = vmatpush2.msra.mxu0 0.0
      %606 = vmatprep.subr.mxu0 0.0
      %607 = vmatpush2.msra.mxu0 0.0
      %608 = vmatprep.subr.mxu0 0.0
      %609 = vmatpush2.msra.mxu0 0.0
      %610 = vmatprep.subr.mxu0 0.0
      %611 = vmatpush2.msra.mxu0 0.0
      %612 = vmatprep.subr.mxu0 0.0
      %613 = vmatpush2.msra.mxu0 0.0
      %614 = vmatprep.subr.mxu0 0.0
      %615 = vmatpush2.msra.mxu0 0.0
      %616 = vmatprep.subr.mxu0 0.0
      %617 = vmatpush2.msra.mxu0 0.0
      %618 = vmatprep.subr.mxu0 0.0
      %619 = vmatpush2.msra.mxu0 0.0
      %620 = vmatprep.subr.mxu0 0.0
      %621 = vmatpush2.msra.mxu0 0.0
      %622 = vmatprep.subr.mxu0 0.0
      %623 = vmatpush2.msra.mxu0 0.0
      %624 = vmatprep.subr.mxu0 0.0
      %625 = vmatpush2.msra.mxu0 0.0
      %626 = vmatprep.subr.mxu0 0.0
      %627 = vmatpush2.msra.mxu0 0.0
      %628 = vmatprep.mubr.f32.mxu0 0.0
      %629 = vmatmul.mubr.f32.gmra.mxu0 %v562
      %v630 = vpop.f32.mrf.mxu0
      %v631 = vadd.f32 0.0, %v630
      %v632 = vpop.f32.mrf.mxu0
      %633 = vdwg.mxu0
      %v634 = vmul.f32 %v631, %v557
      %v635 = vld [vmem:[%s2 + $0x8] sm:$0xff]
      %v637 = vsel %vm306, %v634, 0
      %639 = vmatprep.subr.mxu0 0.0
      %640 = vmatpush1.msra.mxu0 0.0
      %641 = vmatprep.subr.mxu0 0.0
      %642 = vmatpush1.msra.mxu0 0.0
      %643 = vmatprep.subr.mxu0 0.0
      %644 = vmatpush1.msra.mxu0 0.0
      %645 = vmatprep.subr.mxu0 0.0
      %646 = vmatpush1.msra.mxu0 0.0
      %647 = vmatprep.subr.mxu0 0.0
      %648 = vmatpush1.msra.mxu0 0.0
      %649 = vmatprep.subr.mxu0 0.0
      %650 = vmatpush1.msra.mxu0 0.0
      %651 = vmatprep.subr.mxu0 0.0
      %652 = vmatpush1.msra.mxu0 0.0
      %653 = vmatprep.subr.mxu0 0.0
      %654 = vmatpush1.msra.mxu0 0.0
      %655 = vmatprep.subr.mxu0 0.0
      %656 = vmatpush1.msra.mxu0 0.0
      %657 = vmatprep.subr.mxu0 0.0
      %658 = vmatpush1.msra.mxu0 0.0
      %659 = vmatprep.subr.mxu0 0.0
      %660 = vmatpush1.msra.mxu0 0.0
      %661 = vmatprep.subr.mxu0 0.0
      %662 = vmatpush1.msra.mxu0 0.0
      %663 = vmatprep.subr.mxu0 0.0
      %664 = vmatpush1.msra.mxu0 0.0
      %665 = vmatprep.subr.mxu0 0.0
      %666 = vmatpush1.msra.mxu0 0.0
      %667 = vmatprep.subr.mxu0 0.0
      %668 = vmatpush1.msra.mxu0 0.0
      %669 = vmatprep.subr.mxu0 0.0
      %670 = vmatpush1.msra.mxu0 %v635
      %671 = vmatprep.subr.mxu0 0.0
      %672 = vmatpush2.msra.mxu0 0.0
      %673 = vmatprep.subr.mxu0 0.0
      %674 = vmatpush2.msra.mxu0 0.0
      %675 = vmatprep.subr.mxu0 0.0
      %676 = vmatpush2.msra.mxu0 0.0
      %677 = vmatprep.subr.mxu0 0.0
      %678 = vmatpush2.msra.mxu0 0.0
      %679 = vmatprep.subr.mxu0 0.0
      %680 = vmatpush2.msra.mxu0 0.0
      %681 = vmatprep.subr.mxu0 0.0
      %682 = vmatpush2.msra.mxu0 0.0
      %683 = vmatprep.subr.mxu0 0.0
      %684 = vmatpush2.msra.mxu0 0.0
      %685 = vmatprep.subr.mxu0 0.0
      %686 = vmatpush2.msra.mxu0 0.0
      %687 = vmatprep.subr.mxu0 0.0
      %688 = vmatpush2.msra.mxu0 0.0
      %689 = vmatprep.subr.mxu0 0.0
      %690 = vmatpush2.msra.mxu0 0.0
      %691 = vmatprep.subr.mxu0 0.0
      %692 = vmatpush2.msra.mxu0 0.0
      %693 = vmatprep.subr.mxu0 0.0
      %694 = vmatpush2.msra.mxu0 0.0
      %695 = vmatprep.subr.mxu0 0.0
      %696 = vmatpush2.msra.mxu0 0.0
      %697 = vmatprep.subr.mxu0 0.0
      %698 = vmatpush2.msra.mxu0 0.0
      %699 = vmatprep.subr.mxu0 0.0
      %700 = vmatpush2.msra.mxu0 0.0
      %701 = vmatprep.subr.mxu0 0.0
      %702 = vmatpush2.msra.mxu0 0.0
      %703 = vmatprep.mubr.f32.mxu0 0.0
      %704 = vmatmul.mubr.f32.gmra.mxu0 %v637
      %v705 = vpop.f32.mrf.mxu0
      %v706 = vadd.f32 0.0, %v705
      %v707 = vpop.f32.mrf.mxu0
      %708 = vdwg.mxu0
      %v710 = vsel %vm306, %v468, 0
      %712 = vmatprep.subr.mxu0 0.0
      %713 = vmatpush1.msra.mxu0 0.0
      %714 = vmatprep.subr.mxu0 0.0
      %715 = vmatpush1.msra.mxu0 0.0
      %716 = vmatprep.subr.mxu0 0.0
      %717 = vmatpush1.msra.mxu0 0.0
      %718 = vmatprep.subr.mxu0 0.0
      %719 = vmatpush1.msra.mxu0 0.0
      %720 = vmatprep.subr.mxu0 0.0
      %721 = vmatpush1.msra.mxu0 0.0
      %722 = vmatprep.subr.mxu0 0.0
      %723 = vmatpush1.msra.mxu0 0.0
      %724 = vmatprep.subr.mxu0 0.0
      %725 = vmatpush1.msra.mxu0 0.0
      %726 = vmatprep.subr.mxu0 0.0
      %727 = vmatpush1.msra.mxu0 0.0
      %728 = vmatprep.subr.mxu0 0.0
      %729 = vmatpush1.msra.mxu0 0.0
      %730 = vmatprep.subr.mxu0 0.0
      %731 = vmatpush1.msra.mxu0 0.0
      %732 = vmatprep.subr.mxu0 0.0
      %733 = vmatpush1.msra.mxu0 0.0
      %734 = vmatprep.subr.mxu0 0.0
      %735 = vmatpush1.msra.mxu0 0.0
      %736 = vmatprep.subr.mxu0 0.0
      %737 = vmatpush1.msra.mxu0 0.0
      %738 = vmatprep.subr.mxu0 0.0
      %739 = vmatpush1.msra.mxu0 0.0
      %740 = vmatprep.subr.mxu0 0.0
      %741 = vmatpush1.msra.mxu0 0.0
      %742 = vmatprep.subr.mxu0 0.0
      %743 = vmatpush1.msra.mxu0 %v469
      %744 = vmatprep.subr.mxu0 0.0
      %745 = vmatpush2.msra.mxu0 0.0
      %746 = vmatprep.subr.mxu0 0.0
      %747 = vmatpush2.msra.mxu0 0.0
      %748 = vmatprep.subr.mxu0 0.0
      %749 = vmatpush2.msra.mxu0 0.0
      %750 = vmatprep.subr.mxu0 0.0
      %751 = vmatpush2.msra.mxu0 0.0
      %752 = vmatprep.subr.mxu0 0.0
      %753 = vmatpush2.msra.mxu0 0.0
      %754 = vmatprep.subr.mxu0 0.0
      %755 = vmatpush2.msra.mxu0 0.0
      %756 = vmatprep.subr.mxu0 0.0
      %757 = vmatpush2.msra.mxu0 0.0
      %758 = vmatprep.subr.mxu0 0.0
      %759 = vmatpush2.msra.mxu0 0.0
      %760 = vmatprep.subr.mxu0 0.0
      %761 = vmatpush2.msra.mxu0 0.0
      %762 = vmatprep.subr.mxu0 0.0
      %763 = vmatpush2.msra.mxu0 0.0
      %764 = vmatprep.subr.mxu0 0.0
      %765 = vmatpush2.msra.mxu0 0.0
      %766 = vmatprep.subr.mxu0 0.0
      %767 = vmatpush2.msra.mxu0 0.0
      %768 = vmatprep.subr.mxu0 0.0
      %769 = vmatpush2.msra.mxu0 0.0
      %770 = vmatprep.subr.mxu0 0.0
      %771 = vmatpush2.msra.mxu0 0.0
      %772 = vmatprep.subr.mxu0 0.0
      %773 = vmatpush2.msra.mxu0 0.0
      %774 = vmatprep.subr.mxu0 0.0
      %775 = vmatpush2.msra.mxu0 0.0
      %776 = vmatprep.mubr.f32.mxu0 0.0
      %777 = vmatmul.mubr.f32.gmra.mxu0 %v710
      %v778 = vpop.f32.mrf.mxu0
      %v779 = vadd.f32 %v706, %v778
      %v780 = vpop.f32.mrf.mxu0
      %781 = vdwg.mxu0
      %782 = vrot.lane.b32.xlu0 %v297, 112
      %v783 = vpop.permute.xlu0 %782
      %784 = vrot.lane.b32.xlu0 %v296, 80
      %v785 = vpop.permute.xlu0 %784
      %v786 = vsel %vm306, %v783, 0
      %v788 = vsel %vm306, %v785, 0
      %790 = vmatprep.subr.mxu0 0.0
      %791 = vmatpush1.xpose.msra.mxu0 0.0
      %792 = vmatprep.subr.mxu0 0.0
      %793 = vmatpush1.xpose.msra.mxu0 0.0
      %794 = vmatprep.subr.mxu0 0.0
      %795 = vmatpush1.xpose.msra.mxu0 0.0
      %796 = vmatprep.subr.mxu0 0.0
      %797 = vmatpush1.xpose.msra.mxu0 0.0
      %798 = vmatprep.subr.mxu0 0.0
      %799 = vmatpush1.xpose.msra.mxu0 0.0
      %800 = vmatprep.subr.mxu0 0.0
      %801 = vmatpush1.xpose.msra.mxu0 0.0
      %802 = vmatprep.subr.mxu0 0.0
      %803 = vmatpush1.xpose.msra.mxu0 0.0
      %804 = vmatprep.subr.mxu0 0.0
      %805 = vmatpush1.xpose.msra.mxu0 0.0
      %806 = vmatprep.subr.mxu0 0.0
      %807 = vmatpush1.xpose.msra.mxu0 0.0
      %808 = vmatprep.subr.mxu0 0.0
      %809 = vmatpush1.xpose.msra.mxu0 0.0
      %810 = vmatprep.subr.mxu0 0.0
      %811 = vmatpush1.xpose.msra.mxu0 0.0
      %812 = vmatprep.subr.mxu0 0.0
      %813 = vmatpush1.xpose.msra.mxu0 0.0
      %814 = vmatprep.subr.mxu0 0.0
      %815 = vmatpush1.xpose.msra.mxu0 0.0
      %816 = vmatprep.subr.mxu0 0.0
      %817 = vmatpush1.xpose.msra.mxu0 0.0
      %818 = vmatprep.subr.mxu0 0.0
      %819 = vmatpush1.xpose.msra.mxu0 0.0
      %820 = vmatprep.subr.mxu0 0.0
      %821 = vmatpush1.xpose.msra.mxu0 %v788
      %822 = vmatprep.subr.mxu0 0.0
      %823 = vmatpush2.xpose.msra.mxu0 0.0
      %824 = vmatprep.subr.mxu0 0.0
      %825 = vmatpush2.xpose.msra.mxu0 0.0
      %826 = vmatprep.subr.mxu0 0.0
      %827 = vmatpush2.xpose.msra.mxu0 0.0
      %828 = vmatprep.subr.mxu0 0.0
      %829 = vmatpush2.xpose.msra.mxu0 0.0
      %830 = vmatprep.subr.mxu0 0.0
      %831 = vmatpush2.xpose.msra.mxu0 0.0
      %832 = vmatprep.subr.mxu0 0.0
      %833 = vmatpush2.xpose.msra.mxu0 0.0
      %834 = vmatprep.subr.mxu0 0.0
      %835 = vmatpush2.xpose.msra.mxu0 0.0
      %836 = vmatprep.subr.mxu0 0.0
      %837 = vmatpush2.xpose.msra.mxu0 0.0
      %838 = vmatprep.subr.mxu0 0.0
      %839 = vmatpush2.xpose.msra.mxu0 0.0
      %840 = vmatprep.subr.mxu0 0.0
      %841 = vmatpush2.xpose.msra.mxu0 0.0
      %842 = vmatprep.subr.mxu0 0.0
      %843 = vmatpush2.xpose.msra.mxu0 0.0
      %844 = vmatprep.subr.mxu0 0.0
      %845 = vmatpush2.xpose.msra.mxu0 0.0
      %846 = vmatprep.subr.mxu0 0.0
      %847 = vmatpush2.xpose.msra.mxu0 0.0
      %848 = vmatprep.subr.mxu0 0.0
      %849 = vmatpush2.xpose.msra.mxu0 0.0
      %850 = vmatprep.subr.mxu0 0.0
      %851 = vmatpush2.xpose.msra.mxu0 0.0
      %852 = vmatprep.subr.mxu0 0.0
      %853 = vmatpush2.xpose.msra.mxu0 0.0
      %854 = vmatprep.mubr.f32.mxu0 0.0
      %855 = vmatmul.mubr.f32.gmra.mxu0 %v786
      %v856 = vpop.f32.mrf.mxu0
      %v857 = vadd.f32 %v302, %v856
      %v858 = vpop.f32.mrf.mxu0
      %859 = vdwg.mxu0
      %v860 = vsel %vm306, %v857, -inf
      %861 = vmax.xlane.f32.xlu0 %v860
      %v862 = vpop.xlane.xlu0 %861
      %v863 = vsub.f32 %v857, %v862
      %v864 = vmul.f32 %v863, 1.442695
      %v865 = vpow.pop %v864
      %v866 = vsel %vm306, %v865, 0.0
      %867 = vadd.xlane.f32.xlu0 %v866
      %v868 = vpop.xlane.xlu0 %867
      %v869 = vrcp.pop %v868
      %870 = vrot.lane.b32.xlu0 %v296, 48
      %v871 = vpop.permute.xlu0 %870
      %v874 = vsel %vm306, %v865, 0
      %876 = vmatprep.subr.mxu0 0.0
      %877 = vmatpush1.msra.mxu0 0.0
      %878 = vmatprep.subr.mxu0 0.0
      %879 = vmatpush1.msra.mxu0 0.0
      %880 = vmatprep.subr.mxu0 0.0
      %881 = vmatpush1.msra.mxu0 0.0
      %882 = vmatprep.subr.mxu0 0.0
      %883 = vmatpush1.msra.mxu0 0.0
      %884 = vmatprep.subr.mxu0 0.0
      %885 = vmatpush1.msra.mxu0 0.0
      %886 = vmatprep.subr.mxu0 0.0
      %887 = vmatpush1.msra.mxu0 0.0
      %888 = vmatprep.subr.mxu0 0.0
      %889 = vmatpush1.msra.mxu0 0.0
      %890 = vmatprep.subr.mxu0 0.0
      %891 = vmatpush1.msra.mxu0 0.0
      %892 = vmatprep.subr.mxu0 0.0
      %893 = vmatpush1.msra.mxu0 0.0
      %894 = vmatprep.subr.mxu0 0.0
      %895 = vmatpush1.msra.mxu0 0.0
      %896 = vmatprep.subr.mxu0 0.0
      %897 = vmatpush1.msra.mxu0 0.0
      %898 = vmatprep.subr.mxu0 0.0
      %899 = vmatpush1.msra.mxu0 0.0
      %900 = vmatprep.subr.mxu0 0.0
      %901 = vmatpush1.msra.mxu0 0.0
      %902 = vmatprep.subr.mxu0 0.0
      %903 = vmatpush1.msra.mxu0 0.0
      %904 = vmatprep.subr.mxu0 0.0
      %905 = vmatpush1.msra.mxu0 0.0
      %906 = vmatprep.subr.mxu0 0.0
      %907 = vmatpush1.msra.mxu0 %v871
      %908 = vmatprep.subr.mxu0 0.0
      %909 = vmatpush2.msra.mxu0 0.0
      %910 = vmatprep.subr.mxu0 0.0
      %911 = vmatpush2.msra.mxu0 0.0
      %912 = vmatprep.subr.mxu0 0.0
      %913 = vmatpush2.msra.mxu0 0.0
      %914 = vmatprep.subr.mxu0 0.0
      %915 = vmatpush2.msra.mxu0 0.0
      %916 = vmatprep.subr.mxu0 0.0
      %917 = vmatpush2.msra.mxu0 0.0
      %918 = vmatprep.subr.mxu0 0.0
      %919 = vmatpush2.msra.mxu0 0.0
      %920 = vmatprep.subr.mxu0 0.0
      %921 = vmatpush2.msra.mxu0 0.0
      %922 = vmatprep.subr.mxu0 0.0
      %923 = vmatpush2.msra.mxu0 0.0
      %924 = vmatprep.subr.mxu0 0.0
      %925 = vmatpush2.msra.mxu0 0.0
      %926 = vmatprep.subr.mxu0 0.0
      %927 = vmatpush2.msra.mxu0 0.0
      %928 = vmatprep.subr.mxu0 0.0
      %929 = vmatpush2.msra.mxu0 0.0
      %930 = vmatprep.subr.mxu0 0.0
      %931 = vmatpush2.msra.mxu0 0.0
      %932 = vmatprep.subr.mxu0 0.0
      %933 = vmatpush2.msra.mxu0 0.0
      %934 = vmatprep.subr.mxu0 0.0
      %935 = vmatpush2.msra.mxu0 0.0
      %936 = vmatprep.subr.mxu0 0.0
      %937 = vmatpush2.msra.mxu0 0.0
      %938 = vmatprep.subr.mxu0 0.0
      %939 = vmatpush2.msra.mxu0 0.0
      %940 = vmatprep.mubr.f32.mxu0 0.0
      %941 = vmatmul.mubr.f32.gmra.mxu0 %v874
      %v942 = vpop.f32.mrf.mxu0
      %v943 = vadd.f32 0.0, %v942
      %v944 = vpop.f32.mrf.mxu0
      %945 = vdwg.mxu0
      %v946 = vmul.f32 %v943, %v869
      %v947 = vld [vmem:[%s2 + $0x10] sm:$0xff]
      %v949 = vsel %vm306, %v946, 0
      %951 = vmatprep.subr.mxu0 0.0
      %952 = vmatpush1.msra.mxu0 0.0
      %953 = vmatprep.subr.mxu0 0.0
      %954 = vmatpush1.msra.mxu0 0.0
      %955 = vmatprep.subr.mxu0 0.0
      %956 = vmatpush1.msra.mxu0 0.0
      %957 = vmatprep.subr.mxu0 0.0
      %958 = vmatpush1.msra.mxu0 0.0
      %959 = vmatprep.subr.mxu0 0.0
      %960 = vmatpush1.msra.mxu0 0.0
      %961 = vmatprep.subr.mxu0 0.0
      %962 = vmatpush1.msra.mxu0 0.0
      %963 = vmatprep.subr.mxu0 0.0
      %964 = vmatpush1.msra.mxu0 0.0
      %965 = vmatprep.subr.mxu0 0.0
      %966 = vmatpush1.msra.mxu0 0.0
      %967 = vmatprep.subr.mxu0 0.0
      %968 = vmatpush1.msra.mxu0 0.0
      %969 = vmatprep.subr.mxu0 0.0
      %970 = vmatpush1.msra.mxu0 0.0
      %971 = vmatprep.subr.mxu0 0.0
      %972 = vmatpush1.msra.mxu0 0.0
      %973 = vmatprep.subr.mxu0 0.0
      %974 = vmatpush1.msra.mxu0 0.0
      %975 = vmatprep.subr.mxu0 0.0
      %976 = vmatpush1.msra.mxu0 0.0
      %977 = vmatprep.subr.mxu0 0.0
      %978 = vmatpush1.msra.mxu0 0.0
      %979 = vmatprep.subr.mxu0 0.0
      %980 = vmatpush1.msra.mxu0 0.0
      %981 = vmatprep.subr.mxu0 0.0
      %982 = vmatpush1.msra.mxu0 %v947
      %983 = vmatprep.subr.mxu0 0.0
      %984 = vmatpush2.msra.mxu0 0.0
      %985 = vmatprep.subr.mxu0 0.0
      %986 = vmatpush2.msra.mxu0 0.0
      %987 = vmatprep.subr.mxu0 0.0
      %988 = vmatpush2.msra.mxu0 0.0
      %989 = vmatprep.subr.mxu0 0.0
      %990 = vmatpush2.msra.mxu0 0.0
      %991 = vmatprep.subr.mxu0 0.0
      %992 = vmatpush2.msra.mxu0 0.0
      %993 = vmatprep.subr.mxu0 0.0
      %994 = vmatpush2.msra.mxu0 0.0
      %995 = vmatprep.subr.mxu0 0.0
      %996 = vmatpush2.msra.mxu0 0.0
      %997 = vmatprep.subr.mxu0 0.0
      %998 = vmatpush2.msra.mxu0 0.0
      %999 = vmatprep.subr.mxu0 0.0
      %1000 = vmatpush2.msra.mxu0 0.0
      %1001 = vmatprep.subr.mxu0 0.0
      %1002 = vmatpush2.msra.mxu0 0.0
      %1003 = vmatprep.subr.mxu0 0.0
      %1004 = vmatpush2.msra.mxu0 0.0
      %1005 = vmatprep.subr.mxu0 0.0
      %1006 = vmatpush2.msra.mxu0 0.0
      %1007 = vmatprep.subr.mxu0 0.0
      %1008 = vmatpush2.msra.mxu0 0.0
      %1009 = vmatprep.subr.mxu0 0.0
      %1010 = vmatpush2.msra.mxu0 0.0
      %1011 = vmatprep.subr.mxu0 0.0
      %1012 = vmatpush2.msra.mxu0 0.0
      %1013 = vmatprep.subr.mxu0 0.0
      %1014 = vmatpush2.msra.mxu0 0.0
      %1015 = vmatprep.mubr.f32.mxu0 0.0
      %1016 = vmatmul.mubr.f32.gmra.mxu0 %v949
      %v1017 = vpop.f32.mrf.mxu0
      %v1018 = vadd.f32 0.0, %v1017
      %v1019 = vpop.f32.mrf.mxu0
      %1020 = vdwg.mxu0
      %v1021 = vadd.f32 %v779, %v1018
      %1022 = vrot.lane.b32.xlu0 %v297, 104
      %v1023 = vpop.permute.xlu0 %1022
      %1024 = vrot.lane.b32.xlu0 %v296, 72
      %v1025 = vpop.permute.xlu0 %1024
      %v1026 = vsel %vm306, %v1023, 0
      %v1028 = vsel %vm306, %v1025, 0
      %1030 = vmatprep.subr.mxu0 0.0
      %1031 = vmatpush1.xpose.msra.mxu0 0.0
      %1032 = vmatprep.subr.mxu0 0.0
      %1033 = vmatpush1.xpose.msra.mxu0 0.0
      %1034 = vmatprep.subr.mxu0 0.0
      %1035 = vmatpush1.xpose.msra.mxu0 0.0
      %1036 = vmatprep.subr.mxu0 0.0
      %1037 = vmatpush1.xpose.msra.mxu0 0.0
      %1038 = vmatprep.subr.mxu0 0.0
      %1039 = vmatpush1.xpose.msra.mxu0 0.0
      %1040 = vmatprep.subr.mxu0 0.0
      %1041 = vmatpush1.xpose.msra.mxu0 0.0
      %1042 = vmatprep.subr.mxu0 0.0
      %1043 = vmatpush1.xpose.msra.mxu0 0.0
      %1044 = vmatprep.subr.mxu0 0.0
      %1045 = vmatpush1.xpose.msra.mxu0 0.0
      %1046 = vmatprep.subr.mxu0 0.0
      %1047 = vmatpush1.xpose.msra.mxu0 0.0
      %1048 = vmatprep.subr.mxu0 0.0
      %1049 = vmatpush1.xpose.msra.mxu0 0.0
      %1050 = vmatprep.subr.mxu0 0.0
      %1051 = vmatpush1.xpose.msra.mxu0 0.0
      %1052 = vmatprep.subr.mxu0 0.0
      %1053 = vmatpush1.xpose.msra.mxu0 0.0
      %1054 = vmatprep.subr.mxu0 0.0
      %1055 = vmatpush1.xpose.msra.mxu0 0.0
      %1056 = vmatprep.subr.mxu0 0.0
      %1057 = vmatpush1.xpose.msra.mxu0 0.0
      %1058 = vmatprep.subr.mxu0 0.0
      %1059 = vmatpush1.xpose.msra.mxu0 0.0
      %1060 = vmatprep.subr.mxu0 0.0
      %1061 = vmatpush1.xpose.msra.mxu0 %v1028
      %1062 = vmatprep.subr.mxu0 0.0
      %1063 = vmatpush2.xpose.msra.mxu0 0.0
      %1064 = vmatprep.subr.mxu0 0.0
      %1065 = vmatpush2.xpose.msra.mxu0 0.0
      %1066 = vmatprep.subr.mxu0 0.0
      %1067 = vmatpush2.xpose.msra.mxu0 0.0
      %1068 = vmatprep.subr.mxu0 0.0
      %1069 = vmatpush2.xpose.msra.mxu0 0.0
      %1070 = vmatprep.subr.mxu0 0.0
      %1071 = vmatpush2.xpose.msra.mxu0 0.0
      %1072 = vmatprep.subr.mxu0 0.0
      %1073 = vmatpush2.xpose.msra.mxu0 0.0
      %1074 = vmatprep.subr.mxu0 0.0
      %1075 = vmatpush2.xpose.msra.mxu0 0.0
      %1076 = vmatprep.subr.mxu0 0.0
      %1077 = vmatpush2.xpose.msra.mxu0 0.0
      %1078 = vmatprep.subr.mxu0 0.0
      %1079 = vmatpush2.xpose.msra.mxu0 0.0
      %1080 = vmatprep.subr.mxu0 0.0
      %1081 = vmatpush2.xpose.msra.mxu0 0.0
      %1082 = vmatprep.subr.mxu0 0.0
      %1083 = vmatpush2.xpose.msra.mxu0 0.0
      %1084 = vmatprep.subr.mxu0 0.0
      %1085 = vmatpush2.xpose.msra.mxu0 0.0
      %1086 = vmatprep.subr.mxu0 0.0
      %1087 = vmatpush2.xpose.msra.mxu0 0.0
      %1088 = vmatprep.subr.mxu0 0.0
      %1089 = vmatpush2.xpose.msra.mxu0 0.0
      %1090 = vmatprep.subr.mxu0 0.0
      %1091 = vmatpush2.xpose.msra.mxu0 0.0
      %1092 = vmatprep.subr.mxu0 0.0
      %1093 = vmatpush2.xpose.msra.mxu0 0.0
      %1094 = vmatprep.mubr.f32.mxu0 0.0
      %1095 = vmatmul.mubr.f32.gmra.mxu0 %v1026
      %v1096 = vpop.f32.mrf.mxu0
      %v1097 = vadd.f32 %v302, %v1096
      %v1098 = vpop.f32.mrf.mxu0
      %1099 = vdwg.mxu0
      %v1100 = vsel %vm306, %v1097, -inf
      %1101 = vmax.xlane.f32.xlu0 %v1100
      %v1102 = vpop.xlane.xlu0 %1101
      %v1103 = vsub.f32 %v1097, %v1102
      %v1104 = vmul.f32 %v1103, 1.442695
      %v1105 = vpow.pop %v1104
      %v1106 = vsel %vm306, %v1105, 0.0
      %1107 = vadd.xlane.f32.xlu0 %v1106
      %v1108 = vpop.xlane.xlu0 %1107
      %v1109 = vrcp.pop %v1108
      %1110 = vrot.lane.b32.xlu0 %v296, 40
      %v1111 = vpop.permute.xlu0 %1110
      %v1114 = vsel %vm306, %v1105, 0
      %1116 = vmatprep.subr.mxu0 0.0
      %1117 = vmatpush1.msra.mxu0 0.0
      %1118 = vmatprep.subr.mxu0 0.0
      %1119 = vmatpush1.msra.mxu0 0.0
      %1120 = vmatprep.subr.mxu0 0.0
      %1121 = vmatpush1.msra.mxu0 0.0
      %1122 = vmatprep.subr.mxu0 0.0
      %1123 = vmatpush1.msra.mxu0 0.0
      %1124 = vmatprep.subr.mxu0 0.0
      %1125 = vmatpush1.msra.mxu0 0.0
      %1126 = vmatprep.subr.mxu0 0.0
      %1127 = vmatpush1.msra.mxu0 0.0
      %1128 = vmatprep.subr.mxu0 0.0
      %1129 = vmatpush1.msra.mxu0 0.0
      %1130 = vmatprep.subr.mxu0 0.0
      %1131 = vmatpush1.msra.mxu0 0.0
      %1132 = vmatprep.subr.mxu0 0.0
      %1133 = vmatpush1.msra.mxu0 0.0
      %1134 = vmatprep.subr.mxu0 0.0
      %1135 = vmatpush1.msra.mxu0 0.0
      %1136 = vmatprep.subr.mxu0 0.0
      %1137 = vmatpush1.msra.mxu0 0.0
      %1138 = vmatprep.subr.mxu0 0.0
      %1139 = vmatpush1.msra.mxu0 0.0
      %1140 = vmatprep.subr.mxu0 0.0
      %1141 = vmatpush1.msra.mxu0 0.0
      %1142 = vmatprep.subr.mxu0 0.0
      %1143 = vmatpush1.msra.mxu0 0.0
      %1144 = vmatprep.subr.mxu0 0.0
      %1145 = vmatpush1.msra.mxu0 0.0
      %1146 = vmatprep.subr.mxu0 0.0
      %1147 = vmatpush1.msra.mxu0 %v1111
      %1148 = vmatprep.subr.mxu0 0.0
      %1149 = vmatpush2.msra.mxu0 0.0
      %1150 = vmatprep.subr.mxu0 0.0
      %1151 = vmatpush2.msra.mxu0 0.0
      %1152 = vmatprep.subr.mxu0 0.0
      %1153 = vmatpush2.msra.mxu0 0.0
      %1154 = vmatprep.subr.mxu0 0.0
      %1155 = vmatpush2.msra.mxu0 0.0
      %1156 = vmatprep.subr.mxu0 0.0
      %1157 = vmatpush2.msra.mxu0 0.0
      %1158 = vmatprep.subr.mxu0 0.0
      %1159 = vmatpush2.msra.mxu0 0.0
      %1160 = vmatprep.subr.mxu0 0.0
      %1161 = vmatpush2.msra.mxu0 0.0
      %1162 = vmatprep.subr.mxu0 0.0
      %1163 = vmatpush2.msra.mxu0 0.0
      %1164 = vmatprep.subr.mxu0 0.0
      %1165 = vmatpush2.msra.mxu0 0.0
      %1166 = vmatprep.subr.mxu0 0.0
      %1167 = vmatpush2.msra.mxu0 0.0
      %1168 = vmatprep.subr.mxu0 0.0
      %1169 = vmatpush2.msra.mxu0 0.0
      %1170 = vmatprep.subr.mxu0 0.0
      %1171 = vmatpush2.msra.mxu0 0.0
      %1172 = vmatprep.subr.mxu0 0.0
      %1173 = vmatpush2.msra.mxu0 0.0
      %1174 = vmatprep.subr.mxu0 0.0
      %1175 = vmatpush2.msra.mxu0 0.0
      %1176 = vmatprep.subr.mxu0 0.0
      %1177 = vmatpush2.msra.mxu0 0.0
      %1178 = vmatprep.subr.mxu0 0.0
      %1179 = vmatpush2.msra.mxu0 0.0
      %1180 = vmatprep.mubr.f32.mxu0 0.0
      %1181 = vmatmul.mubr.f32.gmra.mxu0 %v1114
      %v1182 = vpop.f32.mrf.mxu0
      %v1183 = vadd.f32 0.0, %v1182
      %v1184 = vpop.f32.mrf.mxu0
      %1185 = vdwg.mxu0
      %v1186 = vmul.f32 %v1183, %v1109
      %v1187 = vld [vmem:[%s2 + $0x18] sm:$0xff]
      %v1189 = vsel %vm306, %v1186, 0
      %1191 = vmatprep.subr.mxu0 0.0
      %1192 = vmatpush1.msra.mxu0 0.0
      %1193 = vmatprep.subr.mxu0 0.0
      %1194 = vmatpush1.msra.mxu0 0.0
      %1195 = vmatprep.subr.mxu0 0.0
      %1196 = vmatpush1.msra.mxu0 0.0
      %1197 = vmatprep.subr.mxu0 0.0
      %1198 = vmatpush1.msra.mxu0 0.0
      %1199 = vmatprep.subr.mxu0 0.0
      %1200 = vmatpush1.msra.mxu0 0.0
      %1201 = vmatprep.subr.mxu0 0.0
      %1202 = vmatpush1.msra.mxu0 0.0
      %1203 = vmatprep.subr.mxu0 0.0
      %1204 = vmatpush1.msra.mxu0 0.0
      %1205 = vmatprep.subr.mxu0 0.0
      %1206 = vmatpush1.msra.mxu0 0.0
      %1207 = vmatprep.subr.mxu0 0.0
      %1208 = vmatpush1.msra.mxu0 0.0
      %1209 = vmatprep.subr.mxu0 0.0
      %1210 = vmatpush1.msra.mxu0 0.0
      %1211 = vmatprep.subr.mxu0 0.0
      %1212 = vmatpush1.msra.mxu0 0.0
      %1213 = vmatprep.subr.mxu0 0.0
      %1214 = vmatpush1.msra.mxu0 0.0
      %1215 = vmatprep.subr.mxu0 0.0
      %1216 = vmatpush1.msra.mxu0 0.0
      %1217 = vmatprep.subr.mxu0 0.0
      %1218 = vmatpush1.msra.mxu0 0.0
      %1219 = vmatprep.subr.mxu0 0.0
      %1220 = vmatpush1.msra.mxu0 0.0
      %1221 = vmatprep.subr.mxu0 0.0
      %1222 = vmatpush1.msra.mxu0 %v1187
      %1223 = vmatprep.subr.mxu0 0.0
      %1224 = vmatpush2.msra.mxu0 0.0
      %1225 = vmatprep.subr.mxu0 0.0
      %1226 = vmatpush2.msra.mxu0 0.0
      %1227 = vmatprep.subr.mxu0 0.0
      %1228 = vmatpush2.msra.mxu0 0.0
      %1229 = vmatprep.subr.mxu0 0.0
      %1230 = vmatpush2.msra.mxu0 0.0
      %1231 = vmatprep.subr.mxu0 0.0
      %1232 = vmatpush2.msra.mxu0 0.0
      %1233 = vmatprep.subr.mxu0 0.0
      %1234 = vmatpush2.msra.mxu0 0.0
      %1235 = vmatprep.subr.mxu0 0.0
      %1236 = vmatpush2.msra.mxu0 0.0
      %1237 = vmatprep.subr.mxu0 0.0
      %1238 = vmatpush2.msra.mxu0 0.0
      %1239 = vmatprep.subr.mxu0 0.0
      %1240 = vmatpush2.msra.mxu0 0.0
      %1241 = vmatprep.subr.mxu0 0.0
      %1242 = vmatpush2.msra.mxu0 0.0
      %1243 = vmatprep.subr.mxu0 0.0
      %1244 = vmatpush2.msra.mxu0 0.0
      %1245 = vmatprep.subr.mxu0 0.0
      %1246 = vmatpush2.msra.mxu0 0.0
      %1247 = vmatprep.subr.mxu0 0.0
      %1248 = vmatpush2.msra.mxu0 0.0
      %1249 = vmatprep.subr.mxu0 0.0
      %1250 = vmatpush2.msra.mxu0 0.0
      %1251 = vmatprep.subr.mxu0 0.0
      %1252 = vmatpush2.msra.mxu0 0.0
      %1253 = vmatprep.subr.mxu0 0.0
      %1254 = vmatpush2.msra.mxu0 0.0
      %1255 = vmatprep.mubr.f32.mxu0 0.0
      %1256 = vmatmul.mubr.f32.gmra.mxu0 %v1189
      %v1257 = vpop.f32.mrf.mxu0
      %v1258 = vadd.f32 0.0, %v1257
      %v1259 = vpop.f32.mrf.mxu0
      %1260 = vdwg.mxu0
      %v1261 = vadd.f32 %v1021, %v1258
      %v1262 = vld [vmem:[%s3] sm:$0x1]
      %v1264 = vlaneseq
      %v1265 = vshrl.u32 %v1264, 7
      %v1266 = vsub.s32 0, %v1265
      %v1267 = vrot.slane %v1262, %v1266
      %v1269 = vadd.f32 %v1261, %v1267
      %v1270 = vld [vmem:[%s288] sm:$0xff]
      %v1271 = vadd.f32 %v1269, %v1270
      %vm1272 = vcmask 261120
      %1273 = vst.msk [vmem:[%s295] sm:$0xff] %vm1272, %v1271
      %p1274 = scmp.lt.s32.totalorder %s20, 1
      %s1275 = scalar_select %p1274, %s20, 1
      %p1276 = scmp.lt.s32.totalorder %s21, 0
      %s1277 = scalar_select %p1276, %s21, 0
      %s1278 = sadd.s32 %s1277, %s1275
      %s1279 = smul.addr %s1278, 8
      %s1280 = scalar_lea.vmem %s5, %s1279
      // Predicated region
      $region41: #{decoder_forward.13} parent=39 // pred_check
        %p1281 = pneg %p172
      $region42: #{decoder_forward.13} parent=39 // pred_check_branch
        %1283 = sbr.rel (%p1281) target = $region44
      $region43: #{decoder_forward.13} parent=39 // pred_region
        _
      $region44: #{decoder_forward.13} parent=39 // pred_fallthru
        _
    $region40: #{decoder_forward.13} parent=5 // pred_fallthru
      _
    %p1284 = scmp.le.s32.totalorder 2, %s11
    // Predicated region
    $region45: #{decoder_forward.13} parent=5 // pred_check
      %p1285 = pneg %p1284
    $region46: #{decoder_forward.13} parent=5 // pred_check_branch
      %1287 = sbr.rel (%p1285) target = $region48
    $region47: #{decoder_forward.13} parent=5 // pred_region
      %s1288 = ssub.s32 %s11, 2
      // Predicated region
      $region49: #{decoder_forward.13} parent=47 // pred_check
        %p1289 = pneg %p178
      $region50: #{decoder_forward.13} parent=47 // pred_check_branch
        %1291 = sbr.rel (%p1289) target = $region52
      $region51: #{decoder_forward.13} parent=47 // pred_region
        %p1292 = scmp.lt.s32.totalorder %s22, 1
        %s1293 = scalar_select %p1292, %s22, 1
        %p1294 = scmp.lt.s32.totalorder %s23, 0
        %s1295 = scalar_select %p1294, %s23, 0
        %s1296 = sadd.s32 %s1295, %s1293
        %s1297 = smul.addr %s1296, 8
        %s1298 = scalar_lea.vmem %s5, %s1297
      $region52: #{decoder_forward.13} parent=47 // pred_fallthru
        _
    $region48: #{decoder_forward.13} parent=5 // pred_fallthru
      _
  $region6: #{decoder_forward.13} parent=0 // loop_footer
    %s15 = sadd.s32 1, %s11
  $region7: #{decoder_forward.13} parent=0 // loop_footer_branch
    %10 = sbr.rel target = $region3
  $region8: #{decoder_forward.13} parent=0 // loop_exit
    _

// kernel: decoder_forward.17
$region0: #{decoder_forward.17}
  #allocation0 [shape = 'u32[]', space=smem, size = 0x4, offset = 0x4, fixed_abs, tag = 'smem constant byte address 0x4 - core index']
  #allocation1 [shape = 'u32[144,128]{1,0:T(1,128)}', space=vmem, size = 0x12000, scoped, tag = 'internal scratch']
  #allocation2 [shape = 'f32[16,32]{1,0:T(8,128)}', space=vmem, size = 0x2000, scoped, tag = 'scratch operand']
  %s0 = inlined_call_operand.vmem [shape: f32[16,32], index: 0, kind: input, shape index: {}]
  %s1 = inlined_call_operand.vmem [shape: f32[1,32], index: 1, kind: input, shape index: {}]
  %s2 = inlined_call_operand.vmem [shape: f32[1,32], index: 2, kind: input, shape index: {}]
  %s3 = inlined_call_operand.vmem [shape: f32[32,64], index: 3, kind: input, shape index: {}]
  %s4 = inlined_call_operand.vmem [shape: f32[1,64], index: 4, kind: input, shape index: {}]
  %s5 = inlined_call_operand.vmem [shape: f32[64,32], index: 5, kind: input, shape index: {}]
  %s6 = inlined_call_operand.vmem [shape: f32[1,32], index: 6, kind: input, shape index: {}]
  %s7 = inlined_call_operand.vmem [shape: f32[16,32], index: 7, kind: output, shape index: {}]
  %s8 = sld [smem:[#allocation0]]
  $region46: #{decoder_forward.17} parent=0
    _
  %s10 = ssub.s32 1, %s8
  %s11 = scalar_select 0, %s10, %s8
  // Predicated region
  $region2: #{decoder_forward.17} parent=0 // pred_check
    _
  $region3: #{decoder_forward.17} parent=0 // pred_check_branch
    %13 = sbr.rel (0) target = $region5
  $region4: #{decoder_forward.17} parent=0 // pred_region
    _
  $region5: #{decoder_forward.17} parent=0 // pred_fallthru
    _
  // Predicated region
  $region6: #{decoder_forward.17} parent=0 // pred_check
    _
  $region7: #{decoder_forward.17} parent=0 // pred_check_branch
    %15 = sbr.rel (0) target = $region9
  $region8: #{decoder_forward.17} parent=0 // pred_region
    _
  $region9: #{decoder_forward.17} parent=0 // pred_fallthru
    _
  // Predicated region
  $region10: #{decoder_forward.17} parent=0 // pred_check
    _
  $region11: #{decoder_forward.17} parent=0 // pred_check_branch
    %17 = sbr.rel (0) target = $region13
  $region12: #{decoder_forward.17} parent=0 // pred_region
    _
  $region13: #{decoder_forward.17} parent=0 // pred_fallthru
    _
  // Predicated region
  $region14: #{decoder_forward.17} parent=0 // pred_check
    _
  $region15: #{decoder_forward.17} parent=0 // pred_check_branch
    %19 = sbr.rel (0) target = $region17
  $region16: #{decoder_forward.17} parent=0 // pred_region
    _
  $region17: #{decoder_forward.17} parent=0 // pred_fallthru
    _
  // Predicated region
  $region18: #{decoder_forward.17} parent=0 // pred_check
    _
  $region19: #{decoder_forward.17} parent=0 // pred_check_branch
    %21 = sbr.rel (0) target = $region21
  $region20: #{decoder_forward.17} parent=0 // pred_region
    _
  $region21: #{decoder_forward.17} parent=0 // pred_fallthru
    _
  // Predicated region
  $region22: #{decoder_forward.17} parent=0 // pred_check
    _
  $region23: #{decoder_forward.17} parent=0 // pred_check_branch
    %23 = sbr.rel (0) target = $region25
  $region24: #{decoder_forward.17} parent=0 // pred_region
    _
  $region25: #{decoder_forward.17} parent=0 // pred_fallthru
    _
  // Predicated region
  $region26: #{decoder_forward.17} parent=0 // pred_check
    _
  $region27: #{decoder_forward.17} parent=0 // pred_check_branch
    %25 = sbr.rel (0) target = $region29
  $region28: #{decoder_forward.17} parent=0 // pred_region
    _
  $region29: #{decoder_forward.17} parent=0 // pred_fallthru
    _
  %v26 = vld [vmem:[%s0] sm:$0xff]
  %v27 = vld [vmem:[%s0 + $0x8] sm:$0xff]
  %vm28 = vcmask 261120
  %v29 = vsel %vm28, %v26, 0.0
  %30 = vadd.xlane.f32.xlu0 %v29
  %v31 = vpop.xlane.xlu0 %30
  %v32 = vsel %vm28, %v27, 0.0
  %33 = vadd.xlane.f32.xlu0 %v32
  %v34 = vpop.xlane.xlu0 %33
  %v35 = vrcp.pop 32.0
  %v36 = vmul.f32 %v31, %v35
  %v37 = vmul.f32 %v34, %v35
  %v38 = vsub.f32 %v26, %v36
  %v39 = vsub.f32 %v27, %v37
  %v40 = vmul.f32 %v38, %v38
  %v41 = vmul.f32 %v39, %v39
  %v42 = vsel %vm28, %v40, 0.0
  %43 = vadd.xlane.f32.xlu0 %v42
  %v44 = vpop.xlane.xlu0 %43
  %v45 = vsel %vm28, %v41, 0.0
  %46 = vadd.xlane.f32.xlu0 %v45
  %v47 = vpop.xlane.xlu0 %46
  %v48 = vmul.f32 %v44, %v35
  %v49 = vmul.f32 %v47, %v35
  %v50 = vadd.f32 %v48, 1e-05
  %v51 = vadd.f32 %v49, 1e-05
  %v52 = vrsqrt.pop %v50
  %v53 = vrsqrt.pop %v51
  %v54 = vmul.f32 %v38, %v52
  %v55 = vmul.f32 %v39, %v53
  %v56 = vld [vmem:[%s1] sm:$0x1]
  %v58 = vlaneseq
  %v59 = vshrl.u32 %v58, 7
  %v60 = vsub.s32 0, %v59
  %v61 = vrot.slane %v56, %v60
  %v63 = vmul.f32 %v54, %v61
  %v64 = vmul.f32 %v55, %v61
  %v65 = vld [vmem:[%s2] sm:$0x1]
  %v67 = vlaneseq
  %v68 = vshrl.u32 %v67, 7
  %v69 = vsub.s32 0, %v68
  %v70 = vrot.slane %v65, %v69
  %v72 = vadd.f32 %v63, %v70
  %v73 = vadd.f32 %v64, %v70
  %v74 = vld [vmem:[%s3] sm:$0xff]
  %v75 = vld [vmem:[%s3 + $0x8] sm:$0xff]
  %v76 = vld [vmem:[%s3 + $0x10] sm:$0xff]
  %v77 = vld [vmem:[%s3 + $0x18] sm:$0xff]
  %v78 = vld [vmem:[%s4] sm:$0x1]
  %v80 = vlaneseq
  %v81 = vshrl.u32 %v80, 7
  %v82 = vsub.s32 0, %v81
  %v83 = vrot.slane %v78, %v82
  %v86 = vsel %vm28, %v72, 0
  %v89 = vsel %vm28, %v73, 0
  %91 = vmatprep.subr.mxu0 0.0
  %92 = vmatpush1.msra.mxu0 0.0
  %93 = vmatprep.subr.mxu0 0.0
  %94 = vmatpush1.msra.mxu0 0.0
  %95 = vmatprep.subr.mxu0 0.0
  %96 = vmatpush1.msra.mxu0 0.0
  %97 = vmatprep.subr.mxu0 0.0
  %98 = vmatpush1.msra.mxu0 0.0
  %99 = vmatprep.subr.mxu0 0.0
  %100 = vmatpush1.msra.mxu0 0.0
  %101 = vmatprep.subr.mxu0 0.0
  %102 = vmatpush1.msra.mxu0 0.0
  %103 = vmatprep.subr.mxu0 0.0
  %104 = vmatpush1.msra.mxu0 0.0
  %105 = vmatprep.subr.mxu0 0.0
  %106 = vmatpush1.msra.mxu0 0.0
  %107 = vmatprep.subr.mxu0 0.0
  %108 = vmatpush1.msra.mxu0 0.0
  %109 = vmatprep.subr.mxu0 0.0
  %110 = vmatpush1.msra.mxu0 0.0
  %111 = vmatprep.subr.mxu0 0.0
  %112 = vmatpush1.msra.mxu0 0.0
  %113 = vmatprep.subr.mxu0 0.0
  %114 = vmatpush1.msra.mxu0 0.0
  %115 = vmatprep.subr.mxu0 0.0
  %116 = vmatpush1.msra.mxu0 %v77
  %117 = vmatprep.subr.mxu0 0.0
  %118 = vmatpush1.msra.mxu0 %v76
  %119 = vmatprep.subr.mxu0 0.0
  %120 = vmatpush1.msra.mxu0 %v75
  %121 = vmatprep.subr.mxu0 0.0
  %122 = vmatpush1.msra.mxu0 %v74
  %123 = vmatprep.subr.mxu0 0.0
  %124 = vmatpush2.msra.mxu0 0.0
  %125 = vmatprep.subr.mxu0 0.0
  %126 = vmatpush2.msra.mxu0 0.0
  %127 = vmatprep.subr.mxu0 0.0
  %128 = vmatpush2.msra.mxu0 0.0
  %129 = vmatprep.subr.mxu0 0.0
  %130 = vmatpush2.msra.mxu0 0.0
  %131 = vmatprep.subr.mxu0 0.0
  %132 = vmatpush2.msra.mxu0 0.0
  %133 = vmatprep.subr.mxu0 0.0
  %134 = vmatpush2.msra.mxu0 0.0
  %135 = vmatprep.subr.mxu0 0.0
  %136 = vmatpush2.msra.mxu0 0.0
  %137 = vmatprep.subr.mxu0 0.0
  %138 = vmatpush2.msra.mxu0 0.0
  %139 = vmatprep.subr.mxu0 0.0
  %140 = vmatpush2.msra.mxu0 0.0
  %141 = vmatprep.subr.mxu0 0.0
  %142 = vmatpush2.msra.mxu0 0.0
  %143 = vmatprep.subr.mxu0 0.0
  %144 = vmatpush2.msra.mxu0 0.0
  %145 = vmatprep.subr.mxu0 0.0
  %146 = vmatpush2.msra.mxu0 0.0
  %147 = vmatprep.subr.mxu0 0.0
  %148 = vmatpush2.msra.mxu0 0.0
  %149 = vmatprep.subr.mxu0 0.0
  %150 = vmatpush2.msra.mxu0 0.0
  %151 = vmatprep.subr.mxu0 0.0
  %152 = vmatpush2.msra.mxu0 0.0
  %153 = vmatprep.subr.mxu0 0.0
  %154 = vmatpush2.msra.mxu0 0.0
  %155 = vmatprep.mubr.f32.mxu0 0.0
  %156 = vmatmul.mubr.f32.gmra.mxu0 %v86
  %v157 = vpop.f32.mrf.mxu0
  %v158 = vadd.f32 %v83, %v157
  %v159 = vpop.f32.mrf.mxu0
  %160 = vmatprep.mubr.f32.mxu0 0.0
  %161 = vmatmul.mubr.f32.gmra.mxu0 %v89
  %v162 = vpop.f32.mrf.mxu0
  %v163 = vadd.f32 %v83, %v162
  %v164 = vpop.f32.mrf.mxu0
  %165 = vdwg.mxu0
  %v166 = vmax.f32 %v158, 0.0
  %v167 = vmax.f32 %v163, 0.0
  %v168 = vld [vmem:[%s5] sm:$0xff]
  %v169 = vld [vmem:[%s5 + $0x8] sm:$0xff]
  %v170 = vld [vmem:[%s5 + $0x10] sm:$0xff]
  %v171 = vld [vmem:[%s5 + $0x18] sm:$0xff]
  %v172 = vld [vmem:[%s5 + $0x20] sm:$0xff]
  %v173 = vld [vmem:[%s5 + $0x28] sm:$0xff]
  %v174 = vld [vmem:[%s5 + $0x30] sm:$0xff]
  %v175 = vld [vmem:[%s5 + $0x38] sm:$0xff]
  %vm176 = vcmask 523264
  %v178 = vsel %vm176, %v166, 0
  %v181 = vsel %vm176, %v167, 0
  %183 = vmatprep.subr.mxu0 0.0
  %184 = vmatpush1.msra.mxu0 0.0
  %185 = vmatprep.subr.mxu0 0.0
  %186 = vmatpush1.msra.mxu0 0.0
  %187 = vmatprep.subr.mxu0 0.0
  %188 = vmatpush1.msra.mxu0 0.0
  %189 = vmatprep.subr.mxu0 0.0
  %190 = vmatpush1.msra.mxu0 0.0
  %191 = vmatprep.subr.mxu0 0.0
  %192 = vmatpush1.msra.mxu0 0.0
  %193 = vmatprep.subr.mxu0 0.0
  %194 = vmatpush1.msra.mxu0 0.0
  %195 = vmatprep.subr.mxu0 0.0
  %196 = vmatpush1.msra.mxu0 0.0
  %197 = vmatprep.subr.mxu0 0.0
  %198 = vmatpush1.msra.mxu0 0.0
  %199 = vmatprep.subr.mxu0 0.0
  %200 = vmatpush1.msra.mxu0 %v175
  %201 = vmatprep.subr.mxu0 0.0
  %202 = vmatpush1.msra.mxu0 %v174
  %203 = vmatprep.subr.mxu0 0.0
  %204 = vmatpush1.msra.mxu0 %v173
  %205 = vmatprep.subr.mxu0 0.0
  %206 = vmatpush1.msra.mxu0 %v172
  %207 = vmatprep.subr.mxu0 0.0
  %208 = vmatpush1.msra.mxu0 %v171
  %209 = vmatprep.subr.mxu0 0.0
  %210 = vmatpush1.msra.mxu0 %v170
  %211 = vmatprep.subr.mxu0 0.0
  %212 = vmatpush1.msra.mxu0 %v169
  %213 = vmatprep.subr.mxu0 0.0
  %214 = vmatpush1.msra.mxu0 %v168
  %215 = vmatprep.subr.mxu0 0.0
  %216 = vmatpush2.msra.mxu0 0.0
  %217 = vmatprep.subr.mxu0 0.0
  %218 = vmatpush2.msra.mxu0 0.0
  %219 = vmatprep.subr.mxu0 0.0
  %220 = vmatpush2.msra.mxu0 0.0
  %221 = vmatprep.subr.mxu0 0.0
  %222 = vmatpush2.msra.mxu0 0.0
  %223 = vmatprep.subr.mxu0 0.0
  %224 = vmatpush2.msra.mxu0 0.0
  %225 = vmatprep.subr.mxu0 0.0
  %226 = vmatpush2.msra.mxu0 0.0
  %227 = vmatprep.subr.mxu0 0.0
  %228 = vmatpush2.msra.mxu0 0.0
  %229 = vmatprep.subr.mxu0 0.0
  %230 = vmatpush2.msra.mxu0 0.0
  %231 = vmatprep.subr.mxu0 0.0
  %232 = vmatpush2.msra.mxu0 0.0
  %233 = vmatprep.subr.mxu0 0.0
  %234 = vmatpush2.msra.mxu0 0.0
  %235 = vmatprep.subr.mxu0 0.0
  %236 = vmatpush2.msra.mxu0 0.0
  %237 = vmatprep.subr.mxu0 0.0
  %238 = vmatpush2.msra.mxu0 0.0
  %239 = vmatprep.subr.mxu0 0.0
  %240 = vmatpush2.msra.mxu0 0.0
  %241 = vmatprep.subr.mxu0 0.0
  %242 = vmatpush2.msra.mxu0 0.0
  %243 = vmatprep.subr.mxu0 0.0
  %244 = vmatpush2.msra.mxu0 0.0
  %245 = vmatprep.subr.mxu0 0.0
  %246 = vmatpush2.msra.mxu0 0.0
  %247 = vmatprep.mubr.f32.mxu0 0.0
  %248 = vmatmul.mubr.f32.gmra.mxu0 %v178
  %v249 = vpop.f32.mrf.mxu0
  %v250 = vadd.f32 0.0, %v249
  %v251 = vpop.f32.mrf.mxu0
  %252 = vmatprep.mubr.f32.mxu0 0.0
  %253 = vmatmul.mubr.f32.gmra.mxu0 %v181
  %v254 = vpop.f32.mrf.mxu0
  %v255 = vadd.f32 0.0, %v254
  %v256 = vpop.f32.mrf.mxu0
  %257 = vdwg.mxu0
  %p258 = scmp.eq.s32.totalorder 0, 0
  // Predicated region
  $region30: #{decoder_forward.17} parent=0 // pred_check
    %p259 = pneg %p258
  $region31: #{decoder_forward.17} parent=0 // pred_check_branch
    %261 = sbr.rel (%p259) target = $region33
  $region32: #{decoder_forward.17} parent=0 // pred_region
    %262 = vst.msk [vmem:[#allocation2] sm:$0xff] %vm28, 0.0
    %263 = vst.msk [vmem:[#allocation2 + $0x8] sm:$0xff] %vm28, 0.0
  $region33: #{decoder_forward.17} parent=0 // pred_fallthru
    _
  %v264 = vld [vmem:[#allocation2] sm:$0xff]
  %v265 = vld [vmem:[#allocation2 + $0x8] sm:$0xff]
  %v266 = vadd.f32 %v264, %v250
  %v267 = vadd.f32 %v265, %v255
  %268 = vst.msk [vmem:[#allocation2] sm:$0xff] %vm28, %v266
  %269 = vst.msk [vmem:[#allocation2 + $0x8] sm:$0xff] %vm28, %v267
  // Predicated region
  $region34: #{decoder_forward.17} parent=0 // pred_check
    %p270 = pneg %p258
  $region35: #{decoder_forward.17} parent=0 // pred_check_branch
    %272 = sbr.rel (%p270) target = $region37
  $region36: #{decoder_forward.17} parent=0 // pred_region
    %v273 = vld [vmem:[#allocation2] sm:$0xff]
    %v274 = vld [vmem:[#allocation2 + $0x8] sm:$0xff]
    %v275 = vld [vmem:[%s6] sm:$0x1]
    %v277 = vlaneseq
    %v278 = vshrl.u32 %v277, 7
    %v279 = vsub.s32 0, %v278
    %v280 = vrot.slane %v275, %v279
    %v282 = vadd.f32 %v273, %v280
    %v283 = vadd.f32 %v274, %v280
    %v284 = vadd.f32 %v282, %v26
    %v285 = vadd.f32 %v283, %v27
    %286 = vst.msk [vmem:[%s7] sm:$0xff] %vm28, %v284
    %287 = vst.msk [vmem:[%s7 + $0x8] sm:$0xff] %vm28, %v285
  $region37: #{decoder_forward.17} parent=0 // pred_fallthru
    _
  // Predicated region
  $region38: #{decoder_forward.17} parent=0 // pred_check
    _
  $region39: #{decoder_forward.17} parent=0 // pred_check_branch
    %289 = sbr.rel (0) target = $region41
  $region40: #{decoder_forward.17} parent=0 // pred_region
    _
  $region41: #{decoder_forward.17} parent=0 // pred_fallthru
    _
  // Predicated region
  $region42: #{decoder_forward.17} parent=0 // pred_check
    _
  $region43: #{decoder_forward.17} parent=0 // pred_check_branch
    %291 = sbr.rel (0) target = $region45
  $region44: #{decoder_forward.17} parent=0 // pred_region
    _
  $region45: #{decoder_forward.17} parent=0 // pred_fallthru
    _

// kernel: decoder_forward.16
$region0: #{decoder_forward.16}
  #allocation0 [shape = 'u32[]', space=smem, size = 0x4, offset = 0x4, fixed_abs, tag = 'smem constant byte address 0x4 - core index']
  #allocation1 [shape = 'u32[144,128]{1,0:T(1,128)}', space=vmem, size = 0x12000, scoped, tag = 'internal scratch']
  %s0 = inlined_call_operand.vmem [shape: f32[2,8,32], index: 0, kind: input, shape index: {}]
  %s1 = inlined_call_operand.vmem [shape: f32[2,8,64], index: 1, kind: input, shape index: {}]
  %s2 = inlined_call_operand.vmem [shape: s8[2,1,8], index: 2, kind: input, shape index: {}]
  %s3 = inlined_call_operand.vmem [shape: f32[32,32], index: 3, kind: input, shape index: {}]
  %s4 = inlined_call_operand.vmem [shape: f32[1,32], index: 4, kind: input, shape index: {}]
  %s5 = inlined_call_operand.vmem [shape: f32[2,8,32], index: 5, kind: input, shape index: {}]
  %s6 = inlined_call_operand.vmem [shape: f32[2,8,32], index: 6, kind: output, shape index: {}]
  %s7 = sld [smem:[#allocation0]]
  $region57: #{decoder_forward.16} parent=0
    _
  %s9 = ssub.s32 1, %s7
  %s10 = scalar_select 0, %s9, %s7
  loop: start=0, step=1, limit=4
  $region2: #{decoder_forward.16} parent=0 // loop_pre_header
    _
  $region3: #{decoder_forward.16} parent=0 // loop_header
    %s12 = sphi 0, %s16
    %p13 = scmp.ge.s32.totalorder %s12, 4
    %s19 = sphi 0, %s31
    %s20 = sphi 0, %s27
    %s21 = sphi 0, %s19
    %s22 = sphi 0, %s20
    %s23 = sphi 0, %s21
    %s24 = sphi 0, %s22
    %s36 = sphi 0, %s38
    %s39 = sphi 0, %s36
    %s40 = sphi 0, %s39
    %s56 = sphi 0, %s40
    %s62 = sphi 0, %s64
    %s65 = sphi 0, %s62
    %s66 = sphi 0, %s65
    %s82 = sphi 0, %s66
    %s88 = sphi 0, %s90
    %s91 = sphi 0, %s88
    %s92 = sphi 0, %s91
    %s108 = sphi 0, %s92
    %s112 = sphi 0, %s112
    %s114 = sphi 0, %s112
    %s115 = sphi 0, %s114
    %s129 = sphi 0, %s115
    %s133 = sphi 0, %s133
    %s135 = sphi 0, %s133
    %s136 = sphi 0, %s135
    %s150 = sphi 0, %s136
    %s158 = sphi 0, %s160
    %s161 = sphi 0, %s158
    %s162 = sphi 0, %s161
    %s178 = sphi 0, %s162
    %s186 = sphi 0, %s188
    %s189 = sphi 0, %s186
    %s190 = sphi 0, %s189
    %s206 = sphi 0, %s190
  $region4: #{decoder_forward.16} parent=0 // loop_header_branch
    %15 = sbr.rel (%p13) target = $region8
  $region5: #{decoder_forward.16} parent=0 // loop_body
    %s17 = ssub.s32 %s12, 1
    %s18 = ssub.s32 %s12, 2
    %s25 = sadd.s32 1, %s20
    %p26 = scmp.ge.s32.totalorder %s25, 1
    %s27 = scalar_select %p26, 0, %s25
    %s28 = sadd.s32 1, %s19
    %s29 = scalar_select %p26, %s28, %s19
    %p30 = scmp.ge.s32.totalorder %s29, 2
    %s31 = scalar_select %p30, 0, %s29
    %s32 = ssub.s32 %s19, %s31
    %s33 = ssub.s32 %s20, %s27
    %s34 = sor.u32 %s32, %s33
    %p35 = scmp.eq.s32.totalorder %s34, 0
    %s37 = sadd.s32 %s36, 1
    %s38 = scalar_select %p35, %s36, %s37
    %p41 = pneg %p35
    %p42 = scmp.eq.s32.totalorder %s12, 1
    %p43 = por %p41, %p42
    %p44 = scmp.ne.s32.totalorder %s36, %s39
    %p45 = scmp.eq.s32.totalorder %s12, 0
    %p46 = por %p44, %p45
    %p47 = scmp.ne.s32.totalorder %s36, %s39
    %p48 = scmp.eq.s32.totalorder %s17, 1
    %p49 = por %p47, %p48
    %p50 = scmp.ne.s32.totalorder %s39, %s40
    %p51 = scmp.eq.s32.totalorder %s17, 0
    %p52 = por %p50, %p51
    %p53 = scmp.ne.s32.totalorder %s39, %s40
    %p54 = scmp.eq.s32.totalorder %s18, 1
    %p55 = por %p53, %p54
    %p57 = scmp.ne.s32.totalorder %s40, %s56
    %p58 = scmp.eq.s32.totalorder %s18, 0
    %p59 = por %p57, %p58
    %s60 = ssub.s32 %s19, %s31
    %p61 = scmp.eq.s32.totalorder %s60, 0
    %s63 = sadd.s32 %s62, 1
    %s64 = scalar_select %p61, %s62, %s63
    %p67 = pneg %p61
    %p68 = scmp.eq.s32.totalorder %s12, 1
    %p69 = por %p67, %p68
    %p70 = scmp.ne.s32.totalorder %s62, %s65
    %p71 = scmp.eq.s32.totalorder %s12, 0
    %p72 = por %p70, %p71
    %p73 = scmp.ne.s32.totalorder %s62, %s65
    %p74 = scmp.eq.s32.totalorder %s17, 1
    %p75 = por %p73, %p74
    %p76 = scmp.ne.s32.totalorder %s65, %s66
    %p77 = scmp.eq.s32.totalorder %s17, 0
    %p78 = por %p76, %p77
    %p79 = scmp.ne.s32.totalorder %s65, %s66
    %p80 = scmp.eq.s32.totalorder %s18, 1
    %p81 = por %p79, %p80
    %p83 = scmp.ne.s32.totalorder %s66, %s82
    %p84 = scmp.eq.s32.totalorder %s18, 0
    %p85 = por %p83, %p84
    %s86 = ssub.s32 %s19, %s31
    %p87 = scmp.eq.s32.totalorder %s86, 0
    %s89 = sadd.s32 %s88, 1
    %s90 = scalar_select %p87, %s88, %s89
    %p93 = pneg %p87
    %p94 = scmp.eq.s32.totalorder %s12, 1
    %p95 = por %p93, %p94
    %p96 = scmp.ne.s32.totalorder %s88, %s91
    %p97 = scmp.eq.s32.totalorder %s12, 0
    %p98 = por %p96, %p97
    %p99 = scmp.ne.s32.totalorder %s88, %s91
    %p100 = scmp.eq.s32.totalorder %s17, 1
    %p101 = por %p99, %p100
    %p102 = scmp.ne.s32.totalorder %s91, %s92
    %p103 = scmp.eq.s32.totalorder %s17, 0
    %p104 = por %p102, %p103
    %p105 = scmp.ne.s32.totalorder %s91, %s92
    %p106 = scmp.eq.s32.totalorder %s18, 1
    %p107 = por %p105, %p106
    %p109 = scmp.ne.s32.totalorder %s92, %s108
    %p110 = scmp.eq.s32.totalorder %s18, 0
    %p111 = por %p109, %p110
    %s113 = sadd.s32 %s112, 1
    %p116 = scmp.eq.s32.totalorder %s12, 1
    %p117 = scmp.ne.s32.totalorder %s112, %s114
    %p118 = scmp.eq.s32.totalorder %s12, 0
    %p119 = por %p117, %p118
    %p120 = scmp.ne.s32.totalorder %s112, %s114
    %p121 = scmp.eq.s32.totalorder %s17, 1
    %p122 = por %p120, %p121
    %p123 = scmp.ne.s32.totalorder %s114, %s115
    %p124 = scmp.eq.s32.totalorder %s17, 0
    %p125 = por %p123, %p124
    %p126 = scmp.ne.s32.totalorder %s114, %s115
    %p127 = scmp.eq.s32.totalorder %s18, 1
    %p128 = por %p126, %p127
    %p130 = scmp.ne.s32.totalorder %s115, %s129
    %p131 = scmp.eq.s32.totalorder %s18, 0
    %p132 = por %p130, %p131
    %s134 = sadd.s32 %s133, 1
    %p137 = scmp.eq.s32.totalorder %s12, 1
    %p138 = scmp.ne.s32.totalorder %s133, %s135
    %p139 = scmp.eq.s32.totalorder %s12, 0
    %p140 = por %p138, %p139
    %p141 = scmp.ne.s32.totalorder %s133, %s135
    %p142 = scmp.eq.s32.totalorder %s17, 1
    %p143 = por %p141, %p142
    %p144 = scmp.ne.s32.totalorder %s135, %s136
    %p145 = scmp.eq.s32.totalorder %s17, 0
    %p146 = por %p144, %p145
    %p147 = scmp.ne.s32.totalorder %s135, %s136
    %p148 = scmp.eq.s32.totalorder %s18, 1
    %p149 = por %p147, %p148
    %p151 = scmp.ne.s32.totalorder %s136, %s150
    %p152 = scmp.eq.s32.totalorder %s18, 0
    %p153 = por %p151, %p152
    %s154 = ssub.s32 %s19, %s31
    %s155 = ssub.s32 %s20, %s27
    %s156 = sor.u32 %s154, %s155
    %p157 = scmp.eq.s32.totalorder %s156, 0
    %s159 = sadd.s32 %s158, 1
    %s160 = scalar_select %p157, %s158, %s159
    %p163 = pneg %p157
    %p164 = scmp.eq.s32.totalorder %s12, 1
    %p165 = por %p163, %p164
    %p166 = scmp.ne.s32.totalorder %s158, %s161
    %p167 = scmp.eq.s32.totalorder %s12, 0
    %p168 = por %p166, %p167
    %p169 = scmp.ne.s32.totalorder %s158, %s161
    %p170 = scmp.eq.s32.totalorder %s17, 1
    %p171 = por %p169, %p170
    %p172 = scmp.ne.s32.totalorder %s161, %s162
    %p173 = scmp.eq.s32.totalorder %s17, 0
    %p174 = por %p172, %p173
    %p175 = scmp.ne.s32.totalorder %s161, %s162
    %p176 = scmp.eq.s32.totalorder %s18, 1
    %p177 = por %p175, %p176
    %p179 = scmp.ne.s32.totalorder %s162, %s178
    %p180 = scmp.eq.s32.totalorder %s18, 0
    %p181 = por %p179, %p180
    %s182 = ssub.s32 %s19, %s31
    %s183 = ssub.s32 %s20, %s27
    %s184 = sor.u32 %s182, %s183
    %p185 = scmp.eq.s32.totalorder %s184, 0
    %s187 = sadd.s32 %s186, 1
    %s188 = scalar_select %p185, %s186, %s187
    %p191 = pneg %p185
    %p192 = scmp.eq.s32.totalorder %s12, 1
    %p193 = por %p191, %p192
    %p194 = scmp.ne.s32.totalorder %s186, %s189
    %p195 = scmp.eq.s32.totalorder %s12, 0
    %p196 = por %p194, %p195
    %p197 = scmp.ne.s32.totalorder %s186, %s189
    %p198 = scmp.eq.s32.totalorder %s17, 1
    %p199 = por %p197, %p198
    %p200 = scmp.ne.s32.totalorder %s189, %s190
    %p201 = scmp.eq.s32.totalorder %s17, 0
    %p202 = por %p200, %p201
    %p203 = scmp.ne.s32.totalorder %s189, %s190
    %p204 = scmp.eq.s32.totalorder %s18, 1
    %p205 = por %p203, %p204
    %p207 = scmp.ne.s32.totalorder %s190, %s206
    %p208 = scmp.eq.s32.totalorder %s18, 0
    %p209 = por %p207, %p208
    %p210 = scmp.le.s32.totalorder 1, %s12
    %p211 = scmp.lt.s32.totalorder %s12, 3
    %p212 = pnand %p210, %p211
    %p213 = pneg %p212
    // Predicated region
    $region9: #{decoder_forward.16} parent=5 // pred_check
      _
    $region10: #{decoder_forward.16} parent=5 // pred_check_branch
      %215 = sbr.rel (%p212) target = $region12
    $region11: #{decoder_forward.16} parent=5 // pred_region
      %s216 = ssub.s32 %s12, 1
      // Predicated region
      $region13: #{decoder_forward.16} parent=11 // pred_check
        %p217 = pneg %p125
      $region14: #{decoder_forward.16} parent=11 // pred_check_branch
        %219 = sbr.rel (%p217) target = $region16
      $region15: #{decoder_forward.16} parent=11 // pred_region
        _
      $region16: #{decoder_forward.16} parent=11 // pred_fallthru
        _
      // Predicated region
      $region17: #{decoder_forward.16} parent=11 // pred_check
        %p220 = pneg %p146
      $region18: #{decoder_forward.16} parent=11 // pred_check_branch
        %222 = sbr.rel (%p220) target = $region20
      $region19: #{decoder_forward.16} parent=11 // pred_region
        _
      $region20: #{decoder_forward.16} parent=11 // pred_fallthru
        _
    $region12: #{decoder_forward.16} parent=5 // pred_fallthru
      _
    %p223 = scmp.lt.s32.totalorder %s12, 2
    // Predicated region
    $region21: #{decoder_forward.16} parent=5 // pred_check
      %p224 = pneg %p223
    $region22: #{decoder_forward.16} parent=5 // pred_check_branch
      %226 = sbr.rel (%p224) target = $region24
    $region23: #{decoder_forward.16} parent=5 // pred_region
      // Predicated region
      $region25: #{decoder_forward.16} parent=23 // pred_check
        %p227 = pneg %p46
      $region26: #{decoder_forward.16} parent=23 // pred_check_branch
        %229 = sbr.rel (%p227) target = $region28
      $region27: #{decoder_forward.16} parent=23 // pred_region
        %p230 = scmp.lt.s32.totalorder %s19, 1
        %s231 = scalar_select %p230, %s19, 1
        %p232 = scmp.lt.s32.totalorder %s20, 0
        %s233 = scalar_select %p232, %s20, 0
        %s234 = sadd.s32 %s233, %s231
        %s235 = smul.addr %s234, 8
        %s236 = scalar_lea.vmem %s0, %s235
      $region28: #{decoder_forward.16} parent=23 // pred_fallthru
        _
      // Predicated region
      $region29: #{decoder_forward.16} parent=23 // pred_check
        %p237 = pneg %p72
      $region30: #{decoder_forward.16} parent=23 // pred_check_branch
        %239 = sbr.rel (%p237) target = $region32
      $region31: #{decoder_forward.16} parent=23 // pred_region
        %p240 = scmp.lt.s32.totalorder %s19, 1
        %s241 = scalar_select %p240, %s19, 1
        %s242 = smul.addr %s241, 8
        %s243 = scalar_lea.vmem %s1, %s242
      $region32: #{decoder_forward.16} parent=23 // pred_fallthru
        _
      // Predicated region
      $region33: #{decoder_forward.16} parent=23 // pred_check
        %p244 = pneg %p98
      $region34: #{decoder_forward.16} parent=23 // pred_check_branch
        %246 = sbr.rel (%p244) target = $region36
      $region35: #{decoder_forward.16} parent=23 // pred_region
        %p247 = scmp.lt.s32.totalorder %s19, 1
        %s248 = scalar_select %p247, %s19, 1
        %s249 = scalar_lea.vmem %s2, %s248
      $region36: #{decoder_forward.16} parent=23 // pred_fallthru
        _
      // Predicated region
      $region37: #{decoder_forward.16} parent=23 // pred_check
        %p250 = pneg %p168
      $region38: #{decoder_forward.16} parent=23 // pred_check_branch
        %252 = sbr.rel (%p250) target = $region40
      $region39: #{decoder_forward.16} parent=23 // pred_region
        %p253 = scmp.lt.s32.totalorder %s19, 1
        %s254 = scalar_select %p253, %s19, 1
        %p255 = scmp.lt.s32.totalorder %s20, 0
        %s256 = scalar_select %p255, %s20, 0
        %s257 = sadd.s32 %s256, %s254
        %s258 = smul.addr %s257, 8
        %s259 = scalar_lea.vmem %s5, %s258
      $region40: #{decoder_forward.16} parent=23 // pred_fallthru
        _
    $region24: #{decoder_forward.16} parent=5 // pred_fallthru
      _
    %p260 = scmp.le.s32.totalorder 1, %s12
    %p261 = scmp.lt.s32.totalorder %s12, 3
    %p262 = pnand %p260, %p261
    %p263 = pneg %p262
    // Predicated region
    $region41: #{decoder_forward.16} parent=5 // pred_check
      _
    $region42: #{decoder_forward.16} parent=5 // pred_check_branch
      %265 = sbr.rel (%p262) target = $region44
    $region43: #{decoder_forward.16} parent=5 // pred_region
      %s266 = ssub.s32 %s12, 1
      %p267 = scmp.lt.s32.totalorder %s21, 1
      %s268 = scalar_select %p267, %s21, 1
      %p269 = scmp.lt.s32.totalorder %s22, 0
      %s270 = scalar_select %p269, %s22, 0
      %s271 = sadd.s32 %s270, %s268
      %s272 = smul.addr %s271, 8
      %s273 = scalar_lea.vmem %s0, %s272
      %p274 = pneg %p52
      %p275 = pneg %p49
      %p276 = scmp.lt.s32.totalorder %s21, 1
      %s277 = scalar_select %p276, %s21, 1
      %s278 = smul.addr %s277, 8
      %s279 = scalar_lea.vmem %s1, %s278
      %p280 = pneg %p78
      %p281 = pneg %p75
      %p282 = scmp.lt.s32.totalorder %s21, 1
      %s283 = scalar_select %p282, %s21, 1
      %s284 = scalar_lea.vmem %s2, %s283
      %p285 = pneg %p104
      %p286 = pneg %p101
      %p287 = pneg %p125
      %p288 = pneg %p122
      %p289 = pneg %p146
      %p290 = pneg %p143
      %p291 = scmp.lt.s32.totalorder %s21, 1
      %s292 = scalar_select %p291, %s21, 1
      %p293 = scmp.lt.s32.totalorder %s22, 0
      %s294 = scalar_select %p293, %s22, 0
      %s295 = sadd.s32 %s294, %s292
      %s296 = smul.addr %s295, 8
      %s297 = scalar_lea.vmem %s5, %s296
      %p298 = pneg %p174
      %p299 = pneg %p171
      %p300 = pneg %p202
      %p301 = pneg %p199
      %p302 = scmp.lt.s32.totalorder %s21, 1
      %s303 = scalar_select %p302, %s21, 1
      %p304 = scmp.lt.s32.totalorder %s22, 0
      %s305 = scalar_select %p304, %s22, 0
      %s306 = sadd.s32 %s305, %s303
      %s307 = smul.addr %s306, 8
      %s308 = scalar_lea.vmem %s6, %s307
      %p309 = scmp.lt.s32.totalorder %s21, 1
      %s310 = scalar_select %p309, %s21, 1
      %p311 = scmp.lt.s32.totalorder %s22, 0
      %s312 = scalar_select %p311, %s22, 0
      %s313 = sadd.s32 %s312, %s310
      %s314 = smul.addr %s313, 8
      %s315 = scalar_lea.vmem %s0, %s314
      %p316 = scmp.lt.s32.totalorder %s21, 1
      %s317 = scalar_select %p316, %s21, 1
      %s318 = smul.addr %s317, 8
      %s319 = scalar_lea.vmem %s1, %s318
      %p320 = scmp.lt.s32.totalorder %s21, 1
      %s321 = scalar_select %p320, %s21, 1
      %s322 = scalar_lea.vmem %s2, %s321
      %p323 = scmp.lt.s32.totalorder %s21, 1
      %s324 = scalar_select %p323, %s21, 1
      %p325 = scmp.lt.s32.totalorder %s22, 0
      %s326 = scalar_select %p325, %s22, 0
      %s327 = sadd.s32 %s326, %s324
      %s328 = smul.addr %s327, 8
      %s329 = scalar_lea.vmem %s5, %s328
      %p330 = scmp.lt.s32.totalorder %s21, 1
      %s331 = scalar_select %p330, %s21, 1
      %p332 = scmp.lt.s32.totalorder %s22, 0
      %s333 = scalar_select %p332, %s22, 0
      %s334 = sadd.s32 %s333, %s331
      %s335 = smul.addr %s334, 8
      %s336 = scalar_lea.vmem %s6, %s335
      %v337 = vld [vmem:[%s315] sm:$0xff]
      %v338 = vmul.f32 %v337, 0.35355338
      %v339 = vld [vmem:[%s319] sm:$0xff]
      %v340 = vld [vmem:[%s322] sm:$0x1]
      %v341 = vunpack.c.0.s8 %v340
      %v342 = vcvt.s32.f32 %v341
      %vm343 = vcmp.eq.f32.partialorder %v342, 0.0
      %v344 = vsel %vm343, -1e+30, 0.0
      %v345 = vlaneseq
      %v346 = vshrl.u32 %v345, 7
      %v347 = vsub.s32 0, %v346
      %v348 = vrot.slane %v344, %v347
      %vm349 = vcmask 64512
      %v351 = vsel %vm349, %v338, 0
      %v354 = vsel %vm349, %v339, 0
      %356 = vmatprep.subr.mxu0 0.0
      %357 = vmatpush1.xpose.msra.mxu0 0.0
      %358 = vmatprep.subr.mxu0 0.0
      %359 = vmatpush1.xpose.msra.mxu0 0.0
      %360 = vmatprep.subr.mxu0 0.0
      %361 = vmatpush1.xpose.msra.mxu0 0.0
      %362 = vmatprep.subr.mxu0 0.0
      %363 = vmatpush1.xpose.msra.mxu0 0.0
      %364 = vmatprep.subr.mxu0 0.0
      %365 = vmatpush1.xpose.msra.mxu0 0.0
      %366 = vmatprep.subr.mxu0 0.0
      %367 = vmatpush1.xpose.msra.mxu0 0.0
      %368 = vmatprep.subr.mxu0 0.0
      %369 = vmatpush1.xpose.msra.mxu0 0.0
      %370 = vmatprep.subr.mxu0 0.0
      %371 = vmatpush1.xpose.msra.mxu0 0.0
      %372 = vmatprep.subr.mxu0 0.0
      %373 = vmatpush1.xpose.msra.mxu0 0.0
      %374 = vmatprep.subr.mxu0 0.0
      %375 = vmatpush1.xpose.msra.mxu0 0.0
      %376 = vmatprep.subr.mxu0 0.0
      %377 = vmatpush1.xpose.msra.mxu0 0.0
      %378 = vmatprep.subr.mxu0 0.0
      %379 = vmatpush1.xpose.msra.mxu0 0.0
      %380 = vmatprep.subr.mxu0 0.0
      %381 = vmatpush1.xpose.msra.mxu0 0.0
      %382 = vmatprep.subr.mxu0 0.0
      %383 = vmatpush1.xpose.msra.mxu0 0.0
      %384 = vmatprep.subr.mxu0 0.0
      %385 = vmatpush1.xpose.msra.mxu0 0.0
      %386 = vmatprep.subr.mxu0 0.0
      %387 = vmatpush1.xpose.msra.mxu0 %v354
      %388 = vmatprep.subr.mxu0 0.0
      %389 = vmatpush2.xpose.msra.mxu0 0.0
      %390 = vmatprep.subr.mxu0 0.0
      %391 = vmatpush2.xpose.msra.mxu0 0.0
      %392 = vmatprep.subr.mxu0 0.0
      %393 = vmatpush2.xpose.msra.mxu0 0.0
      %394 = vmatprep.subr.mxu0 0.0
      %395 = vmatpush2.xpose.msra.mxu0 0.0
      %396 = vmatprep.subr.mxu0 0.0
      %397 = vmatpush2.xpose.msra.mxu0 0.0
      %398 = vmatprep.subr.mxu0 0.0
      %399 = vmatpush2.xpose.msra.mxu0 0.0
      %400 = vmatprep.subr.mxu0 0.0
      %401 = vmatpush2.xpose.msra.mxu0 0.0
      %402 = vmatprep.subr.mxu0 0.0
      %403 = vmatpush2.xpose.msra.mxu0 0.0
      %404 = vmatprep.subr.mxu0 0.0
      %405 = vmatpush2.xpose.msra.mxu0 0.0
      %406 = vmatprep.subr.mxu0 0.0
      %407 = vmatpush2.xpose.msra.mxu0 0.0
      %408 = vmatprep.subr.mxu0 0.0
      %409 = vmatpush2.xpose.msra.mxu0 0.0
      %410 = vmatprep.subr.mxu0 0.0
      %411 = vmatpush2.xpose.msra.mxu0 0.0
      %412 = vmatprep.subr.mxu0 0.0
      %413 = vmatpush2.xpose.msra.mxu0 0.0
      %414 = vmatprep.subr.mxu0 0.0
      %415 = vmatpush2.xpose.msra.mxu0 0.0
      %416 = vmatprep.subr.mxu0 0.0
      %417 = vmatpush2.xpose.msra.mxu0 0.0
      %418 = vmatprep.subr.mxu0 0.0
      %419 = vmatpush2.xpose.msra.mxu0 0.0
      %420 = vmatprep.mubr.f32.mxu0 0.0
      %421 = vmatmul.mubr.f32.gmra.mxu0 %v351
      %v422 = vpop.f32.mrf.mxu0
      %v423 = vadd.f32 %v348, %v422
      %v424 = vpop.f32.mrf.mxu0
      %425 = vdwg.mxu0
      %v426 = vsel %vm349, %v423, -inf
      %427 = vmax.xlane.f32.xlu0 %v426
      %v428 = vpop.xlane.xlu0 %427
      %v429 = vsub.f32 %v423, %v428
      %v430 = vmul.f32 %v429, 1.442695
      %v431 = vpow.pop %v430
      %v432 = vsel %vm349, %v431, 0.0
      %433 = vadd.xlane.f32.xlu0 %v432
      %v434 = vpop.xlane.xlu0 %433
      %v435 = vrcp.pop %v434
      %436 = vrot.lane.b32.xlu0 %v339, 96
      %v437 = vpop.permute.xlu0 %436
      %v440 = vsel %vm349, %v431, 0
      %442 = vmatprep.subr.mxu0 0.0
      %443 = vmatpush1.msra.mxu0 0.0
      %444 = vmatprep.subr.mxu0 0.0
      %445 = vmatpush1.msra.mxu0 0.0
      %446 = vmatprep.subr.mxu0 0.0
      %447 = vmatpush1.msra.mxu0 0.0
      %448 = vmatprep.subr.mxu0 0.0
      %449 = vmatpush1.msra.mxu0 0.0
      %450 = vmatprep.subr.mxu0 0.0
      %451 = vmatpush1.msra.mxu0 0.0
      %452 = vmatprep.subr.mxu0 0.0
      %453 = vmatpush1.msra.mxu0 0.0
      %454 = vmatprep.subr.mxu0 0.0
      %455 = vmatpush1.msra.mxu0 0.0
      %456 = vmatprep.subr.mxu0 0.0
      %457 = vmatpush1.msra.mxu0 0.0
      %458 = vmatprep.subr.mxu0 0.0
      %459 = vmatpush1.msra.mxu0 0.0
      %460 = vmatprep.subr.mxu0 0.0
      %461 = vmatpush1.msra.mxu0 0.0
      %462 = vmatprep.subr.mxu0 0.0
      %463 = vmatpush1.msra.mxu0 0.0
      %464 = vmatprep.subr.mxu0 0.0
      %465 = vmatpush1.msra.mxu0 0.0
      %466 = vmatprep.subr.mxu0 0.0
      %467 = vmatpush1.msra.mxu0 0.0
      %468 = vmatprep.subr.mxu0 0.0
      %469 = vmatpush1.msra.mxu0 0.0
      %470 = vmatprep.subr.mxu0 0.0
      %471 = vmatpush1.msra.mxu0 0.0
      %472 = vmatprep.subr.mxu0 0.0
      %473 = vmatpush1.msra.mxu0 %v437
      %474 = vmatprep.subr.mxu0 0.0
      %475 = vmatpush2.msra.mxu0 0.0
      %476 = vmatprep.subr.mxu0 0.0
      %477 = vmatpush2.msra.mxu0 0.0
      %478 = vmatprep.subr.mxu0 0.0
      %479 = vmatpush2.msra.mxu0 0.0
      %480 = vmatprep.subr.mxu0 0.0
      %481 = vmatpush2.msra.mxu0 0.0
      %482 = vmatprep.subr.mxu0 0.0
      %483 = vmatpush2.msra.mxu0 0.0
      %484 = vmatprep.subr.mxu0 0.0
      %485 = vmatpush2.msra.mxu0 0.0
      %486 = vmatprep.subr.mxu0 0.0
      %487 = vmatpush2.msra.mxu0 0.0
      %488 = vmatprep.subr.mxu0 0.0
      %489 = vmatpush2.msra.mxu0 0.0
      %490 = vmatprep.subr.mxu0 0.0
      %491 = vmatpush2.msra.mxu0 0.0
      %492 = vmatprep.subr.mxu0 0.0
      %493 = vmatpush2.msra.mxu0 0.0
      %494 = vmatprep.subr.mxu0 0.0
      %495 = vmatpush2.msra.mxu0 0.0
      %496 = vmatprep.subr.mxu0 0.0
      %497 = vmatpush2.msra.mxu0 0.0
      %498 = vmatprep.subr.mxu0 0.0
      %499 = vmatpush2.msra.mxu0 0.0
      %500 = vmatprep.subr.mxu0 0.0
      %501 = vmatpush2.msra.mxu0 0.0
      %502 = vmatprep.subr.mxu0 0.0
      %503 = vmatpush2.msra.mxu0 0.0
      %504 = vmatprep.subr.mxu0 0.0
      %505 = vmatpush2.msra.mxu0 0.0
      %506 = vmatprep.mubr.f32.mxu0 0.0
      %507 = vmatmul.mubr.f32.gmra.mxu0 %v440
      %v508 = vpop.f32.mrf.mxu0
      %v509 = vadd.f32 0.0, %v508
      %v510 = vpop.f32.mrf.mxu0
      %511 = vdwg.mxu0
      %v512 = vmul.f32 %v509, %v435
      %v513 = vld [vmem:[%s3] sm:$0xff]
      %514 = vrot.lane.b32.xlu0 %v338, 120
      %v515 = vpop.permute.xlu0 %514
      %516 = vrot.lane.b32.xlu0 %v339, 120
      %v517 = vpop.permute.xlu0 %516
      %v518 = vsel %vm349, %v515, 0
      %v520 = vsel %vm349, %v517, 0
      %522 = vmatprep.subr.mxu0 0.0
      %523 = vmatpush1.xpose.msra.mxu0 0.0
      %524 = vmatprep.subr.mxu0 0.0
      %525 = vmatpush1.xpose.msra.mxu0 0.0
      %526 = vmatprep.subr.mxu0 0.0
      %527 = vmatpush1.xpose.msra.mxu0 0.0
      %528 = vmatprep.subr.mxu0 0.0
      %529 = vmatpush1.xpose.msra.mxu0 0.0
      %530 = vmatprep.subr.mxu0 0.0
      %531 = vmatpush1.xpose.msra.mxu0 0.0
      %532 = vmatprep.subr.mxu0 0.0
      %533 = vmatpush1.xpose.msra.mxu0 0.0
      %534 = vmatprep.subr.mxu0 0.0
      %535 = vmatpush1.xpose.msra.mxu0 0.0
      %536 = vmatprep.subr.mxu0 0.0
      %537 = vmatpush1.xpose.msra.mxu0 0.0
      %538 = vmatprep.subr.mxu0 0.0
      %539 = vmatpush1.xpose.msra.mxu0 0.0
      %540 = vmatprep.subr.mxu0 0.0
      %541 = vmatpush1.xpose.msra.mxu0 0.0
      %542 = vmatprep.subr.mxu0 0.0
      %543 = vmatpush1.xpose.msra.mxu0 0.0
      %544 = vmatprep.subr.mxu0 0.0
      %545 = vmatpush1.xpose.msra.mxu0 0.0
      %546 = vmatprep.subr.mxu0 0.0
      %547 = vmatpush1.xpose.msra.mxu0 0.0
      %548 = vmatprep.subr.mxu0 0.0
      %549 = vmatpush1.xpose.msra.mxu0 0.0
      %550 = vmatprep.subr.mxu0 0.0
      %551 = vmatpush1.xpose.msra.mxu0 0.0
      %552 = vmatprep.subr.mxu0 0.0
      %553 = vmatpush1.xpose.msra.mxu0 %v520
      %554 = vmatprep.subr.mxu0 0.0
      %555 = vmatpush2.xpose.msra.mxu0 0.0
      %556 = vmatprep.subr.mxu0 0.0
      %557 = vmatpush2.xpose.msra.mxu0 0.0
      %558 = vmatprep.subr.mxu0 0.0
      %559 = vmatpush2.xpose.msra.mxu0 0.0
      %560 = vmatprep.subr.mxu0 0.0
      %561 = vmatpush2.xpose.msra.mxu0 0.0
      %562 = vmatprep.subr.mxu0 0.0
      %563 = vmatpush2.xpose.msra.mxu0 0.0
      %564 = vmatprep.subr.mxu0 0.0
      %565 = vmatpush2.xpose.msra.mxu0 0.0
      %566 = vmatprep.subr.mxu0 0.0
      %567 = vmatpush2.xpose.msra.mxu0 0.0
      %568 = vmatprep.subr.mxu0 0.0
      %569 = vmatpush2.xpose.msra.mxu0 0.0
      %570 = vmatprep.subr.mxu0 0.0
      %571 = vmatpush2.xpose.msra.mxu0 0.0
      %572 = vmatprep.subr.mxu0 0.0
      %573 = vmatpush2.xpose.msra.mxu0 0.0
      %574 = vmatprep.subr.mxu0 0.0
      %575 = vmatpush2.xpose.msra.mxu0 0.0
      %576 = vmatprep.subr.mxu0 0.0
      %577 = vmatpush2.xpose.msra.mxu0 0.0
      %578 = vmatprep.subr.mxu0 0.0
      %579 = vmatpush2.xpose.msra.mxu0 0.0
      %580 = vmatprep.subr.mxu0 0.0
      %581 = vmatpush2.xpose.msra.mxu0 0.0
      %582 = vmatprep.subr.mxu0 0.0
      %583 = vmatpush2.xpose.msra.mxu0 0.0
      %584 = vmatprep.subr.mxu0 0.0
      %585 = vmatpush2.xpose.msra.mxu0 0.0
      %586 = vmatprep.mubr.f32.mxu0 0.0
      %587 = vmatmul.mubr.f32.gmra.mxu0 %v518
      %v588 = vpop.f32.mrf.mxu0
      %v589 = vadd.f32 %v348, %v588
      %v590 = vpop.f32.mrf.mxu0
      %591 = vdwg.mxu0
      %v592 = vsel %vm349, %v589, -inf
      %593 = vmax.xlane.f32.xlu0 %v592
      %v594 = vpop.xlane.xlu0 %593
      %v595 = vsub.f32 %v589, %v594
      %v596 = vmul.f32 %v595, 1.442695
      %v597 = vpow.pop %v596
      %v598 = vsel %vm349, %v597, 0.0
      %599 = vadd.xlane.f32.xlu0 %v598
      %v600 = vpop.xlane.xlu0 %599
      %v601 = vrcp.pop %v600
      %602 = vrot.lane.b32.xlu0 %v339, 88
      %v603 = vpop.permute.xlu0 %602
      %v606 = vsel %vm349, %v597, 0
      %608 = vmatprep.subr.mxu0 0.0
      %609 = vmatpush1.msra.mxu0 0.0
      %610 = vmatprep.subr.mxu0 0.0
      %611 = vmatpush1.msra.mxu0 0.0
      %612 = vmatprep.subr.mxu0 0.0
      %613 = vmatpush1.msra.mxu0 0.0
      %614 = vmatprep.subr.mxu0 0.0
      %615 = vmatpush1.msra.mxu0 0.0
      %616 = vmatprep.subr.mxu0 0.0
      %617 = vmatpush1.msra.mxu0 0.0
      %618 = vmatprep.subr.mxu0 0.0
      %619 = vmatpush1.msra.mxu0 0.0
      %620 = vmatprep.subr.mxu0 0.0
      %621 = vmatpush1.msra.mxu0 0.0
      %622 = vmatprep.subr.mxu0 0.0
      %623 = vmatpush1.msra.mxu0 0.0
      %624 = vmatprep.subr.mxu0 0.0
      %625 = vmatpush1.msra.mxu0 0.0
      %626 = vmatprep.subr.mxu0 0.0
      %627 = vmatpush1.msra.mxu0 0.0
      %628 = vmatprep.subr.mxu0 0.0
      %629 = vmatpush1.msra.mxu0 0.0
      %630 = vmatprep.subr.mxu0 0.0
      %631 = vmatpush1.msra.mxu0 0.0
      %632 = vmatprep.subr.mxu0 0.0
      %633 = vmatpush1.msra.mxu0 0.0
      %634 = vmatprep.subr.mxu0 0.0
      %635 = vmatpush1.msra.mxu0 0.0
      %636 = vmatprep.subr.mxu0 0.0
      %637 = vmatpush1.msra.mxu0 0.0
      %638 = vmatprep.subr.mxu0 0.0
      %639 = vmatpush1.msra.mxu0 %v603
      %640 = vmatprep.subr.mxu0 0.0
      %641 = vmatpush2.msra.mxu0 0.0
      %642 = vmatprep.subr.mxu0 0.0
      %643 = vmatpush2.msra.mxu0 0.0
      %644 = vmatprep.subr.mxu0 0.0
      %645 = vmatpush2.msra.mxu0 0.0
      %646 = vmatprep.subr.mxu0 0.0
      %647 = vmatpush2.msra.mxu0 0.0
      %648 = vmatprep.subr.mxu0 0.0
      %649 = vmatpush2.msra.mxu0 0.0
      %650 = vmatprep.subr.mxu0 0.0
      %651 = vmatpush2.msra.mxu0 0.0
      %652 = vmatprep.subr.mxu0 0.0
      %653 = vmatpush2.msra.mxu0 0.0
      %654 = vmatprep.subr.mxu0 0.0
      %655 = vmatpush2.msra.mxu0 0.0
      %656 = vmatprep.subr.mxu0 0.0
      %657 = vmatpush2.msra.mxu0 0.0
      %658 = vmatprep.subr.mxu0 0.0
      %659 = vmatpush2.msra.mxu0 0.0
      %660 = vmatprep.subr.mxu0 0.0
      %661 = vmatpush2.msra.mxu0 0.0
      %662 = vmatprep.subr.mxu0 0.0
      %663 = vmatpush2.msra.mxu0 0.0
      %664 = vmatprep.subr.mxu0 0.0
      %665 = vmatpush2.msra.mxu0 0.0
      %666 = vmatprep.subr.mxu0 0.0
      %667 = vmatpush2.msra.mxu0 0.0
      %668 = vmatprep.subr.mxu0 0.0
      %669 = vmatpush2.msra.mxu0 0.0
      %670 = vmatprep.subr.mxu0 0.0
      %671 = vmatpush2.msra.mxu0 0.0
      %672 = vmatprep.mubr.f32.mxu0 0.0
      %673 = vmatmul.mubr.f32.gmra.mxu0 %v606
      %v674 = vpop.f32.mrf.mxu0
      %v675 = vadd.f32 0.0, %v674
      %v676 = vpop.f32.mrf.mxu0
      %677 = vdwg.mxu0
      %v678 = vmul.f32 %v675, %v601
      %v679 = vld [vmem:[%s3 + $0x8] sm:$0xff]
      %v681 = vsel %vm349, %v678, 0
      %683 = vmatprep.subr.mxu0 0.0
      %684 = vmatpush1.msra.mxu0 0.0
      %685 = vmatprep.subr.mxu0 0.0
      %686 = vmatpush1.msra.mxu0 0.0
      %687 = vmatprep.subr.mxu0 0.0
      %688 = vmatpush1.msra.mxu0 0.0
      %689 = vmatprep.subr.mxu0 0.0
      %690 = vmatpush1.msra.mxu0 0.0
      %691 = vmatprep.subr.mxu0 0.0
      %692 = vmatpush1.msra.mxu0 0.0
      %693 = vmatprep.subr.mxu0 0.0
      %694 = vmatpush1.msra.mxu0 0.0
      %695 = vmatprep.subr.mxu0 0.0
      %696 = vmatpush1.msra.mxu0 0.0
      %697 = vmatprep.subr.mxu0 0.0
      %698 = vmatpush1.msra.mxu0 0.0
      %699 = vmatprep.subr.mxu0 0.0
      %700 = vmatpush1.msra.mxu0 0.0
      %701 = vmatprep.subr.mxu0 0.0
      %702 = vmatpush1.msra.mxu0 0.0
      %703 = vmatprep.subr.mxu0 0.0
      %704 = vmatpush1.msra.mxu0 0.0
      %705 = vmatprep.subr.mxu0 0.0
      %706 = vmatpush1.msra.mxu0 0.0
      %707 = vmatprep.subr.mxu0 0.0
      %708 = vmatpush1.msra.mxu0 0.0
      %709 = vmatprep.subr.mxu0 0.0
      %710 = vmatpush1.msra.mxu0 0.0
      %711 = vmatprep.subr.mxu0 0.0
      %712 = vmatpush1.msra.mxu0 0.0
      %713 = vmatprep.subr.mxu0 0.0
      %714 = vmatpush1.msra.mxu0 %v679
      %715 = vmatprep.subr.mxu0 0.0
      %716 = vmatpush2.msra.mxu0 0.0
      %717 = vmatprep.subr.mxu0 0.0
      %718 = vmatpush2.msra.mxu0 0.0
      %719 = vmatprep.subr.mxu0 0.0
      %720 = vmatpush2.msra.mxu0 0.0
      %721 = vmatprep.subr.mxu0 0.0
      %722 = vmatpush2.msra.mxu0 0.0
      %723 = vmatprep.subr.mxu0 0.0
      %724 = vmatpush2.msra.mxu0 0.0
      %725 = vmatprep.subr.mxu0 0.0
      %726 = vmatpush2.msra.mxu0 0.0
      %727 = vmatprep.subr.mxu0 0.0
      %728 = vmatpush2.msra.mxu0 0.0
      %729 = vmatprep.subr.mxu0 0.0
      %730 = vmatpush2.msra.mxu0 0.0
      %731 = vmatprep.subr.mxu0 0.0
      %732 = vmatpush2.msra.mxu0 0.0
      %733 = vmatprep.subr.mxu0 0.0
      %734 = vmatpush2.msra.mxu0 0.0
      %735 = vmatprep.subr.mxu0 0.0
      %736 = vmatpush2.msra.mxu0 0.0
      %737 = vmatprep.subr.mxu0 0.0
      %738 = vmatpush2.msra.mxu0 0.0
      %739 = vmatprep.subr.mxu0 0.0
      %740 = vmatpush2.msra.mxu0 0.0
      %741 = vmatprep.subr.mxu0 0.0
      %742 = vmatpush2.msra.mxu0 0.0
      %743 = vmatprep.subr.mxu0 0.0
      %744 = vmatpush2.msra.mxu0 0.0
      %745 = vmatprep.subr.mxu0 0.0
      %746 = vmatpush2.msra.mxu0 0.0
      %747 = vmatprep.mubr.f32.mxu0 0.0
      %748 = vmatmul.mubr.f32.gmra.mxu0 %v681
      %v749 = vpop.f32.mrf.mxu0
      %v750 = vadd.f32 0.0, %v749
      %v751 = vpop.f32.mrf.mxu0
      %752 = vdwg.mxu0
      %v754 = vsel %vm349, %v512, 0
      %756 = vmatprep.subr.mxu0 0.0
      %757 = vmatpush1.msra.mxu0 0.0
      %758 = vmatprep.subr.mxu0 0.0
      %759 = vmatpush1.msra.mxu0 0.0
      %760 = vmatprep.subr.mxu0 0.0
      %761 = vmatpush1.msra.mxu0 0.0
      %762 = vmatprep.subr.mxu0 0.0
      %763 = vmatpush1.msra.mxu0 0.0
      %764 = vmatprep.subr.mxu0 0.0
      %765 = vmatpush1.msra.mxu0 0.0
      %766 = vmatprep.subr.mxu0 0.0
      %767 = vmatpush1.msra.mxu0 0.0
      %768 = vmatprep.subr.mxu0 0.0
      %769 = vmatpush1.msra.mxu0 0.0
      %770 = vmatprep.subr.mxu0 0.0
      %771 = vmatpush1.msra.mxu0 0.0
      %772 = vmatprep.subr.mxu0 0.0
      %773 = vmatpush1.msra.mxu0 0.0
      %774 = vmatprep.subr.mxu0 0.0
      %775 = vmatpush1.msra.mxu0 0.0
      %776 = vmatprep.subr.mxu0 0.0
      %777 = vmatpush1.msra.mxu0 0.0
      %778 = vmatprep.subr.mxu0 0.0
      %779 = vmatpush1.msra.mxu0 0.0
      %780 = vmatprep.subr.mxu0 0.0
      %781 = vmatpush1.msra.mxu0 0.0
      %782 = vmatprep.subr.mxu0 0.0
      %783 = vmatpush1.msra.mxu0 0.0
      %784 = vmatprep.subr.mxu0 0.0
      %785 = vmatpush1.msra.mxu0 0.0
      %786 = vmatprep.subr.mxu0 0.0
      %787 = vmatpush1.msra.mxu0 %v513
      %788 = vmatprep.subr.mxu0 0.0
      %789 = vmatpush2.msra.mxu0 0.0
      %790 = vmatprep.subr.mxu0 0.0
      %791 = vmatpush2.msra.mxu0 0.0
      %792 = vmatprep.subr.mxu0 0.0
      %793 = vmatpush2.msra.mxu0 0.0
      %794 = vmatprep.subr.mxu0 0.0
      %795 = vmatpush2.msra.mxu0 0.0
      %796 = vmatprep.subr.mxu0 0.0
      %797 = vmatpush2.msra.mxu0 0.0
      %798 = vmatprep.subr.mxu0 0.0
      %799 = vmatpush2.msra.mxu0 0.0
      %800 = vmatprep.subr.mxu0 0.0
      %801 = vmatpush2.msra.mxu0 0.0
      %802 = vmatprep.subr.mxu0 0.0
      %803 = vmatpush2.msra.mxu0 0.0
      %804 = vmatprep.subr.mxu0 0.0
      %805 = vmatpush2.msra.mxu0 0.0
      %806 = vmatprep.subr.mxu0 0.0
      %807 = vmatpush2.msra.mxu0 0.0
      %808 = vmatprep.subr.mxu0 0.0
      %809 = vmatpush2.msra.mxu0 0.0
      %810 = vmatprep.subr.mxu0 0.0
      %811 = vmatpush2.msra.mxu0 0.0
      %812 = vmatprep.subr.mxu0 0.0
      %813 = vmatpush2.msra.mxu0 0.0
      %814 = vmatprep.subr.mxu0 0.0
      %815 = vmatpush2.msra.mxu0 0.0
      %816 = vmatprep.subr.mxu0 0.0
      %817 = vmatpush2.msra.mxu0 0.0
      %818 = vmatprep.subr.mxu0 0.0
      %819 = vmatpush2.msra.mxu0 0.0
      %820 = vmatprep.mubr.f32.mxu0 0.0
      %821 = vmatmul.mubr.f32.gmra.mxu0 %v754
      %v822 = vpop.f32.mrf.mxu0
      %v823 = vadd.f32 %v750, %v822
      %v824 = vpop.f32.mrf.mxu0
      %825 = vdwg.mxu0
      %826 = vrot.lane.b32.xlu0 %v338, 112
      %v827 = vpop.permute.xlu0 %826
      %828 = vrot.lane.b32.xlu0 %v339, 112
      %v829 = vpop.permute.xlu0 %828
      %v830 = vsel %vm349, %v827, 0
      %v832 = vsel %vm349, %v829, 0
      %834 = vmatprep.subr.mxu0 0.0
      %835 = vmatpush1.xpose.msra.mxu0 0.0
      %836 = vmatprep.subr.mxu0 0.0
      %837 = vmatpush1.xpose.msra.mxu0 0.0
      %838 = vmatprep.subr.mxu0 0.0
      %839 = vmatpush1.xpose.msra.mxu0 0.0
      %840 = vmatprep.subr.mxu0 0.0
      %841 = vmatpush1.xpose.msra.mxu0 0.0
      %842 = vmatprep.subr.mxu0 0.0
      %843 = vmatpush1.xpose.msra.mxu0 0.0
      %844 = vmatprep.subr.mxu0 0.0
      %845 = vmatpush1.xpose.msra.mxu0 0.0
      %846 = vmatprep.subr.mxu0 0.0
      %847 = vmatpush1.xpose.msra.mxu0 0.0
      %848 = vmatprep.subr.mxu0 0.0
      %849 = vmatpush1.xpose.msra.mxu0 0.0
      %850 = vmatprep.subr.mxu0 0.0
      %851 = vmatpush1.xpose.msra.mxu0 0.0
      %852 = vmatprep.subr.mxu0 0.0
      %853 = vmatpush1.xpose.msra.mxu0 0.0
      %854 = vmatprep.subr.mxu0 0.0
      %855 = vmatpush1.xpose.msra.mxu0 0.0
      %856 = vmatprep.subr.mxu0 0.0
      %857 = vmatpush1.xpose.msra.mxu0 0.0
      %858 = vmatprep.subr.mxu0 0.0
      %859 = vmatpush1.xpose.msra.mxu0 0.0
      %860 = vmatprep.subr.mxu0 0.0
      %861 = vmatpush1.xpose.msra.mxu0 0.0
      %862 = vmatprep.subr.mxu0 0.0
      %863 = vmatpush1.xpose.msra.mxu0 0.0
      %864 = vmatprep.subr.mxu0 0.0
      %865 = vmatpush1.xpose.msra.mxu0 %v832
      %866 = vmatprep.subr.mxu0 0.0
      %867 = vmatpush2.xpose.msra.mxu0 0.0
      %868 = vmatprep.subr.mxu0 0.0
      %869 = vmatpush2.xpose.msra.mxu0 0.0
      %870 = vmatprep.subr.mxu0 0.0
      %871 = vmatpush2.xpose.msra.mxu0 0.0
      %872 = vmatprep.subr.mxu0 0.0
      %873 = vmatpush2.xpose.msra.mxu0 0.0
      %874 = vmatprep.subr.mxu0 0.0
      %875 = vmatpush2.xpose.msra.mxu0 0.0
      %876 = vmatprep.subr.mxu0 0.0
      %877 = vmatpush2.xpose.msra.mxu0 0.0
      %878 = vmatprep.subr.mxu0 0.0
      %879 = vmatpush2.xpose.msra.mxu0 0.0
      %880 = vmatprep.subr.mxu0 0.0
      %881 = vmatpush2.xpose.msra.mxu0 0.0
      %882 = vmatprep.subr.mxu0 0.0
      %883 = vmatpush2.xpose.msra.mxu0 0.0
      %884 = vmatprep.subr.mxu0 0.0
      %885 = vmatpush2.xpose.msra.mxu0 0.0
      %886 = vmatprep.subr.mxu0 0.0
      %887 = vmatpush2.xpose.msra.mxu0 0.0
      %888 = vmatprep.subr.mxu0 0.0
      %889 = vmatpush2.xpose.msra.mxu0 0.0
      %890 = vmatprep.subr.mxu0 0.0
      %891 = vmatpush2.xpose.msra.mxu0 0.0
      %892 = vmatprep.subr.mxu0 0.0
      %893 = vmatpush2.xpose.msra.mxu0 0.0
      %894 = vmatprep.subr.mxu0 0.0
      %895 = vmatpush2.xpose.msra.mxu0 0.0
      %896 = vmatprep.subr.mxu0 0.0
      %897 = vmatpush2.xpose.msra.mxu0 0.0
      %898 = vmatprep.mubr.f32.mxu0 0.0
      %899 = vmatmul.mubr.f32.gmra.mxu0 %v830
      %v900 = vpop.f32.mrf.mxu0
      %v901 = vadd.f32 %v348, %v900
      %v902 = vpop.f32.mrf.mxu0
      %903 = vdwg.mxu0
      %v904 = vsel %vm349, %v901, -inf
      %905 = vmax.xlane.f32.xlu0 %v904
      %v906 = vpop.xlane.xlu0 %905
      %v907 = vsub.f32 %v901, %v906
      %v908 = vmul.f32 %v907, 1.442695
      %v909 = vpow.pop %v908
      %v910 = vsel %vm349, %v909, 0.0
      %911 = vadd.xlane.f32.xlu0 %v910
      %v912 = vpop.xlane.xlu0 %911
      %v913 = vrcp.pop %v912
      %914 = vrot.lane.b32.xlu0 %v339, 80
      %v915 = vpop.permute.xlu0 %914
      %v918 = vsel %vm349, %v909, 0
      %920 = vmatprep.subr.mxu0 0.0
      %921 = vmatpush1.msra.mxu0 0.0
      %922 = vmatprep.subr.mxu0 0.0
      %923 = vmatpush1.msra.mxu0 0.0
      %924 = vmatprep.subr.mxu0 0.0
      %925 = vmatpush1.msra.mxu0 0.0
      %926 = vmatprep.subr.mxu0 0.0
      %927 = vmatpush1.msra.mxu0 0.0
      %928 = vmatprep.subr.mxu0 0.0
      %929 = vmatpush1.msra.mxu0 0.0
      %930 = vmatprep.subr.mxu0 0.0
      %931 = vmatpush1.msra.mxu0 0.0
      %932 = vmatprep.subr.mxu0 0.0
      %933 = vmatpush1.msra.mxu0 0.0
      %934 = vmatprep.subr.mxu0 0.0
      %935 = vmatpush1.msra.mxu0 0.0
      %936 = vmatprep.subr.mxu0 0.0
      %937 = vmatpush1.msra.mxu0 0.0
      %938 = vmatprep.subr.mxu0 0.0
      %939 = vmatpush1.msra.mxu0 0.0
      %940 = vmatprep.subr.mxu0 0.0
      %941 = vmatpush1.msra.mxu0 0.0
      %942 = vmatprep.subr.mxu0 0.0
      %943 = vmatpush1.msra.mxu0 0.0
      %944 = vmatprep.subr.mxu0 0.0
      %945 = vmatpush1.msra.mxu0 0.0
      %946 = vmatprep.subr.mxu0 0.0
      %947 = vmatpush1.msra.mxu0 0.0
      %948 = vmatprep.subr.mxu0 0.0
      %949 = vmatpush1.msra.mxu0 0.0
      %950 = vmatprep.subr.mxu0 0.0
      %951 = vmatpush1.msra.mxu0 %v915
      %952 = vmatprep.subr.mxu0 0.0
      %953 = vmatpush2.msra.mxu0 0.0
      %954 = vmatprep.subr.mxu0 0.0
      %955 = vmatpush2.msra.mxu0 0.0
      %956 = vmatprep.subr.mxu0 0.0
      %957 = vmatpush2.msra.mxu0 0.0
      %958 = vmatprep.subr.mxu0 0.0
      %959 = vmatpush2.msra.mxu0 0.0
      %960 = vmatprep.subr.mxu0 0.0
      %961 = vmatpush2.msra.mxu0 0.0
      %962 = vmatprep.subr.mxu0 0.0
      %963 = vmatpush2.msra.mxu0 0.0
      %964 = vmatprep.subr.mxu0 0.0
      %965 = vmatpush2.msra.mxu0 0.0
      %966 = vmatprep.subr.mxu0 0.0
      %967 = vmatpush2.msra.mxu0 0.0
      %968 = vmatprep.subr.mxu0 0.0
      %969 = vmatpush2.msra.mxu0 0.0
      %970 = vmatprep.subr.mxu0 0.0
      %971 = vmatpush2.msra.mxu0 0.0
      %972 = vmatprep.subr.mxu0 0.0
      %973 = vmatpush2.msra.mxu0 0.0
      %974 = vmatprep.subr.mxu0 0.0
      %975 = vmatpush2.msra.mxu0 0.0
      %976 = vmatprep.subr.mxu0 0.0
      %977 = vmatpush2.msra.mxu0 0.0
      %978 = vmatprep.subr.mxu0 0.0
      %979 = vmatpush2.msra.mxu0 0.0
      %980 = vmatprep.subr.mxu0 0.0
      %981 = vmatpush2.msra.mxu0 0.0
      %982 = vmatprep.subr.mxu0 0.0
      %983 = vmatpush2.msra.mxu0 0.0
      %984 = vmatprep.mubr.f32.mxu0 0.0
      %985 = vmatmul.mubr.f32.gmra.mxu0 %v918
      %v986 = vpop.f32.mrf.mxu0
      %v987 = vadd.f32 0.0, %v986
      %v988 = vpop.f32.mrf.mxu0
      %989 = vdwg.mxu0
      %v990 = vmul.f32 %v987, %v913
      %v991 = vld [vmem:[%s3 + $0x10] sm:$0xff]
      %v993 = vsel %vm349, %v990, 0
      %995 = vmatprep.subr.mxu0 0.0
      %996 = vmatpush1.msra.mxu0 0.0
      %997 = vmatprep.subr.mxu0 0.0
      %998 = vmatpush1.msra.mxu0 0.0
      %999 = vmatprep.subr.mxu0 0.0
      %1000 = vmatpush1.msra.mxu0 0.0
      %1001 = vmatprep.subr.mxu0 0.0
      %1002 = vmatpush1.msra.mxu0 0.0
      %1003 = vmatprep.subr.mxu0 0.0
      %1004 = vmatpush1.msra.mxu0 0.0
      %1005 = vmatprep.subr.mxu0 0.0
      %1006 = vmatpush1.msra.mxu0 0.0
      %1007 = vmatprep.subr.mxu0 0.0
      %1008 = vmatpush1.msra.mxu0 0.0
      %1009 = vmatprep.subr.mxu0 0.0
      %1010 = vmatpush1.msra.mxu0 0.0
      %1011 = vmatprep.subr.mxu0 0.0
      %1012 = vmatpush1.msra.mxu0 0.0
      %1013 = vmatprep.subr.mxu0 0.0
      %1014 = vmatpush1.msra.mxu0 0.0
      %1015 = vmatprep.subr.mxu0 0.0
      %1016 = vmatpush1.msra.mxu0 0.0
      %1017 = vmatprep.subr.mxu0 0.0
      %1018 = vmatpush1.msra.mxu0 0.0
      %1019 = vmatprep.subr.mxu0 0.0
      %1020 = vmatpush1.msra.mxu0 0.0
      %1021 = vmatprep.subr.mxu0 0.0
      %1022 = vmatpush1.msra.mxu0 0.0
      %1023 = vmatprep.subr.mxu0 0.0
      %1024 = vmatpush1.msra.mxu0 0.0
      %1025 = vmatprep.subr.mxu0 0.0
      %1026 = vmatpush1.msra.mxu0 %v991
      %1027 = vmatprep.subr.mxu0 0.0
      %1028 = vmatpush2.msra.mxu0 0.0
      %1029 = vmatprep.subr.mxu0 0.0
      %1030 = vmatpush2.msra.mxu0 0.0
      %1031 = vmatprep.subr.mxu0 0.0
      %1032 = vmatpush2.msra.mxu0 0.0
      %1033 = vmatprep.subr.mxu0 0.0
      %1034 = vmatpush2.msra.mxu0 0.0
      %1035 = vmatprep.subr.mxu0 0.0
      %1036 = vmatpush2.msra.mxu0 0.0
      %1037 = vmatprep.subr.mxu0 0.0
      %1038 = vmatpush2.msra.mxu0 0.0
      %1039 = vmatprep.subr.mxu0 0.0
      %1040 = vmatpush2.msra.mxu0 0.0
      %1041 = vmatprep.subr.mxu0 0.0
      %1042 = vmatpush2.msra.mxu0 0.0
      %1043 = vmatprep.subr.mxu0 0.0
      %1044 = vmatpush2.msra.mxu0 0.0
      %1045 = vmatprep.subr.mxu0 0.0
      %1046 = vmatpush2.msra.mxu0 0.0
      %1047 = vmatprep.subr.mxu0 0.0
      %1048 = vmatpush2.msra.mxu0 0.0
      %1049 = vmatprep.subr.mxu0 0.0
      %1050 = vmatpush2.msra.mxu0 0.0
      %1051 = vmatprep.subr.mxu0 0.0
      %1052 = vmatpush2.msra.mxu0 0.0
      %1053 = vmatprep.subr.mxu0 0.0
      %1054 = vmatpush2.msra.mxu0 0.0
      %1055 = vmatprep.subr.mxu0 0.0
      %1056 = vmatpush2.msra.mxu0 0.0
      %1057 = vmatprep.subr.mxu0 0.0
      %1058 = vmatpush2.msra.mxu0 0.0
      %1059 = vmatprep.mubr.f32.mxu0 0.0
      %1060 = vmatmul.mubr.f32.gmra.mxu0 %v993
      %v1061 = vpop.f32.mrf.mxu0
      %v1062 = vadd.f32 0.0, %v1061
      %v1063 = vpop.f32.mrf.mxu0
      %1064 = vdwg.mxu0
      %v1065 = vadd.f32 %v823, %v1062
      %1066 = vrot.lane.b32.xlu0 %v338, 104
      %v1067 = vpop.permute.xlu0 %1066
      %1068 = vrot.lane.b32.xlu0 %v339, 104
      %v1069 = vpop.permute.xlu0 %1068
      %v1070 = vsel %vm349, %v1067, 0
      %v1072 = vsel %vm349, %v1069, 0
      %1074 = vmatprep.subr.mxu0 0.0
      %1075 = vmatpush1.xpose.msra.mxu0 0.0
      %1076 = vmatprep.subr.mxu0 0.0
      %1077 = vmatpush1.xpose.msra.mxu0 0.0
      %1078 = vmatprep.subr.mxu0 0.0
      %1079 = vmatpush1.xpose.msra.mxu0 0.0
      %1080 = vmatprep.subr.mxu0 0.0
      %1081 = vmatpush1.xpose.msra.mxu0 0.0
      %1082 = vmatprep.subr.mxu0 0.0
      %1083 = vmatpush1.xpose.msra.mxu0 0.0
      %1084 = vmatprep.subr.mxu0 0.0
      %1085 = vmatpush1.xpose.msra.mxu0 0.0
      %1086 = vmatprep.subr.mxu0 0.0
      %1087 = vmatpush1.xpose.msra.mxu0 0.0
      %1088 = vmatprep.subr.mxu0 0.0
      %1089 = vmatpush1.xpose.msra.mxu0 0.0
      %1090 = vmatprep.subr.mxu0 0.0
      %1091 = vmatpush1.xpose.msra.mxu0 0.0
      %1092 = vmatprep.subr.mxu0 0.0
      %1093 = vmatpush1.xpose.msra.mxu0 0.0
      %1094 = vmatprep.subr.mxu0 0.0
      %1095 = vmatpush1.xpose.msra.mxu0 0.0
      %1096 = vmatprep.subr.mxu0 0.0
      %1097 = vmatpush1.xpose.msra.mxu0 0.0
      %1098 = vmatprep.subr.mxu0 0.0
      %1099 = vmatpush1.xpose.msra.mxu0 0.0
      %1100 = vmatprep.subr.mxu0 0.0
      %1101 = vmatpush1.xpose.msra.mxu0 0.0
      %1102 = vmatprep.subr.mxu0 0.0
      %1103 = vmatpush1.xpose.msra.mxu0 0.0
      %1104 = vmatprep.subr.mxu0 0.0
      %1105 = vmatpush1.xpose.msra.mxu0 %v1072
      %1106 = vmatprep.subr.mxu0 0.0
      %1107 = vmatpush2.xpose.msra.mxu0 0.0
      %1108 = vmatprep.subr.mxu0 0.0
      %1109 = vmatpush2.xpose.msra.mxu0 0.0
      %1110 = vmatprep.subr.mxu0 0.0
      %1111 = vmatpush2.xpose.msra.mxu0 0.0
      %1112 = vmatprep.subr.mxu0 0.0
      %1113 = vmatpush2.xpose.msra.mxu0 0.0
      %1114 = vmatprep.subr.mxu0 0.0
      %1115 = vmatpush2.xpose.msra.mxu0 0.0
      %1116 = vmatprep.subr.mxu0 0.0
      %1117 = vmatpush2.xpose.msra.mxu0 0.0
      %1118 = vmatprep.subr.mxu0 0.0
      %1119 = vmatpush2.xpose.msra.mxu0 0.0
      %1120 = vmatprep.subr.mxu0 0.0
      %1121 = vmatpush2.xpose.msra.mxu0 0.0
      %1122 = vmatprep.subr.mxu0 0.0
      %1123 = vmatpush2.xpose.msra.mxu0 0.0
      %1124 = vmatprep.subr.mxu0 0.0
      %1125 = vmatpush2.xpose.msra.mxu0 0.0
      %1126 = vmatprep.subr.mxu0 0.0
      %1127 = vmatpush2.xpose.msra.mxu0 0.0
      %1128 = vmatprep.subr.mxu0 0.0
      %1129 = vmatpush2.xpose.msra.mxu0 0.0
      %1130 = vmatprep.subr.mxu0 0.0
      %1131 = vmatpush2.xpose.msra.mxu0 0.0
      %1132 = vmatprep.subr.mxu0 0.0
      %1133 = vmatpush2.xpose.msra.mxu0 0.0
      %1134 = vmatprep.subr.mxu0 0.0
      %1135 = vmatpush2.xpose.msra.mxu0 0.0
      %1136 = vmatprep.subr.mxu0 0.0
      %1137 = vmatpush2.xpose.msra.mxu0 0.0
      %1138 = vmatprep.mubr.f32.mxu0 0.0
      %1139 = vmatmul.mubr.f32.gmra.mxu0 %v1070
      %v1140 = vpop.f32.mrf.mxu0
      %v1141 = vadd.f32 %v348, %v1140
      %v1142 = vpop.f32.mrf.mxu0
      %1143 = vdwg.mxu0
      %v1144 = vsel %vm349, %v1141, -inf
      %1145 = vmax.xlane.f32.xlu0 %v1144
      %v1146 = vpop.xlane.xlu0 %1145
      %v1147 = vsub.f32 %v1141, %v1146
      %v1148 = vmul.f32 %v1147, 1.442695
      %v1149 = vpow.pop %v1148
      %v1150 = vsel %vm349, %v1149, 0.0
      %1151 = vadd.xlane.f32.xlu0 %v1150
      %v1152 = vpop.xlane.xlu0 %1151
      %v1153 = vrcp.pop %v1152
      %1154 = vrot.lane.b32.xlu0 %v339, 72
      %v1155 = vpop.permute.xlu0 %1154
      %v1158 = vsel %vm349, %v1149, 0
      %1160 = vmatprep.subr.mxu0 0.0
      %1161 = vmatpush1.msra.mxu0 0.0
      %1162 = vmatprep.subr.mxu0 0.0
      %1163 = vmatpush1.msra.mxu0 0.0
      %1164 = vmatprep.subr.mxu0 0.0
      %1165 = vmatpush1.msra.mxu0 0.0
      %1166 = vmatprep.subr.mxu0 0.0
      %1167 = vmatpush1.msra.mxu0 0.0
      %1168 = vmatprep.subr.mxu0 0.0
      %1169 = vmatpush1.msra.mxu0 0.0
      %1170 = vmatprep.subr.mxu0 0.0
      %1171 = vmatpush1.msra.mxu0 0.0
      %1172 = vmatprep.subr.mxu0 0.0
      %1173 = vmatpush1.msra.mxu0 0.0
      %1174 = vmatprep.subr.mxu0 0.0
      %1175 = vmatpush1.msra.mxu0 0.0
      %1176 = vmatprep.subr.mxu0 0.0
      %1177 = vmatpush1.msra.mxu0 0.0
      %1178 = vmatprep.subr.mxu0 0.0
      %1179 = vmatpush1.msra.mxu0 0.0
      %1180 = vmatprep.subr.mxu0 0.0
      %1181 = vmatpush1.msra.mxu0 0.0
      %1182 = vmatprep.subr.mxu0 0.0
      %1183 = vmatpush1.msra.mxu0 0.0
      %1184 = vmatprep.subr.mxu0 0.0
      %1185 = vmatpush1.msra.mxu0 0.0
      %1186 = vmatprep.subr.mxu0 0.0
      %1187 = vmatpush1.msra.mxu0 0.0
      %1188 = vmatprep.subr.mxu0 0.0
      %1189 = vmatpush1.msra.mxu0 0.0
      %1190 = vmatprep.subr.mxu0 0.0
      %1191 = vmatpush1.msra.mxu0 %v1155
      %1192 = vmatprep.subr.mxu0 0.0
      %1193 = vmatpush2.msra.mxu0 0.0
      %1194 = vmatprep.subr.mxu0 0.0
      %1195 = vmatpush2.msra.mxu0 0.0
      %1196 = vmatprep.subr.mxu0 0.0
      %1197 = vmatpush2.msra.mxu0 0.0
      %1198 = vmatprep.subr.mxu0 0.0
      %1199 = vmatpush2.msra.mxu0 0.0
      %1200 = vmatprep.subr.mxu0 0.0
      %1201 = vmatpush2.msra.mxu0 0.0
      %1202 = vmatprep.subr.mxu0 0.0
      %1203 = vmatpush2.msra.mxu0 0.0
      %1204 = vmatprep.subr.mxu0 0.0
      %1205 = vmatpush2.msra.mxu0 0.0
      %1206 = vmatprep.subr.mxu0 0.0
      %1207 = vmatpush2.msra.mxu0 0.0
      %1208 = vmatprep.subr.mxu0 0.0
      %1209 = vmatpush2.msra.mxu0 0.0
      %1210 = vmatprep.subr.mxu0 0.0
      %1211 = vmatpush2.msra.mxu0 0.0
      %1212 = vmatprep.subr.mxu0 0.0
      %1213 = vmatpush2.msra.mxu0 0.0
      %1214 = vmatprep.subr.mxu0 0.0
      %1215 = vmatpush2.msra.mxu0 0.0
      %1216 = vmatprep.subr.mxu0 0.0
      %1217 = vmatpush2.msra.mxu0 0.0
      %1218 = vmatprep.subr.mxu0 0.0
      %1219 = vmatpush2.msra.mxu0 0.0
      %1220 = vmatprep.subr.mxu0 0.0
      %1221 = vmatpush2.msra.mxu0 0.0
      %1222 = vmatprep.subr.mxu0 0.0
      %1223 = vmatpush2.msra.mxu0 0.0
      %1224 = vmatprep.mubr.f32.mxu0 0.0
      %1225 = vmatmul.mubr.f32.gmra.mxu0 %v1158
      %v1226 = vpop.f32.mrf.mxu0
      %v1227 = vadd.f32 0.0, %v1226
      %v1228 = vpop.f32.mrf.mxu0
      %1229 = vdwg.mxu0
      %v1230 = vmul.f32 %v1227, %v1153
      %v1231 = vld [vmem:[%s3 + $0x18] sm:$0xff]
      %v1233 = vsel %vm349, %v1230, 0
      %1235 = vmatprep.subr.mxu0 0.0
      %1236 = vmatpush1.msra.mxu0 0.0
      %1237 = vmatprep.subr.mxu0 0.0
      %1238 = vmatpush1.msra.mxu0 0.0
      %1239 = vmatprep.subr.mxu0 0.0
      %1240 = vmatpush1.msra.mxu0 0.0
      %1241 = vmatprep.subr.mxu0 0.0
      %1242 = vmatpush1.msra.mxu0 0.0
      %1243 = vmatprep.subr.mxu0 0.0
      %1244 = vmatpush1.msra.mxu0 0.0
      %1245 = vmatprep.subr.mxu0 0.0
      %1246 = vmatpush1.msra.mxu0 0.0
      %1247 = vmatprep.subr.mxu0 0.0
      %1248 = vmatpush1.msra.mxu0 0.0
      %1249 = vmatprep.subr.mxu0 0.0
      %1250 = vmatpush1.msra.mxu0 0.0
      %1251 = vmatprep.subr.mxu0 0.0
      %1252 = vmatpush1.msra.mxu0 0.0
      %1253 = vmatprep.subr.mxu0 0.0
      %1254 = vmatpush1.msra.mxu0 0.0
      %1255 = vmatprep.subr.mxu0 0.0
      %1256 = vmatpush1.msra.mxu0 0.0
      %1257 = vmatprep.subr.mxu0 0.0
      %1258 = vmatpush1.msra.mxu0 0.0
      %1259 = vmatprep.subr.mxu0 0.0
      %1260 = vmatpush1.msra.mxu0 0.0
      %1261 = vmatprep.subr.mxu0 0.0
      %1262 = vmatpush1.msra.mxu0 0.0
      %1263 = vmatprep.subr.mxu0 0.0
      %1264 = vmatpush1.msra.mxu0 0.0
      %1265 = vmatprep.subr.mxu0 0.0
      %1266 = vmatpush1.msra.mxu0 %v1231
      %1267 = vmatprep.subr.mxu0 0.0
      %1268 = vmatpush2.msra.mxu0 0.0
      %1269 = vmatprep.subr.mxu0 0.0
      %1270 = vmatpush2.msra.mxu0 0.0
      %1271 = vmatprep.subr.mxu0 0.0
      %1272 = vmatpush2.msra.mxu0 0.0
      %1273 = vmatprep.subr.mxu0 0.0
      %1274 = vmatpush2.msra.mxu0 0.0
      %1275 = vmatprep.subr.mxu0 0.0
      %1276 = vmatpush2.msra.mxu0 0.0
      %1277 = vmatprep.subr.mxu0 0.0
      %1278 = vmatpush2.msra.mxu0 0.0
      %1279 = vmatprep.subr.mxu0 0.0
      %1280 = vmatpush2.msra.mxu0 0.0
      %1281 = vmatprep.subr.mxu0 0.0
      %1282 = vmatpush2.msra.mxu0 0.0
      %1283 = vmatprep.subr.mxu0 0.0
      %1284 = vmatpush2.msra.mxu0 0.0
      %1285 = vmatprep.subr.mxu0 0.0
      %1286 = vmatpush2.msra.mxu0 0.0
      %1287 = vmatprep.subr.mxu0 0.0
      %1288 = vmatpush2.msra.mxu0 0.0
      %1289 = vmatprep.subr.mxu0 0.0
      %1290 = vmatpush2.msra.mxu0 0.0
      %1291 = vmatprep.subr.mxu0 0.0
      %1292 = vmatpush2.msra.mxu0 0.0
      %1293 = vmatprep.subr.mxu0 0.0
      %1294 = vmatpush2.msra.mxu0 0.0
      %1295 = vmatprep.subr.mxu0 0.0
      %1296 = vmatpush2.msra.mxu0 0.0
      %1297 = vmatprep.subr.mxu0 0.0
      %1298 = vmatpush2.msra.mxu0 0.0
      %1299 = vmatprep.mubr.f32.mxu0 0.0
      %1300 = vmatmul.mubr.f32.gmra.mxu0 %v1233
      %v1301 = vpop.f32.mrf.mxu0
      %v1302 = vadd.f32 0.0, %v1301
      %v1303 = vpop.f32.mrf.mxu0
      %1304 = vdwg.mxu0
      %v1305 = vadd.f32 %v1065, %v1302
      %v1306 = vld [vmem:[%s4] sm:$0x1]
      %v1308 = vlaneseq
      %v1309 = vshrl.u32 %v1308, 7
      %v1310 = vsub.s32 0, %v1309
      %v1311 = vrot.slane %v1306, %v1310
      %v1313 = vadd.f32 %v1305, %v1311
      %v1314 = vld [vmem:[%s329] sm:$0xff]
      %v1315 = vadd.f32 %v1313, %v1314
      %vm1316 = vcmask 261120
      %1317 = vst.msk [vmem:[%s336] sm:$0xff] %vm1316, %v1315
      %p1318 = scmp.lt.s32.totalorder %s21, 1
      %s1319 = scalar_select %p1318, %s21, 1
      %p1320 = scmp.lt.s32.totalorder %s22, 0
      %s1321 = scalar_select %p1320, %s22, 0
      %s1322 = sadd.s32 %s1321, %s1319
      %s1323 = smul.addr %s1322, 8
      %s1324 = scalar_lea.vmem %s6, %s1323
      // Predicated region
      $region45: #{decoder_forward.16} parent=43 // pred_check
        %p1325 = pneg %p199
      $region46: #{decoder_forward.16} parent=43 // pred_check_branch
        %1327 = sbr.rel (%p1325) target = $region48
      $region47: #{decoder_forward.16} parent=43 // pred_region
        _
      $region48: #{decoder_forward.16} parent=43 // pred_fallthru
        _
    $region44: #{decoder_forward.16} parent=5 // pred_fallthru
      _
    %p1328 = scmp.le.s32.totalorder 2, %s12
    // Predicated region
    $region49: #{decoder_forward.16} parent=5 // pred_check
      %p1329 = pneg %p1328
    $region50: #{decoder_forward.16} parent=5 // pred_check_branch
      %1331 = sbr.rel (%p1329) target = $region52
    $region51: #{decoder_forward.16} parent=5 // pred_region
      %s1332 = ssub.s32 %s12, 2
      // Predicated region
      $region53: #{decoder_forward.16} parent=51 // pred_check
        %p1333 = pneg %p205
      $region54: #{decoder_forward.16} parent=51 // pred_check_branch
        %1335 = sbr.rel (%p1333) target = $region56
      $region55: #{decoder_forward.16} parent=51 // pred_region
        %p1336 = scmp.lt.s32.totalorder %s23, 1
        %s1337 = scalar_select %p1336, %s23, 1
        %p1338 = scmp.lt.s32.totalorder %s24, 0
        %s1339 = scalar_select %p1338, %s24, 0
        %s1340 = sadd.s32 %s1339, %s1337
        %s1341 = smul.addr %s1340, 8
        %s1342 = scalar_lea.vmem %s6, %s1341
      $region56: #{decoder_forward.16} parent=51 // pred_fallthru
        _
    $region52: #{decoder_forward.16} parent=5 // pred_fallthru
      _
  $region6: #{decoder_forward.16} parent=0 // loop_footer
    %s16 = sadd.s32 1, %s12
  $region7: #{decoder_forward.16} parent=0 // loop_footer_branch
    %11 = sbr.rel target = $region3
  $region8: #{decoder_forward.16} parent=0 // loop_exit
    _

// kernel: decoder_forward.23
$region0: #{decoder_forward.23}
  #allocation0 [shape = 'u32[]', space=smem, size = 0x4, offset = 0x4, fixed_abs, tag = 'smem constant byte address 0x4 - core index']
  #allocation1 [shape = 'u32[144,128]{1,0:T(1,128)}', space=vmem, size = 0x12000, scoped, tag = 'internal scratch']
  #allocation2 [shape = 'f32[16,32]{1,0:T(8,128)}', space=vmem, size = 0x2000, scoped, tag = 'scratch operand']
  %s0 = inlined_call_operand.vmem [shape: f32[16,32], index: 0, kind: input, shape index: {}]
  %s1 = inlined_call_operand.vmem [shape: f32[1,32], index: 1, kind: input, shape index: {}]
  %s2 = inlined_call_operand.vmem [shape: f32[1,32], index: 2, kind: input, shape index: {}]
  %s3 = inlined_call_operand.vmem [shape: f32[32,64], index: 3, kind: input, shape index: {}]
  %s4 = inlined_call_operand.vmem [shape: f32[1,64], index: 4, kind: input, shape index: {}]
  %s5 = inlined_call_operand.vmem [shape: f32[64,32], index: 5, kind: input, shape index: {}]
  %s6 = inlined_call_operand.vmem [shape: f32[1,32], index: 6, kind: input, shape index: {}]
  %s7 = inlined_call_operand.hbm [shape: f32[16,32], index: 7, kind: output, shape index: {}]
  %s8 = sld [smem:[#allocation0]]
  $region46: #{decoder_forward.23} parent=0
    _
  %s10 = ssub.s32 1, %s8
  %s11 = scalar_select 0, %s10, %s8
  $region1: #{decoder_forward.23} parent=0
    #allocation3 [shape = 'u8[8192]{0}', space=vmem, size = 0x2000, scoped, tag = 'output window, operand 0, single buffered']
    #allocation4 [shape = 's32[1]{0}', space=sflag, size = 0x4, scoped, tag = 'scoped memory for decoder_forward.23']
    %12 = vsyncpa [#allocation4], 0
    // Predicated region
    $region2: #{decoder_forward.23} parent=1 // pred_check
      _
    $region3: #{decoder_forward.23} parent=1 // pred_check_branch
      %14 = sbr.rel (0) target = $region5
    $region4: #{decoder_forward.23} parent=1 // pred_region
      _
    $region5: #{decoder_forward.23} parent=1 // pred_fallthru
      _
    // Predicated region
    $region6: #{decoder_forward.23} parent=1 // pred_check
      _
    $region7: #{decoder_forward.23} parent=1 // pred_check_branch
      %16 = sbr.rel (0) target = $region9
    $region8: #{decoder_forward.23} parent=1 // pred_region
      _
    $region9: #{decoder_forward.23} parent=1 // pred_fallthru
      _
    // Predicated region
    $region10: #{decoder_forward.23} parent=1 // pred_check
      _
    $region11: #{decoder_forward.23} parent=1 // pred_check_branch
      %18 = sbr.rel (0) target = $region13
    $region12: #{decoder_forward.23} parent=1 // pred_region
      _
    $region13: #{decoder_forward.23} parent=1 // pred_fallthru
      _
    // Predicated region
    $region14: #{decoder_forward.23} parent=1 // pred_check
      _
    $region15: #{decoder_forward.23} parent=1 // pred_check_branch
      %20 = sbr.rel (0) target = $region17
    $region16: #{decoder_forward.23} parent=1 // pred_region
      _
    $region17: #{decoder_forward.23} parent=1 // pred_fallthru
      _
    // Predicated region
    $region18: #{decoder_forward.23} parent=1 // pred_check
      _
    $region19: #{decoder_forward.23} parent=1 // pred_check_branch
      %22 = sbr.rel (0) target = $region21
    $region20: #{decoder_forward.23} parent=1 // pred_region
      _
    $region21: #{decoder_forward.23} parent=1 // pred_fallthru
      _
    // Predicated region
    $region22: #{decoder_forward.23} parent=1 // pred_check
      _
    $region23: #{decoder_forward.23} parent=1 // pred_check_branch
      %24 = sbr.rel (0) target = $region25
    $region24: #{decoder_forward.23} parent=1 // pred_region
      _
    $region25: #{decoder_forward.23} parent=1 // pred_fallthru
      _
    // Predicated region
    $region26: #{decoder_forward.23} parent=1 // pred_check
      _
    $region27: #{decoder_forward.23} parent=1 // pred_check_branch
      %26 = sbr.rel (0) target = $region29
    $region28: #{decoder_forward.23} parent=1 // pred_region
      _
    $region29: #{decoder_forward.23} parent=1 // pred_fallthru
      _
    %v27 = vld [vmem:[%s0] sm:$0xff]
    %v28 = vld [vmem:[%s0 + $0x8] sm:$0xff]
    %vm29 = vcmask 261120
    %v30 = vsel %vm29, %v27, 0.0
    %31 = vadd.xlane.f32.xlu0 %v30
    %v32 = vpop.xlane.xlu0 %31
    %v33 = vsel %vm29, %v28, 0.0
    %34 = vadd.xlane.f32.xlu0 %v33
    %v35 = vpop.xlane.xlu0 %34
    %v36 = vrcp.pop 32.0
    %v37 = vmul.f32 %v32, %v36
    %v38 = vmul.f32 %v35, %v36
    %v39 = vsub.f32 %v27, %v37
    %v40 = vsub.f32 %v28, %v38
    %v41 = vmul.f32 %v39, %v39
    %v42 = vmul.f32 %v40, %v40
    %v43 = vsel %vm29, %v41, 0.0
    %44 = vadd.xlane.f32.xlu0 %v43
    %v45 = vpop.xlane.xlu0 %44
    %v46 = vsel %vm29, %v42, 0.0
    %47 = vadd.xlane.f32.xlu0 %v46
    %v48 = vpop.xlane.xlu0 %47
    %v49 = vmul.f32 %v45, %v36
    %v50 = vmul.f32 %v48, %v36
    %v51 = vadd.f32 %v49, 1e-05
    %v52 = vadd.f32 %v50, 1e-05
    %v53 = vrsqrt.pop %v51
    %v54 = vrsqrt.pop %v52
    %v55 = vmul.f32 %v39, %v53
    %v56 = vmul.f32 %v40, %v54
    %v57 = vld [vmem:[%s1] sm:$0x1]
    %v59 = vlaneseq
    %v60 = vshrl.u32 %v59, 7
    %v61 = vsub.s32 0, %v60
    %v62 = vrot.slane %v57, %v61
    %v64 = vmul.f32 %v55, %v62
    %v65 = vmul.f32 %v56, %v62
    %v66 = vld [vmem:[%s2] sm:$0x1]
    %v68 = vlaneseq
    %v69 = vshrl.u32 %v68, 7
    %v70 = vsub.s32 0, %v69
    %v71 = vrot.slane %v66, %v70
    %v73 = vadd.f32 %v64, %v71
    %v74 = vadd.f32 %v65, %v71
    %v75 = vld [vmem:[%s3] sm:$0xff]
    %v76 = vld [vmem:[%s3 + $0x8] sm:$0xff]
    %v77 = vld [vmem:[%s3 + $0x10] sm:$0xff]
    %v78 = vld [vmem:[%s3 + $0x18] sm:$0xff]
    %v79 = vld [vmem:[%s4] sm:$0x1]
    %v81 = vlaneseq
    %v82 = vshrl.u32 %v81, 7
    %v83 = vsub.s32 0, %v82
    %v84 = vrot.slane %v79, %v83
    %v87 = vsel %vm29, %v73, 0
    %v90 = vsel %vm29, %v74, 0
    %92 = vmatprep.subr.mxu0 0.0
    %93 = vmatpush1.msra.mxu0 0.0
    %94 = vmatprep.subr.mxu0 0.0
    %95 = vmatpush1.msra.mxu0 0.0
    %96 = vmatprep.subr.mxu0 0.0
    %97 = vmatpush1.msra.mxu0 0.0
    %98 = vmatprep.subr.mxu0 0.0
    %99 = vmatpush1.msra.mxu0 0.0
    %100 = vmatprep.subr.mxu0 0.0
    %101 = vmatpush1.msra.mxu0 0.0
    %102 = vmatprep.subr.mxu0 0.0
    %103 = vmatpush1.msra.mxu0 0.0
    %104 = vmatprep.subr.mxu0 0.0
    %105 = vmatpush1.msra.mxu0 0.0
    %106 = vmatprep.subr.mxu0 0.0
    %107 = vmatpush1.msra.mxu0 0.0
    %108 = vmatprep.subr.mxu0 0.0
    %109 = vmatpush1.msra.mxu0 0.0
    %110 = vmatprep.subr.mxu0 0.0
    %111 = vmatpush1.msra.mxu0 0.0
    %112 = vmatprep.subr.mxu0 0.0
    %113 = vmatpush1.msra.mxu0 0.0
    %114 = vmatprep.subr.mxu0 0.0
    %115 = vmatpush1.msra.mxu0 0.0
    %116 = vmatprep.subr.mxu0 0.0
    %117 = vmatpush1.msra.mxu0 %v78
    %118 = vmatprep.subr.mxu0 0.0
    %119 = vmatpush1.msra.mxu0 %v77
    %120 = vmatprep.subr.mxu0 0.0
    %121 = vmatpush1.msra.mxu0 %v76
    %122 = vmatprep.subr.mxu0 0.0
    %123 = vmatpush1.msra.mxu0 %v75
    %124 = vmatprep.subr.mxu0 0.0
    %125 = vmatpush2.msra.mxu0 0.0
    %126 = vmatprep.subr.mxu0 0.0
    %127 = vmatpush2.msra.mxu0 0.0
    %128 = vmatprep.subr.mxu0 0.0
    %129 = vmatpush2.msra.mxu0 0.0
    %130 = vmatprep.subr.mxu0 0.0
    %131 = vmatpush2.msra.mxu0 0.0
    %132 = vmatprep.subr.mxu0 0.0
    %133 = vmatpush2.msra.mxu0 0.0
    %134 = vmatprep.subr.mxu0 0.0
    %135 = vmatpush2.msra.mxu0 0.0
    %136 = vmatprep.subr.mxu0 0.0
    %137 = vmatpush2.msra.mxu0 0.0
    %138 = vmatprep.subr.mxu0 0.0
    %139 = vmatpush2.msra.mxu0 0.0
    %140 = vmatprep.subr.mxu0 0.0
    %141 = vmatpush2.msra.mxu0 0.0
    %142 = vmatprep.subr.mxu0 0.0
    %143 = vmatpush2.msra.mxu0 0.0
    %144 = vmatprep.subr.mxu0 0.0
    %145 = vmatpush2.msra.mxu0 0.0
    %146 = vmatprep.subr.mxu0 0.0
    %147 = vmatpush2.msra.mxu0 0.0
    %148 = vmatprep.subr.mxu0 0.0
    %149 = vmatpush2.msra.mxu0 0.0
    %150 = vmatprep.subr.mxu0 0.0
    %151 = vmatpush2.msra.mxu0 0.0
    %152 = vmatprep.subr.mxu0 0.0
    %153 = vmatpush2.msra.mxu0 0.0
    %154 = vmatprep.subr.mxu0 0.0
    %155 = vmatpush2.msra.mxu0 0.0
    %156 = vmatprep.mubr.f32.mxu0 0.0
    %157 = vmatmul.mubr.f32.gmra.mxu0 %v87
    %v158 = vpop.f32.mrf.mxu0
    %v159 = vadd.f32 %v84, %v158
    %v160 = vpop.f32.mrf.mxu0
    %161 = vmatprep.mubr.f32.mxu0 0.0
    %162 = vmatmul.mubr.f32.gmra.mxu0 %v90
    %v163 = vpop.f32.mrf.mxu0
    %v164 = vadd.f32 %v84, %v163
    %v165 = vpop.f32.mrf.mxu0
    %166 = vdwg.mxu0
    %v167 = vmax.f32 %v159, 0.0
    %v168 = vmax.f32 %v164, 0.0
    %v169 = vld [vmem:[%s5] sm:$0xff]
    %v170 = vld [vmem:[%s5 + $0x8] sm:$0xff]
    %v171 = vld [vmem:[%s5 + $0x10] sm:$0xff]
    %v172 = vld [vmem:[%s5 + $0x18] sm:$0xff]
    %v173 = vld [vmem:[%s5 + $0x20] sm:$0xff]
    %v174 = vld [vmem:[%s5 + $0x28] sm:$0xff]
    %v175 = vld [vmem:[%s5 + $0x30] sm:$0xff]
    %v176 = vld [vmem:[%s5 + $0x38] sm:$0xff]
    %vm177 = vcmask 523264
    %v179 = vsel %vm177, %v167, 0
    %v182 = vsel %vm177, %v168, 0
    %184 = vmatprep.subr.mxu0 0.0
    %185 = vmatpush1.msra.mxu0 0.0
    %186 = vmatprep.subr.mxu0 0.0
    %187 = vmatpush1.msra.mxu0 0.0
    %188 = vmatprep.subr.mxu0 0.0
    %189 = vmatpush1.msra.mxu0 0.0
    %190 = vmatprep.subr.mxu0 0.0
    %191 = vmatpush1.msra.mxu0 0.0
    %192 = vmatprep.subr.mxu0 0.0
    %193 = vmatpush1.msra.mxu0 0.0
    %194 = vmatprep.subr.mxu0 0.0
    %195 = vmatpush1.msra.mxu0 0.0
    %196 = vmatprep.subr.mxu0 0.0
    %197 = vmatpush1.msra.mxu0 0.0
    %198 = vmatprep.subr.mxu0 0.0
    %199 = vmatpush1.msra.mxu0 0.0
    %200 = vmatprep.subr.mxu0 0.0
    %201 = vmatpush1.msra.mxu0 %v176
    %202 = vmatprep.subr.mxu0 0.0
    %203 = vmatpush1.msra.mxu0 %v175
    %204 = vmatprep.subr.mxu0 0.0
    %205 = vmatpush1.msra.mxu0 %v174
    %206 = vmatprep.subr.mxu0 0.0
    %207 = vmatpush1.msra.mxu0 %v173
    %208 = vmatprep.subr.mxu0 0.0
    %209 = vmatpush1.msra.mxu0 %v172
    %210 = vmatprep.subr.mxu0 0.0
    %211 = vmatpush1.msra.mxu0 %v171
    %212 = vmatprep.subr.mxu0 0.0
    %213 = vmatpush1.msra.mxu0 %v170
    %214 = vmatprep.subr.mxu0 0.0
    %215 = vmatpush1.msra.mxu0 %v169
    %216 = vmatprep.subr.mxu0 0.0
    %217 = vmatpush2.msra.mxu0 0.0
    %218 = vmatprep.subr.mxu0 0.0
    %219 = vmatpush2.msra.mxu0 0.0
    %220 = vmatprep.subr.mxu0 0.0
    %221 = vmatpush2.msra.mxu0 0.0
    %222 = vmatprep.subr.mxu0 0.0
    %223 = vmatpush2.msra.mxu0 0.0
    %224 = vmatprep.subr.mxu0 0.0
    %225 = vmatpush2.msra.mxu0 0.0
    %226 = vmatprep.subr.mxu0 0.0
    %227 = vmatpush2.msra.mxu0 0.0
    %228 = vmatprep.subr.mxu0 0.0
    %229 = vmatpush2.msra.mxu0 0.0
    %230 = vmatprep.subr.mxu0 0.0
    %231 = vmatpush2.msra.mxu0 0.0
    %232 = vmatprep.subr.mxu0 0.0
    %233 = vmatpush2.msra.mxu0 0.0
    %234 = vmatprep.subr.mxu0 0.0
    %235 = vmatpush2.msra.mxu0 0.0
    %236 = vmatprep.subr.mxu0 0.0
    %237 = vmatpush2.msra.mxu0 0.0
    %238 = vmatprep.subr.mxu0 0.0
    %239 = vmatpush2.msra.mxu0 0.0
    %240 = vmatprep.subr.mxu0 0.0
    %241 = vmatpush2.msra.mxu0 0.0
    %242 = vmatprep.subr.mxu0 0.0
    %243 = vmatpush2.msra.mxu0 0.0
    %244 = vmatprep.subr.mxu0 0.0
    %245 = vmatpush2.msra.mxu0 0.0
    %246 = vmatprep.subr.mxu0 0.0
    %247 = vmatpush2.msra.mxu0 0.0
    %248 = vmatprep.mubr.f32.mxu0 0.0
    %249 = vmatmul.mubr.f32.gmra.mxu0 %v179
    %v250 = vpop.f32.mrf.mxu0
    %v251 = vadd.f32 0.0, %v250
    %v252 = vpop.f32.mrf.mxu0
    %253 = vmatprep.mubr.f32.mxu0 0.0
    %254 = vmatmul.mubr.f32.gmra.mxu0 %v182
    %v255 = vpop.f32.mrf.mxu0
    %v256 = vadd.f32 0.0, %v255
    %v257 = vpop.f32.mrf.mxu0
    %258 = vdwg.mxu0
    %p259 = scmp.eq.s32.totalorder 0, 0
    // Predicated region
    $region30: #{decoder_forward.23} parent=1 // pred_check
      %p260 = pneg %p259
    $region31: #{decoder_forward.23} parent=1 // pred_check_branch
      %262 = sbr.rel (%p260) target = $region33
    $region32: #{decoder_forward.23} parent=1 // pred_region
      %263 = vst.msk [vmem:[#allocation2] sm:$0xff] %vm29, 0.0
      %264 = vst.msk [vmem:[#allocation2 + $0x8] sm:$0xff] %vm29, 0.0
    $region33: #{decoder_forward.23} parent=1 // pred_fallthru
      _
    %v265 = vld [vmem:[#allocation2] sm:$0xff]
    %v266 = vld [vmem:[#allocation2 + $0x8] sm:$0xff]
    %v267 = vadd.f32 %v265, %v251
    %v268 = vadd.f32 %v266, %v256
    %269 = vst.msk [vmem:[#allocation2] sm:$0xff] %vm29, %v267
    %270 = vst.msk [vmem:[#allocation2 + $0x8] sm:$0xff] %vm29, %v268
    // Predicated region
    $region34: #{decoder_forward.23} parent=1 // pred_check
      %p271 = pneg %p259
    $region35: #{decoder_forward.23} parent=1 // pred_check_branch
      %273 = sbr.rel (%p271) target = $region37
    $region36: #{decoder_forward.23} parent=1 // pred_region
      %v274 = vld [vmem:[#allocation2] sm:$0xff]
      %v275 = vld [vmem:[#allocation2 + $0x8] sm:$0xff]
      %v276 = vld [vmem:[%s6] sm:$0x1]
      %v278 = vlaneseq
      %v279 = vshrl.u32 %v278, 7
      %v280 = vsub.s32 0, %v279
      %v281 = vrot.slane %v276, %v280
      %v283 = vadd.f32 %v274, %v281
      %v284 = vadd.f32 %v275, %v281
      %v285 = vadd.f32 %v283, %v27
      %v286 = vadd.f32 %v284, %v28
      %287 = vst.msk [vmem:[#allocation3] sm:$0xff] %vm29, %v285
      %288 = vst.msk [vmem:[#allocation3 + $0x8] sm:$0xff] %vm29, %v286
    $region37: #{decoder_forward.23} parent=1 // pred_fallthru
      _
    // Predicated region
    $region38: #{decoder_forward.23} parent=1 // pred_check
      _
    $region39: #{decoder_forward.23} parent=1 // pred_check_branch
      %290 = sbr.rel (0) target = $region41
    $region40: #{decoder_forward.23} parent=1 // pred_region
      %s292 = ssub.s32 256, 256
      %293 = vsyncadd [#allocation4], %s292
      %s294 = sshll.u32 [#allocation3], 4
      %s295 = int_to_ptr.vmem [resolvable:$true] %s294
      %300 = dma.vmem_to_hbm [thread:$0]  %s295, 256, %s7, [#allocation4], 128, 128, 8
    $region41: #{decoder_forward.23} parent=1 // pred_fallthru
      _
    // Predicated region
    $region42: #{decoder_forward.23} parent=1 // pred_check
      _
    $region43: #{decoder_forward.23} parent=1 // pred_check_branch
      %302 = sbr.rel (0) target = $region45
    $region44: #{decoder_forward.23} parent=1 // pred_region
      %303 = dma.done [#allocation4], 256
    $region45: #{decoder_forward.23} parent=1 // pred_fallthru
      _
    %304 = vsyncpa [#allocation4], 1

</llo_original>
